<compile_context>
chip_gen: v7x
topology: tpu7x:2x2x1
jax: 0.10.0
libtpu: 0.0.40
codegen_flags: <defaults>
</compile_context>

<pallas_src>
import functools
import numpy as np

import jax
import jax.numpy as jnp
from jax.experimental import pallas as pl
from jax.experimental.pallas import tpu as pltpu

HP = 128  # padded feature width (lane-dense); real hdim (32) is zero-padded.
VMEM_LIMIT = 64 * 1024 * 1024


def _silu(x):
    return x * jax.nn.sigmoid(x)


# ----------------------------------------------------------------------------
# Fused kernel: encoder + LOO set-context + posterior + rsample + KL
#               + q_sample + time-embed MLP + conditional eps-predictor + MSE
#   grid: (bs,) "parallel"; each step processes one set of ns images.
# ----------------------------------------------------------------------------
def _vfsddpm_kernel(x_ref, eps_ref, noise_ref, sab_ref, s1ab_ref, temb_ref,
                    enc_w_ref, enc_b_ref,
                    pw1_ref, pb1_ref, w2m_ref, b2m_ref, w2v_ref, b2v_ref,
                    tw1_ref, tb1_ref, tw2_ref, tb2_ref,
                    gwx_ref, gwt_ref, gwc_ref, gb1_ref, gw2_ref, gb2_ref,
                    mse_ref, kl_ref, *, ns, inv_d_in):
    # ---- per-image encoder (Linear + SiLU stand-in for EncoderUNetModel) ----
    x = x_ref[...]                                           # (ns, d_in) f32
    feats = jnp.dot(x.astype(jnp.bfloat16), enc_w_ref[...],
                    preferred_element_type=jnp.float32)
    feats = _silu(feats + enc_b_ref[...])                    # (ns, HP) f32

    # ---- leave-one-out mean over the other ns-1 images (sum-minus-one) ----
    total = jnp.sum(feats, axis=0, keepdims=True)            # (1, HP)
    hc = (total - feats) * (1.0 / float(ns - 1))             # (ns, HP)

    # ---- posterior: Linear -> SiLU -> Linear(2*hdim) split into qm/qv ----
    p1 = jnp.dot(hc.astype(jnp.bfloat16), pw1_ref[...],
                 preferred_element_type=jnp.float32) + pb1_ref[...]
    p1 = _silu(p1).astype(jnp.bfloat16)
    qm = jnp.dot(p1, w2m_ref[...], preferred_element_type=jnp.float32) + b2m_ref[...]
    qv = jnp.dot(p1, w2v_ref[...], preferred_element_type=jnp.float32) + b2v_ref[...]

    # reparameterized sample c = qm + exp(qv/2) * eps  (padded lanes stay 0)
    c = qm + jnp.exp(qv * 0.5) * eps_ref[...]                # (ns, HP) f32

    # ---- KL of the LAST LOO iteration (PyTorch reuses `out` of i=ns-1) ----
    qm_l = qm[ns - 1:ns, :]
    qv_l = qv[ns - 1:ns, :]
    kl_ref[...] = 0.5 * (jnp.exp(qv_l) + qm_l * qm_l - 1.0 - qv_l)

    # ---- q_sample: x_t = sqrt(acp)*x + sqrt(1-acp)*noise (all f32) ----
    noise = noise_ref[...]                                   # (ns, d_in) f32
    x_t = sab_ref[...] * x + s1ab_ref[...] * noise

    # ---- time-embedding MLP ----
    te = jnp.dot(temb_ref[...].astype(jnp.bfloat16), tw1_ref[...],
                 preferred_element_type=jnp.float32) + tb1_ref[...]
    te = _silu(te)
    te = jnp.dot(te.astype(jnp.bfloat16), tw2_ref[...],
                 preferred_element_type=jnp.float32) + tb2_ref[...]

    # ---- eps predictor: concat-free (gen_w1 split row-wise into Wx/Wt/Wc) ----
    g1 = (jnp.dot(x_t.astype(jnp.bfloat16), gwx_ref[...],
                  preferred_element_type=jnp.float32)
          + jnp.dot(te.astype(jnp.bfloat16), gwt_ref[...],
                    preferred_element_type=jnp.float32)
          + jnp.dot(c.astype(jnp.bfloat16), gwc_ref[...],
                    preferred_element_type=jnp.float32)
          + gb1_ref[...])
    g1 = _silu(g1)
    eps_pred = jnp.dot(g1.astype(jnp.bfloat16), gw2_ref[...],
                       preferred_element_type=jnp.float32) + gb2_ref[...]

    # ---- fused mean_flat((eps_pred - noise)**2): only (ns,) values leave ----
    d = eps_pred - noise
    mse = jnp.sum(d * d, axis=-1, keepdims=True) * inv_d_in  # (ns, 1) f32
    mse_ref[...] = jnp.broadcast_to(mse, mse_ref.shape)      # lane-dense store


def vfsddpm_call(x, eps_c, noise, sab, s1ab, temb, p, bs, ns, d_in):
    def setspec(n):
        return pl.BlockSpec((None, ns, n), lambda b: (b, 0, 0))

    def wspec(shape):
        return pl.BlockSpec(shape, lambda b: (0,) * len(shape))

    in_specs = [
        setspec(d_in),      # x
        setspec(HP),        # eps for c-rsample
        setspec(d_in),      # diffusion noise
        setspec(1),         # sqrt(alphas_cumprod)[t]
        setspec(1),         # sqrt(1 - alphas_cumprod)[t]
        setspec(HP),        # timestep embedding
        wspec(p["enc_w"].shape), wspec(p["enc_b"].shape),
        wspec(p["post_w1"].shape), wspec(p["post_b1"].shape),
        wspec(p["w2m"].shape), wspec(p["b2m"].shape),
        wspec(p["w2v"].shape), wspec(p["b2v"].shape),
        wspec(p["te_w1"].shape), wspec(p["te_b1"].shape),
        wspec(p["te_w2"].shape), wspec(p["te_b2"].shape),
        wspec(p["gen_wx"].shape), wspec(p["gen_wt"].shape),
        wspec(p["gen_wc"].shape), wspec(p["gen_b1"].shape),
        wspec(p["gen_w2"].shape), wspec(p["gen_b2"].shape),
    ]
    out_specs = (
        pl.BlockSpec((None, ns, HP), lambda b: (b, 0, 0)),   # per-row MSE (bcast)
        pl.BlockSpec((None, 1, HP), lambda b: (b, 0, 0)),    # elementwise KL
    )
    out_shape = (
        jax.ShapeDtypeStruct((bs, ns, HP), jnp.float32),
        jax.ShapeDtypeStruct((bs, 1, HP), jnp.float32),
    )
    return pl.pallas_call(
        functools.partial(_vfsddpm_kernel, ns=ns, inv_d_in=1.0 / float(d_in)),
        grid=(bs,),
        in_specs=in_specs,
        out_specs=out_specs,
        out_shape=out_shape,
        compiler_params=pltpu.CompilerParams(
            dimension_semantics=("parallel",),
            vmem_limit_bytes=VMEM_LIMIT),
    )(x, eps_c, noise, sab, s1ab, temb,
      p["enc_w"], p["enc_b"],
      p["post_w1"], p["post_b1"], p["w2m"], p["b2m"], p["w2v"], p["b2v"],
      p["te_w1"], p["te_b1"], p["te_w2"], p["te_b2"],
      p["gen_wx"], p["gen_wt"], p["gen_wc"], p["gen_b1"],
      p["gen_w2"], p["gen_b2"])


# ----------------------------------------------------------------------------
# Glue (plain JAX): parameters, timestep embedding, diffusion schedule
# ----------------------------------------------------------------------------
def timestep_embedding(t, dim, max_period=10000):
    half = dim // 2
    freqs = jnp.exp(-np.log(max_period) * jnp.arange(half, dtype=jnp.float32) / half)
    args = t.astype(jnp.float32)[:, None] * freqs[None, :]
    return jnp.concatenate([jnp.cos(args), jnp.sin(args)], axis=-1)


def init_params(key, d_in, hdim, gen_hidden):
    ks = jax.random.split(key, 8)
    s = 0.02

    def w(k, shape):
        return s * jax.random.normal(k, shape, dtype=jnp.float32)

    return {
        # encoder stand-in (per-image): Linear(d_in -> hdim) + SiLU
        "enc_w": w(ks[0], (d_in, hdim)), "enc_b": jnp.zeros((hdim,), jnp.float32),
        # posterior: Linear(hdim,hdim) -> SiLU -> Linear(hdim, 2*hdim)
        "post_w1": w(ks[1], (hdim, hdim)), "post_b1": jnp.zeros((hdim,), jnp.float32),
        "post_w2": w(ks[2], (hdim, 2 * hdim)), "post_b2": jnp.zeros((2 * hdim,), jnp.float32),
        # generative model time embed
        "te_w1": w(ks[3], (hdim, hdim)), "te_b1": jnp.zeros((hdim,), jnp.float32),
        "te_w2": w(ks[4], (hdim, hdim)), "te_b2": jnp.zeros((hdim,), jnp.float32),
        # eps-predictor: Linear(d_in+2*hdim, gen_hidden) -> SiLU -> Linear(gen_hidden, d_in)
        "gen_w1": w(ks[5], (d_in + 2 * hdim, gen_hidden)),
        "gen_b1": jnp.zeros((gen_hidden,), jnp.float32),
        "gen_w2": w(ks[6], (gen_hidden, d_in)),
        "gen_b2": jnp.zeros((d_in,), jnp.float32),
    }


def prepare_params(p, d_in, hdim, gen_hidden):
    """Pad hdim-sized weights to 128 lanes, split fused weights, pre-cast to bf16.
    Done ONCE outside the hot path.  Padding is with zeros => results exact."""
    def padw(w2, r, c):
        return jnp.pad(w2, ((0, r - w2.shape[0]), (0, c - w2.shape[1]))).astype(jnp.bfloat16)

    def padb(b1, n):
        return jnp.pad(b1, (0, n - b1.shape[0])).reshape(1, n).astype(jnp.float32)

    w2m = p["post_w2"][:, :hdim]
    w2v = p["post_w2"][:, hdim:]
    b2m = p["post_b2"][:hdim]
    b2v = p["post_b2"][hdim:]
    gwx = p["gen_w1"][:d_in]
    gwt = p["gen_w1"][d_in:d_in + hdim]
    gwc = p["gen_w1"][d_in + hdim:]
    return {
        "enc_w": padw(p["enc_w"], d_in, HP), "enc_b": padb(p["enc_b"], HP),
        "post_w1": padw(p["post_w1"], HP, HP), "post_b1": padb(p["post_b1"], HP),
        "w2m": padw(w2m, HP, HP), "b2m": padb(b2m, HP),
        "w2v": padw(w2v, HP, HP), "b2v": padb(b2v, HP),
        "te_w1": padw(p["te_w1"], HP, HP), "te_b1": padb(p["te_b1"], HP),
        "te_w2": padw(p["te_w2"], HP, HP), "te_b2": padb(p["te_b2"], HP),
        "gen_wx": gwx.astype(jnp.bfloat16),
        "gen_wt": padw(gwt, HP, gen_hidden),
        "gen_wc": padw(gwc, HP, gen_hidden),
        "gen_b1": p["gen_b1"].reshape(1, gen_hidden).astype(jnp.float32),
        "gen_w2": p["gen_w2"].astype(jnp.bfloat16),
        "gen_b2": p["gen_b2"].reshape(1, d_in).astype(jnp.float32),
    }


# ----------------------------------------------------------------------------
# VFSDDPM forward (encoder_mode='unet', mode_context='variational',
#                  mode_conditioning != 'lag')
# ----------------------------------------------------------------------------
def vfsddpm_forward(pp, batch, t, key, hdim, num_timesteps=100):
    bs, ns, ch, h, w = batch.shape
    d_in = ch * h * w
    M = bs * ns
    key_c, key_noise = jax.random.split(key)

    x = batch.reshape(bs, ns, d_in).astype(jnp.float32)

    # reparameterization noise for c (one draw per LOO iteration, like PyTorch)
    eps_c = jax.random.normal(key_c, (bs, ns, hdim), dtype=jnp.float32)
    eps_c = jnp.pad(eps_c, ((0, 0), (0, 0), (0, HP - hdim)))      # pad lanes = 0

    # diffusion noise
    noise = jax.random.normal(key_noise, (bs, ns, d_in), dtype=jnp.float32)

    # ---- diffusion schedule (static, host numpy) ----
    betas = np.linspace(1e-4, 0.02, num_timesteps, dtype=np.float64)
    acp = np.cumprod(1.0 - betas)
    sab = jnp.asarray(np.sqrt(acp), jnp.float32)[t].reshape(bs, ns, 1)
    s1ab = jnp.asarray(np.sqrt(1.0 - acp), jnp.float32)[t].reshape(bs, ns, 1)

    temb = timestep_embedding(t, hdim)                            # (M, hdim)
    temb = jnp.pad(temb, ((0, 0), (0, HP - hdim))).reshape(bs, ns, HP)

    # ---- single fused kernel ----
    mse_b, kl_elem = vfsddpm_call(x, eps_c, noise, sab, s1ab, temb,
                                  pp, bs, ns, d_in)
    mse = mse_b[:, :, 0].reshape(M)                               # (M,)
    # mean over the real hdim features, / ln2 (padded KL lanes are exactly 0)
    klc = jnp.sum(kl_elem[:, 0, :], axis=-1) * (1.0 / (hdim * np.log(2.0)))

    return {"loss": mse, "mse": mse, "klc": klc}


# ----------------------------------------------------------------------------
if __name__ == "__main__":
    # small config consistent with the module's forward
    bs, ns, ch, image_size, hdim = 2, 4, 3, 16, 32
    gen_hidden = 128
    num_timesteps = 100
    d_in = ch * image_size * image_size
    assert d_in % 128 == 0 and gen_hidden % 128 == 0

    root = jax.random.PRNGKey(0)
    k_batch, k_t, k_params, k_fwd = jax.random.split(root, 4)

    batch = jax.random.normal(k_batch, (bs, ns, ch, image_size, image_size),
                              dtype=jnp.float32)
    t = jax.random.randint(k_t, (bs * ns,), 0, num_timesteps, dtype=jnp.int32)

    params = init_params(k_params, d_in, hdim, gen_hidden)
    pp = prepare_params(params, d_in, hdim, gen_hidden)  # pad + bf16 once, off hot path

    fwd = jax.jit(functools.partial(vfsddpm_forward, hdim=hdim,
                                    num_timesteps=num_timesteps))
    losses = fwd(pp, batch, t, k_fwd)
    jax.block_until_ready(losses)

    assert losses["loss"].shape == (bs * ns,)
    assert losses["mse"].shape == (bs * ns,)
    assert losses["klc"].shape == (bs,)
    assert all(bool(jnp.all(jnp.isfinite(v))) for v in losses.values())
    print("KERNEL_OK")
</pallas_src>

<mosaic_0001>
module attributes {stable_mosaic.version = 11 : i64} {
  func.func @_vfsddpm_kernel(%arg0: i32, %arg1: memref<1x4x768xf32, #tpu.memory_space<vmem>>, %arg2: memref<1x4x128xf32, #tpu.memory_space<vmem>>, %arg3: memref<1x4x768xf32, #tpu.memory_space<vmem>>, %arg4: memref<1x4x1xf32, #tpu.memory_space<vmem>>, %arg5: memref<1x4x1xf32, #tpu.memory_space<vmem>>, %arg6: memref<1x4x128xf32, #tpu.memory_space<vmem>>, %arg7: memref<768x128xbf16, #tpu.memory_space<vmem>>, %arg8: memref<1x128xf32, #tpu.memory_space<vmem>>, %arg9: memref<128x128xbf16, #tpu.memory_space<vmem>>, %arg10: memref<1x128xf32, #tpu.memory_space<vmem>>, %arg11: memref<128x128xbf16, #tpu.memory_space<vmem>>, %arg12: memref<1x128xf32, #tpu.memory_space<vmem>>, %arg13: memref<128x128xbf16, #tpu.memory_space<vmem>>, %arg14: memref<1x128xf32, #tpu.memory_space<vmem>>, %arg15: memref<128x128xbf16, #tpu.memory_space<vmem>>, %arg16: memref<1x128xf32, #tpu.memory_space<vmem>>, %arg17: memref<128x128xbf16, #tpu.memory_space<vmem>>, %arg18: memref<1x128xf32, #tpu.memory_space<vmem>>, %arg19: memref<768x128xbf16, #tpu.memory_space<vmem>>, %arg20: memref<128x128xbf16, #tpu.memory_space<vmem>>, %arg21: memref<128x128xbf16, #tpu.memory_space<vmem>>, %arg22: memref<1x128xf32, #tpu.memory_space<vmem>>, %arg23: memref<128x768xbf16, #tpu.memory_space<vmem>>, %arg24: memref<1x768xf32, #tpu.memory_space<vmem>>, %arg25: memref<1x4x128xf32, #tpu.memory_space<vmem>>, %arg26: memref<1x1x128xf32, #tpu.memory_space<vmem>>) attributes {dimension_semantics = [#tpu.dimension_semantics<parallel>], iteration_bounds = array<i64: 2>, scalar_prefetch = 0 : i64, scratch_operands = 0 : i64, tpu.core_type = #tpu.core_type<tc>, window_params = [{transform_indices = @transform_0, window_bounds = array<i64: 1, 4, 768>}, {transform_indices = @transform_1, window_bounds = array<i64: 1, 4, 128>}, {transform_indices = @transform_2, window_bounds = array<i64: 1, 4, 768>}, {transform_indices = @transform_3, window_bounds = array<i64: 1, 4, 1>}, {transform_indices = @transform_4, window_bounds = array<i64: 1, 4, 1>}, {transform_indices = @transform_5, window_bounds = array<i64: 1, 4, 128>}, {pipeline_mode = #tpu.pipeline_mode<synchronous>, transform_indices = @transform_6, window_bounds = array<i64: 768, 128>}, {pipeline_mode = #tpu.pipeline_mode<synchronous>, transform_indices = @transform_7, window_bounds = array<i64: 1, 128>}, {pipeline_mode = #tpu.pipeline_mode<synchronous>, transform_indices = @transform_8, window_bounds = array<i64: 128, 128>}, {pipeline_mode = #tpu.pipeline_mode<synchronous>, transform_indices = @transform_9, window_bounds = array<i64: 1, 128>}, {pipeline_mode = #tpu.pipeline_mode<synchronous>, transform_indices = @transform_10, window_bounds = array<i64: 128, 128>}, {pipeline_mode = #tpu.pipeline_mode<synchronous>, transform_indices = @transform_11, window_bounds = array<i64: 1, 128>}, {pipeline_mode = #tpu.pipeline_mode<synchronous>, transform_indices = @transform_12, window_bounds = array<i64: 128, 128>}, {pipeline_mode = #tpu.pipeline_mode<synchronous>, transform_indices = @transform_13, window_bounds = array<i64: 1, 128>}, {pipeline_mode = #tpu.pipeline_mode<synchronous>, transform_indices = @transform_14, window_bounds = array<i64: 128, 128>}, {pipeline_mode = #tpu.pipeline_mode<synchronous>, transform_indices = @transform_15, window_bounds = array<i64: 1, 128>}, {pipeline_mode = #tpu.pipeline_mode<synchronous>, transform_indices = @transform_16, window_bounds = array<i64: 128, 128>}, {pipeline_mode = #tpu.pipeline_mode<synchronous>, transform_indices = @transform_17, window_bounds = array<i64: 1, 128>}, {pipeline_mode = #tpu.pipeline_mode<synchronous>, transform_indices = @transform_18, window_bounds = array<i64: 768, 128>}, {pipeline_mode = #tpu.pipeline_mode<synchronous>, transform_indices = @transform_19, window_bounds = array<i64: 128, 128>}, {pipeline_mode = #tpu.pipeline_mode<synchronous>, transform_indices = @transform_20, window_bounds = array<i64: 128, 128>}, {pipeline_mode = #tpu.pipeline_mode<synchronous>, transform_indices = @transform_21, window_bounds = array<i64: 1, 128>}, {pipeline_mode = #tpu.pipeline_mode<synchronous>, transform_indices = @transform_22, window_bounds = array<i64: 128, 768>}, {pipeline_mode = #tpu.pipeline_mode<synchronous>, transform_indices = @transform_23, window_bounds = array<i64: 1, 768>}, {transform_indices = @transform_24, window_bounds = array<i64: 1, 4, 128>}, {transform_indices = @transform_25, window_bounds = array<i64: 1, 1, 128>}]} {
    %c0 = arith.constant 0 : index
    %c0_0 = arith.constant 0 : index
    %c0_1 = arith.constant 0 : index
    %0 = vector.load %arg1[%c0, %c0_0, %c0_1] : memref<1x4x768xf32, #tpu.memory_space<vmem>>, vector<1x4x768xf32>
    %1 = vector.shape_cast %0 : vector<1x4x768xf32> to vector<4x768xf32>
    %2 = arith.truncf %1 : vector<4x768xf32> to vector<4x768xbf16>
    %c0_2 = arith.constant 0 : index
    %c0_3 = arith.constant 0 : index
    %3 = vector.load %arg7[%c0_2, %c0_3] : memref<768x128xbf16, #tpu.memory_space<vmem>>, vector<768x128xbf16>
    %cst = arith.constant dense<0.000000e+00> : vector<4x128xf32>
    %4 = tpu.matmul %2, %3, %cst {dimension_numbers = #tpu.dot_dimension_numbers<[1], [0], [0], [1], [0, 0, 1, 1], [], []>} : vector<4x768xbf16>, vector<768x128xbf16>, vector<4x128xf32> -> vector<4x128xf32>
    %c0_4 = arith.constant 0 : index
    %c0_5 = arith.constant 0 : index
    %5 = vector.load %arg8[%c0_4, %c0_5] : memref<1x128xf32, #tpu.memory_space<vmem>>, vector<1x128xf32>
    %6 = vector.broadcast %5 : vector<1x128xf32> to vector<4x128xf32>
    %7 = arith.addf %4, %6 : vector<4x128xf32>
    %8 = arith.negf %7 : vector<4x128xf32>
    %9 = math.exp %8 : vector<4x128xf32>
    %cst_6 = arith.constant 1.000000e+00 : f32
    %10 = vector.broadcast %cst_6 : f32 to vector<4x128xf32>
    %11 = arith.addf %10, %9 : vector<4x128xf32>
    %12 = arith.divf %10, %11 : vector<4x128xf32>
    %13 = arith.mulf %7, %12 : vector<4x128xf32>
    %cst_7 = arith.constant dense<0.000000e+00> : vector<128xf32>
    %14 = vector.multi_reduction <add>, %13, %cst_7 [0] : vector<4x128xf32> to vector<128xf32>
    %15 = vector.shape_cast %14 : vector<128xf32> to vector<1x128xf32>
    %16 = vector.broadcast %15 : vector<1x128xf32> to vector<4x128xf32>
    %17 = arith.subf %16, %13 : vector<4x128xf32>
    %cst_8 = arith.constant 0.333333343 : f32
    %18 = vector.broadcast %cst_8 : f32 to vector<4x128xf32>
    %19 = arith.mulf %17, %18 : vector<4x128xf32>
    %20 = arith.truncf %19 : vector<4x128xf32> to vector<4x128xbf16>
    %c0_9 = arith.constant 0 : index
    %c0_10 = arith.constant 0 : index
    %21 = vector.load %arg9[%c0_9, %c0_10] : memref<128x128xbf16, #tpu.memory_space<vmem>>, vector<128x128xbf16>
    %cst_11 = arith.constant dense<0.000000e+00> : vector<4x128xf32>
    %22 = tpu.matmul %20, %21, %cst_11 {dimension_numbers = #tpu.dot_dimension_numbers<[1], [0], [0], [1], [0, 0, 1, 1], [], []>} : vector<4x128xbf16>, vector<128x128xbf16>, vector<4x128xf32> -> vector<4x128xf32>
    %c0_12 = arith.constant 0 : index
    %c0_13 = arith.constant 0 : index
    %23 = vector.load %arg10[%c0_12, %c0_13] : memref<1x128xf32, #tpu.memory_space<vmem>>, vector<1x128xf32>
    %24 = vector.broadcast %23 : vector<1x128xf32> to vector<4x128xf32>
    %25 = arith.addf %22, %24 : vector<4x128xf32>
    %26 = arith.negf %25 : vector<4x128xf32>
    %27 = math.exp %26 : vector<4x128xf32>
    %cst_14 = arith.constant 1.000000e+00 : f32
    %28 = vector.broadcast %cst_14 : f32 to vector<4x128xf32>
    %29 = arith.addf %28, %27 : vector<4x128xf32>
    %30 = arith.divf %28, %29 : vector<4x128xf32>
    %31 = arith.mulf %25, %30 : vector<4x128xf32>
    %32 = arith.truncf %31 : vector<4x128xf32> to vector<4x128xbf16>
    %c0_15 = arith.constant 0 : index
    %c0_16 = arith.constant 0 : index
    %33 = vector.load %arg11[%c0_15, %c0_16] : memref<128x128xbf16, #tpu.memory_space<vmem>>, vector<128x128xbf16>
    %cst_17 = arith.constant dense<0.000000e+00> : vector<4x128xf32>
    %34 = tpu.matmul %32, %33, %cst_17 {dimension_numbers = #tpu.dot_dimension_numbers<[1], [0], [0], [1], [0, 0, 1, 1], [], []>} : vector<4x128xbf16>, vector<128x128xbf16>, vector<4x128xf32> -> vector<4x128xf32>
    %c0_18 = arith.constant 0 : index
    %c0_19 = arith.constant 0 : index
    %35 = vector.load %arg12[%c0_18, %c0_19] : memref<1x128xf32, #tpu.memory_space<vmem>>, vector<1x128xf32>
    %36 = vector.broadcast %35 : vector<1x128xf32> to vector<4x128xf32>
    %37 = arith.addf %34, %36 : vector<4x128xf32>
    %c0_20 = arith.constant 0 : index
    %c0_21 = arith.constant 0 : index
    %38 = vector.load %arg13[%c0_20, %c0_21] : memref<128x128xbf16, #tpu.memory_space<vmem>>, vector<128x128xbf16>
    %cst_22 = arith.constant dense<0.000000e+00> : vector<4x128xf32>
    %39 = tpu.matmul %32, %38, %cst_22 {dimension_numbers = #tpu.dot_dimension_numbers<[1], [0], [0], [1], [0, 0, 1, 1], [], []>} : vector<4x128xbf16>, vector<128x128xbf16>, vector<4x128xf32> -> vector<4x128xf32>
    %c0_23 = arith.constant 0 : index
    %c0_24 = arith.constant 0 : index
    %40 = vector.load %arg14[%c0_23, %c0_24] : memref<1x128xf32, #tpu.memory_space<vmem>>, vector<1x128xf32>
    %41 = vector.broadcast %40 : vector<1x128xf32> to vector<4x128xf32>
    %42 = arith.addf %39, %41 : vector<4x128xf32>
    %cst_25 = arith.constant 5.000000e-01 : f32
    %43 = vector.broadcast %cst_25 : f32 to vector<4x128xf32>
    %44 = arith.mulf %42, %43 : vector<4x128xf32>
    %45 = math.exp %44 : vector<4x128xf32>
    %c0_26 = arith.constant 0 : index
    %c0_27 = arith.constant 0 : index
    %c0_28 = arith.constant 0 : index
    %46 = vector.load %arg2[%c0_26, %c0_27, %c0_28] : memref<1x4x128xf32, #tpu.memory_space<vmem>>, vector<1x4x128xf32>
    %47 = vector.shape_cast %46 : vector<1x4x128xf32> to vector<4x128xf32>
    %48 = arith.mulf %45, %47 : vector<4x128xf32>
    %49 = arith.addf %37, %48 : vector<4x128xf32>
    %50 = vector.extract_strided_slice %37 {offsets = [3, 0], sizes = [1, 128], strides = [1, 1]} : vector<4x128xf32> to vector<1x128xf32>
    %51 = vector.extract_strided_slice %42 {offsets = [3, 0], sizes = [1, 128], strides = [1, 1]} : vector<4x128xf32> to vector<1x128xf32>
    %52 = math.exp %51 : vector<1x128xf32>
    %53 = arith.mulf %50, %50 : vector<1x128xf32>
    %54 = arith.addf %52, %53 : vector<1x128xf32>
    %cst_29 = arith.constant 1.000000e+00 : f32
    %55 = vector.broadcast %cst_29 : f32 to vector<1x128xf32>
    %56 = arith.subf %54, %55 : vector<1x128xf32>
    %57 = arith.subf %56, %51 : vector<1x128xf32>
    %cst_30 = arith.constant 5.000000e-01 : f32
    %58 = vector.broadcast %cst_30 : f32 to vector<1x128xf32>
    %59 = arith.mulf %58, %57 : vector<1x128xf32>
    %c0_31 = arith.constant 0 : index
    %c0_32 = arith.constant 0 : index
    %c0_33 = arith.constant 0 : index
    %60 = vector.load %arg26[%c0_31, %c0_32, %c0_33] : memref<1x1x128xf32, #tpu.memory_space<vmem>>, vector<1x1x128xf32>
    %61 = vector.shape_cast %60 : vector<1x1x128xf32> to vector<1x128xf32>
    %62 = vector.shape_cast %59 : vector<1x128xf32> to vector<1x1x128xf32>
    tpu.vector_store %arg26[%c0_31, %c0_32, %c0_33], %62 {strides = array<i32>} : memref<1x1x128xf32, #tpu.memory_space<vmem>>, vector<1x1x128xf32>,
    %c0_34 = arith.constant 0 : index
    %c0_35 = arith.constant 0 : index
    %c0_36 = arith.constant 0 : index
    %63 = vector.load %arg3[%c0_34, %c0_35, %c0_36] : memref<1x4x768xf32, #tpu.memory_space<vmem>>, vector<1x4x768xf32>
    %64 = vector.shape_cast %63 : vector<1x4x768xf32> to vector<4x768xf32>
    %c0_37 = arith.constant 0 : index
    %c0_38 = arith.constant 0 : index
    %c0_39 = arith.constant 0 : index
    %65 = vector.load %arg4[%c0_37, %c0_38, %c0_39] : memref<1x4x1xf32, #tpu.memory_space<vmem>>, vector<1x4x1xf32>
    %66 = vector.shape_cast %65 : vector<1x4x1xf32> to vector<4x1xf32>
    %67 = vector.broadcast %66 : vector<4x1xf32> to vector<4x768xf32>
    %68 = arith.mulf %67, %1 : vector<4x768xf32>
    %c0_40 = arith.constant 0 : index
    %c0_41 = arith.constant 0 : index
    %c0_42 = arith.constant 0 : index
    %69 = vector.load %arg5[%c0_40, %c0_41, %c0_42] : memref<1x4x1xf32, #tpu.memory_space<vmem>>, vector<1x4x1xf32>
    %70 = vector.shape_cast %69 : vector<1x4x1xf32> to vector<4x1xf32>
    %71 = vector.broadcast %70 : vector<4x1xf32> to vector<4x768xf32>
    %72 = arith.mulf %71, %64 : vector<4x768xf32>
    %73 = arith.addf %68, %72 : vector<4x768xf32>
    %c0_43 = arith.constant 0 : index
    %c0_44 = arith.constant 0 : index
    %c0_45 = arith.constant 0 : index
    %74 = vector.load %arg6[%c0_43, %c0_44, %c0_45] : memref<1x4x128xf32, #tpu.memory_space<vmem>>, vector<1x4x128xf32>
    %75 = vector.shape_cast %74 : vector<1x4x128xf32> to vector<4x128xf32>
    %76 = arith.truncf %75 : vector<4x128xf32> to vector<4x128xbf16>
    %c0_46 = arith.constant 0 : index
    %c0_47 = arith.constant 0 : index
    %77 = vector.load %arg15[%c0_46, %c0_47] : memref<128x128xbf16, #tpu.memory_space<vmem>>, vector<128x128xbf16>
    %cst_48 = arith.constant dense<0.000000e+00> : vector<4x128xf32>
    %78 = tpu.matmul %76, %77, %cst_48 {dimension_numbers = #tpu.dot_dimension_numbers<[1], [0], [0], [1], [0, 0, 1, 1], [], []>} : vector<4x128xbf16>, vector<128x128xbf16>, vector<4x128xf32> -> vector<4x128xf32>
    %c0_49 = arith.constant 0 : index
    %c0_50 = arith.constant 0 : index
    %79 = vector.load %arg16[%c0_49, %c0_50] : memref<1x128xf32, #tpu.memory_space<vmem>>, vector<1x128xf32>
    %80 = vector.broadcast %79 : vector<1x128xf32> to vector<4x128xf32>
    %81 = arith.addf %78, %80 : vector<4x128xf32>
    %82 = arith.negf %81 : vector<4x128xf32>
    %83 = math.exp %82 : vector<4x128xf32>
    %cst_51 = arith.constant 1.000000e+00 : f32
    %84 = vector.broadcast %cst_51 : f32 to vector<4x128xf32>
    %85 = arith.addf %84, %83 : vector<4x128xf32>
    %86 = arith.divf %84, %85 : vector<4x128xf32>
    %87 = arith.mulf %81, %86 : vector<4x128xf32>
    %88 = arith.truncf %87 : vector<4x128xf32> to vector<4x128xbf16>
    %c0_52 = arith.constant 0 : index
    %c0_53 = arith.constant 0 : index
    %89 = vector.load %arg17[%c0_52, %c0_53] : memref<128x128xbf16, #tpu.memory_space<vmem>>, vector<128x128xbf16>
    %cst_54 = arith.constant dense<0.000000e+00> : vector<4x128xf32>
    %90 = tpu.matmul %88, %89, %cst_54 {dimension_numbers = #tpu.dot_dimension_numbers<[1], [0], [0], [1], [0, 0, 1, 1], [], []>} : vector<4x128xbf16>, vector<128x128xbf16>, vector<4x128xf32> -> vector<4x128xf32>
    %c0_55 = arith.constant 0 : index
    %c0_56 = arith.constant 0 : index
    %91 = vector.load %arg18[%c0_55, %c0_56] : memref<1x128xf32, #tpu.memory_space<vmem>>, vector<1x128xf32>
    %92 = vector.broadcast %91 : vector<1x128xf32> to vector<4x128xf32>
    %93 = arith.addf %90, %92 : vector<4x128xf32>
    %94 = arith.truncf %73 : vector<4x768xf32> to vector<4x768xbf16>
    %c0_57 = arith.constant 0 : index
    %c0_58 = arith.constant 0 : index
    %95 = vector.load %arg19[%c0_57, %c0_58] : memref<768x128xbf16, #tpu.memory_space<vmem>>, vector<768x128xbf16>
    %cst_59 = arith.constant dense<0.000000e+00> : vector<4x128xf32>
    %96 = tpu.matmul %94, %95, %cst_59 {dimension_numbers = #tpu.dot_dimension_numbers<[1], [0], [0], [1], [0, 0, 1, 1], [], []>} : vector<4x768xbf16>, vector<768x128xbf16>, vector<4x128xf32> -> vector<4x128xf32>
    %97 = arith.truncf %93 : vector<4x128xf32> to vector<4x128xbf16>
    %c0_60 = arith.constant 0 : index
    %c0_61 = arith.constant 0 : index
    %98 = vector.load %arg20[%c0_60, %c0_61] : memref<128x128xbf16, #tpu.memory_space<vmem>>, vector<128x128xbf16>
    %cst_62 = arith.constant dense<0.000000e+00> : vector<4x128xf32>
    %99 = tpu.matmul %97, %98, %cst_62 {dimension_numbers = #tpu.dot_dimension_numbers<[1], [0], [0], [1], [0, 0, 1, 1], [], []>} : vector<4x128xbf16>, vector<128x128xbf16>, vector<4x128xf32> -> vector<4x128xf32>
    %100 = arith.addf %96, %99 : vector<4x128xf32>
    %101 = arith.truncf %49 : vector<4x128xf32> to vector<4x128xbf16>
    %c0_63 = arith.constant 0 : index
    %c0_64 = arith.constant 0 : index
    %102 = vector.load %arg21[%c0_63, %c0_64] : memref<128x128xbf16, #tpu.memory_space<vmem>>, vector<128x128xbf16>
    %cst_65 = arith.constant dense<0.000000e+00> : vector<4x128xf32>
    %103 = tpu.matmul %101, %102, %cst_65 {dimension_numbers = #tpu.dot_dimension_numbers<[1], [0], [0], [1], [0, 0, 1, 1], [], []>} : vector<4x128xbf16>, vector<128x128xbf16>, vector<4x128xf32> -> vector<4x128xf32>
    %104 = arith.addf %100, %103 : vector<4x128xf32>
    %c0_66 = arith.constant 0 : index
    %c0_67 = arith.constant 0 : index
    %105 = vector.load %arg22[%c0_66, %c0_67] : memref<1x128xf32, #tpu.memory_space<vmem>>, vector<1x128xf32>
    %106 = vector.broadcast %105 : vector<1x128xf32> to vector<4x128xf32>
    %107 = arith.addf %104, %106 : vector<4x128xf32>
    %108 = arith.negf %107 : vector<4x128xf32>
    %109 = math.exp %108 : vector<4x128xf32>
    %cst_68 = arith.constant 1.000000e+00 : f32
    %110 = vector.broadcast %cst_68 : f32 to vector<4x128xf32>
    %111 = arith.addf %110, %109 : vector<4x128xf32>
    %112 = arith.divf %110, %111 : vector<4x128xf32>
    %113 = arith.mulf %107, %112 : vector<4x128xf32>
    %114 = arith.truncf %113 : vector<4x128xf32> to vector<4x128xbf16>
    %c0_69 = arith.constant 0 : index
    %c0_70 = arith.constant 0 : index
    %115 = vector.load %arg23[%c0_69, %c0_70] : memref<128x768xbf16, #tpu.memory_space<vmem>>, vector<128x768xbf16>
    %cst_71 = arith.constant dense<0.000000e+00> : vector<4x768xf32>
    %116 = tpu.matmul %114, %115, %cst_71 {dimension_numbers = #tpu.dot_dimension_numbers<[1], [0], [0], [1], [0, 0, 1, 1], [], []>} : vector<4x128xbf16>, vector<128x768xbf16>, vector<4x768xf32> -> vector<4x768xf32>
    %c0_72 = arith.constant 0 : index
    %c0_73 = arith.constant 0 : index
    %117 = vector.load %arg24[%c0_72, %c0_73] : memref<1x768xf32, #tpu.memory_space<vmem>>, vector<1x768xf32>
    %118 = vector.broadcast %117 : vector<1x768xf32> to vector<4x768xf32>
    %119 = arith.addf %116, %118 : vector<4x768xf32>
    %120 = arith.subf %119, %64 : vector<4x768xf32>
    %121 = arith.mulf %120, %120 : vector<4x768xf32>
    %cst_74 = arith.constant dense<0.000000e+00> : vector<4xf32>
    %122 = vector.multi_reduction <add>, %121, %cst_74 [1] : vector<4x768xf32> to vector<4xf32>
    %123 = vector.shape_cast %122 : vector<4xf32> to vector<4x1xf32>
    %cst_75 = arith.constant 0.00130208337 : f32
    %124 = vector.broadcast %cst_75 : f32 to vector<4x1xf32>
    %125 = arith.mulf %123, %124 : vector<4x1xf32>
    %126 = vector.shape_cast %125 : vector<4x1xf32> to vector<4x1xf32>
    %127 = vector.broadcast %126 : vector<4x1xf32> to vector<4x128xf32>
    %c0_76 = arith.constant 0 : index
    %c0_77 = arith.constant 0 : index
    %c0_78 = arith.constant 0 : index
    %128 = vector.load %arg25[%c0_76, %c0_77, %c0_78] : memref<1x4x128xf32, #tpu.memory_space<vmem>>, vector<1x4x128xf32>
    %129 = vector.shape_cast %128 : vector<1x4x128xf32> to vector<4x128xf32>
    %130 = vector.shape_cast %127 : vector<4x128xf32> to vector<1x4x128xf32>
    tpu.vector_store %arg25[%c0_76, %c0_77, %c0_78], %130 {strides = array<i32>} : memref<1x4x128xf32, #tpu.memory_space<vmem>>, vector<1x4x128xf32>,
    return
  }
  func.func @transform_0(%arg0: i32) -> (i32, i32, i32) {
    %c0_i32 = arith.constant 0 : i32
    %c0_i32_0 = arith.constant 0 : i32
    %c0_i32_1 = arith.constant 0 : i32
    return %arg0, %c0_i32, %c0_i32_0 : i32, i32, i32
  }
  func.func @transform_1(%arg0: i32) -> (i32, i32, i32) {
    %c0_i32 = arith.constant 0 : i32
    %c0_i32_0 = arith.constant 0 : i32
    %c0_i32_1 = arith.constant 0 : i32
    return %arg0, %c0_i32, %c0_i32_0 : i32, i32, i32
  }
  func.func @transform_2(%arg0: i32) -> (i32, i32, i32) {
    %c0_i32 = arith.constant 0 : i32
    %c0_i32_0 = arith.constant 0 : i32
    %c0_i32_1 = arith.constant 0 : i32
    return %arg0, %c0_i32, %c0_i32_0 : i32, i32, i32
  }
  func.func @transform_3(%arg0: i32) -> (i32, i32, i32) {
    %c0_i32 = arith.constant 0 : i32
    %c0_i32_0 = arith.constant 0 : i32
    %c0_i32_1 = arith.constant 0 : i32
    return %arg0, %c0_i32, %c0_i32_0 : i32, i32, i32
  }
  func.func @transform_4(%arg0: i32) -> (i32, i32, i32) {
    %c0_i32 = arith.constant 0 : i32
    %c0_i32_0 = arith.constant 0 : i32
    %c0_i32_1 = arith.constant 0 : i32
    return %arg0, %c0_i32, %c0_i32_0 : i32, i32, i32
  }
  func.func @transform_5(%arg0: i32) -> (i32, i32, i32) {
    %c0_i32 = arith.constant 0 : i32
    %c0_i32_0 = arith.constant 0 : i32
    %c0_i32_1 = arith.constant 0 : i32
    return %arg0, %c0_i32, %c0_i32_0 : i32, i32, i32
  }
  func.func @transform_6(%arg0: i32) -> (i32, i32) {
    %c0_i32 = arith.constant 0 : i32
    %c0_i32_0 = arith.constant 0 : i32
    %c0_i32_1 = arith.constant 0 : i32
    return %c0_i32, %c0_i32_0 : i32, i32
  }
  func.func @transform_7(%arg0: i32) -> (i32, i32) {
    %c0_i32 = arith.constant 0 : i32
    %c0_i32_0 = arith.constant 0 : i32
    %c0_i32_1 = arith.constant 0 : i32
    return %c0_i32, %c0_i32_0 : i32, i32
  }
  func.func @transform_8(%arg0: i32) -> (i32, i32) {
    %c0_i32 = arith.constant 0 : i32
    %c0_i32_0 = arith.constant 0 : i32
    %c0_i32_1 = arith.constant 0 : i32
    return %c0_i32, %c0_i32_0 : i32, i32
  }
  func.func @transform_9(%arg0: i32) -> (i32, i32) {
    %c0_i32 = arith.constant 0 : i32
    %c0_i32_0 = arith.constant 0 : i32
    %c0_i32_1 = arith.constant 0 : i32
    return %c0_i32, %c0_i32_0 : i32, i32
  }
  func.func @transform_10(%arg0: i32) -> (i32, i32) {
    %c0_i32 = arith.constant 0 : i32
    %c0_i32_0 = arith.constant 0 : i32
    %c0_i32_1 = arith.constant 0 : i32
    return %c0_i32, %c0_i32_0 : i32, i32
  }
  func.func @transform_11(%arg0: i32) -> (i32, i32) {
    %c0_i32 = arith.constant 0 : i32
    %c0_i32_0 = arith.constant 0 : i32
    %c0_i32_1 = arith.constant 0 : i32
    return %c0_i32, %c0_i32_0 : i32, i32
  }
  func.func @transform_12(%arg0: i32) -> (i32, i32) {
    %c0_i32 = arith.constant 0 : i32
    %c0_i32_0 = arith.constant 0 : i32
    %c0_i32_1 = arith.constant 0 : i32
    return %c0_i32, %c0_i32_0 : i32, i32
  }
  func.func @transform_13(%arg0: i32) -> (i32, i32) {
    %c0_i32 = arith.constant 0 : i32
    %c0_i32_0 = arith.constant 0 : i32
    %c0_i32_1 = arith.constant 0 : i32
    return %c0_i32, %c0_i32_0 : i32, i32
  }
  func.func @transform_14(%arg0: i32) -> (i32, i32) {
    %c0_i32 = arith.constant 0 : i32
    %c0_i32_0 = arith.constant 0 : i32
    %c0_i32_1 = arith.constant 0 : i32
    return %c0_i32, %c0_i32_0 : i32, i32
  }
  func.func @transform_15(%arg0: i32) -> (i32, i32) {
    %c0_i32 = arith.constant 0 : i32
    %c0_i32_0 = arith.constant 0 : i32
    %c0_i32_1 = arith.constant 0 : i32
    return %c0_i32, %c0_i32_0 : i32, i32
  }
  func.func @transform_16(%arg0: i32) -> (i32, i32) {
    %c0_i32 = arith.constant 0 : i32
    %c0_i32_0 = arith.constant 0 : i32
    %c0_i32_1 = arith.constant 0 : i32
    return %c0_i32, %c0_i32_0 : i32, i32
  }
  func.func @transform_17(%arg0: i32) -> (i32, i32) {
    %c0_i32 = arith.constant 0 : i32
    %c0_i32_0 = arith.constant 0 : i32
    %c0_i32_1 = arith.constant 0 : i32
    return %c0_i32, %c0_i32_0 : i32, i32
  }
  func.func @transform_18(%arg0: i32) -> (i32, i32) {
    %c0_i32 = arith.constant 0 : i32
    %c0_i32_0 = arith.constant 0 : i32
    %c0_i32_1 = arith.constant 0 : i32
    return %c0_i32, %c0_i32_0 : i32, i32
  }
  func.func @transform_19(%arg0: i32) -> (i32, i32) {
    %c0_i32 = arith.constant 0 : i32
    %c0_i32_0 = arith.constant 0 : i32
    %c0_i32_1 = arith.constant 0 : i32
    return %c0_i32, %c0_i32_0 : i32, i32
  }
  func.func @transform_20(%arg0: i32) -> (i32, i32) {
    %c0_i32 = arith.constant 0 : i32
    %c0_i32_0 = arith.constant 0 : i32
    %c0_i32_1 = arith.constant 0 : i32
    return %c0_i32, %c0_i32_0 : i32, i32
  }
  func.func @transform_21(%arg0: i32) -> (i32, i32) {
    %c0_i32 = arith.constant 0 : i32
    %c0_i32_0 = arith.constant 0 : i32
    %c0_i32_1 = arith.constant 0 : i32
    return %c0_i32, %c0_i32_0 : i32, i32
  }
  func.func @transform_22(%arg0: i32) -> (i32, i32) {
    %c0_i32 = arith.constant 0 : i32
    %c0_i32_0 = arith.constant 0 : i32
    %c0_i32_1 = arith.constant 0 : i32
    return %c0_i32, %c0_i32_0 : i32, i32
  }
  func.func @transform_23(%arg0: i32) -> (i32, i32) {
    %c0_i32 = arith.constant 0 : i32
    %c0_i32_0 = arith.constant 0 : i32
    %c0_i32_1 = arith.constant 0 : i32
    return %c0_i32, %c0_i32_0 : i32, i32
  }
  func.func @transform_24(%arg0: i32) -> (i32, i32, i32) {
    %c0_i32 = arith.constant 0 : i32
    %c0_i32_0 = arith.constant 0 : i32
    %c0_i32_1 = arith.constant 0 : i32
    return %arg0, %c0_i32, %c0_i32_0 : i32, i32, i32
  }
  func.func @transform_25(%arg0: i32) -> (i32, i32, i32) {
    %c0_i32 = arith.constant 0 : i32
    %c0_i32_0 = arith.constant 0 : i32
    %c0_i32_1 = arith.constant 0 : i32
    return %arg0, %c0_i32, %c0_i32_0 : i32, i32, i32
  }
}

</mosaic_0001>

<llo_original>
// kernel: squeeze.18
$region0: #{squeeze.18}
  %s0 = inlined_call_operand.vmem [shape: f32[2,4], index: 0, kind: input, shape index: {}]
  %s1 = inlined_call_operand.vmem [shape: f32[8], index: 1, kind: output, shape index: {}]
  $region1: #{squeeze.18} parent=0
    #allocation0 [shape = 'u8[4096]{0}', space=vmem, size = 0x1000, scoped, tag = 'scoped mem for output reshape']
    #allocation1 [shape = 'u8[4096]{0}', space=vmem, size = 0x1000, scoped, tag = 'scoped mem for input reshape']
    %s3 = sshllo.u32 0, 2
    %v4 = vld [vmem:[%s0] sm:%s3]
    %5 = vst [vmem:[#allocation1] sm:%s3] %v4
    %v6 = vld [vmem:[#allocation1] sm:$0x1]
    %vm7 = vcmask 31744
    %8 = vst.msk [vmem:[#allocation0] sm:$0x1] %vm7, %v6
    %s9 = scalar_lea.vmem [#allocation1], 1
    %v10 = vld [vmem:[%s9] sm:$0x1]
    %11 = vrot.lane.b32.xlu0 %v10, 4
    %v12 = vpop.permute.xlu0 %11
    %vm13 = vcmask 64544
    %14 = vst.msk [vmem:[#allocation0] sm:$0x1] %vm13, %v12
    %s16 = sshllo.u32 0, 1
    %v18 = vld [vmem:[#allocation0] sm:%s16]
    %s19 = sshllo.u32 0, 1
    %20 = vst [vmem:[%s1] sm:%s19] %v18

// kernel: vfsddpm_forward.1
$region0: #{vfsddpm_forward.1}
  #allocation0 [shape = 'u32[]', space=smem, size = 0x4, offset = 0x4, fixed_abs, tag = 'smem constant byte address 0x4 - core index']
  #allocation1 [shape = 'u32[144,128]{1,0:T(1,128)}', space=vmem, size = 0x12000, scoped, tag = 'internal scratch']
  %s0 = inlined_call_operand.hbm [shape: f32[2,4,768], index: 0, kind: input, shape index: {}]
  %s1 = inlined_call_operand.hbm [shape: f32[2,4,128], index: 1, kind: input, shape index: {}]
  %s2 = inlined_call_operand.hbm [shape: f32[2,4,768], index: 2, kind: input, shape index: {}]
  %s3 = inlined_call_operand.hbm [shape: f32[2,4,1], index: 3, kind: input, shape index: {}]
  %s4 = inlined_call_operand.hbm [shape: f32[2,4,1], index: 4, kind: input, shape index: {}]
  %s5 = inlined_call_operand.hbm [shape: f32[2,4,128], index: 5, kind: input, shape index: {}]
  %s6 = inlined_call_operand.hbm [shape: bf16[768,128], index: 6, kind: input, shape index: {}]
  %s7 = inlined_call_operand.hbm [shape: f32[1,128], index: 7, kind: input, shape index: {}]
  %s8 = inlined_call_operand.hbm [shape: bf16[128,128], index: 8, kind: input, shape index: {}]
  %s9 = inlined_call_operand.hbm [shape: f32[1,128], index: 9, kind: input, shape index: {}]
  %s10 = inlined_call_operand.hbm [shape: bf16[128,128], index: 10, kind: input, shape index: {}]
  %s11 = inlined_call_operand.hbm [shape: f32[1,128], index: 11, kind: input, shape index: {}]
  %s12 = inlined_call_operand.hbm [shape: bf16[128,128], index: 12, kind: input, shape index: {}]
  %s13 = inlined_call_operand.hbm [shape: f32[1,128], index: 13, kind: input, shape index: {}]
  %s14 = inlined_call_operand.hbm [shape: bf16[128,128], index: 14, kind: input, shape index: {}]
  %s15 = inlined_call_operand.hbm [shape: f32[1,128], index: 15, kind: input, shape index: {}]
  %s16 = inlined_call_operand.hbm [shape: bf16[128,128], index: 16, kind: input, shape index: {}]
  %s17 = inlined_call_operand.hbm [shape: f32[1,128], index: 17, kind: input, shape index: {}]
  %s18 = inlined_call_operand.hbm [shape: bf16[768,128], index: 18, kind: input, shape index: {}]
  %s19 = inlined_call_operand.hbm [shape: bf16[128,128], index: 19, kind: input, shape index: {}]
  %s20 = inlined_call_operand.hbm [shape: bf16[128,128], index: 20, kind: input, shape index: {}]
  %s21 = inlined_call_operand.hbm [shape: f32[1,128], index: 21, kind: input, shape index: {}]
  %s22 = inlined_call_operand.hbm [shape: bf16[128,768], index: 22, kind: input, shape index: {}]
  %s23 = inlined_call_operand.hbm [shape: f32[1,768], index: 23, kind: input, shape index: {}]
  %s24 = inlined_call_operand.hbm [shape: f32[2,4,128], index: 24, kind: output, shape index: {0}]
  %s25 = inlined_call_operand.hbm [shape: f32[2,1,128], index: 25, kind: output, shape index: {1}]
  %26 = xla_tuple %s24, %s25
  %s27 = sld [smem:[#allocation0]]
  $region233: #{vfsddpm_forward.1} parent=0
    _
  %s29 = ssub.s32 1, %s27
  %s30 = scalar_select 0, %s29, %s27
  $region1: #{vfsddpm_forward.1} parent=0
    #allocation2 [shape = 'u8[24576]{0}', space=vmem, size = 0x6000, scoped, tag = 'input window, operand 0']
    #allocation3 [shape = 's32[2]{0}', space=sflag, size = 0x8, scoped, tag = 'scoped memory for vfsddpm_forward.1']
    #allocation4 [shape = 's32[2]{0}', space=sflag, size = 0x8, scoped, tag = 'scoped memory for vfsddpm_forward.1']
    #allocation5 [shape = 'u8[4096]{0}', space=vmem, size = 0x1000, scoped, tag = 'input window, operand 1']
    #allocation6 [shape = 's32[2]{0}', space=sflag, size = 0x8, scoped, tag = 'scoped memory for vfsddpm_forward.1']
    #allocation7 [shape = 'u8[24576]{0}', space=vmem, size = 0x6000, scoped, tag = 'input window, operand 2']
    #allocation8 [shape = 'u8[4096]{0}', space=vmem, size = 0x1000, scoped, tag = 'input window, operand 3']
    #allocation9 [shape = 's32[2]{0}', space=sflag, size = 0x8, scoped, tag = 'scoped memory for vfsddpm_forward.1']
    #allocation10 [shape = 'u8[4096]{0}', space=vmem, size = 0x1000, scoped, tag = 'input window, operand 4']
    #allocation11 [shape = 'u8[4096]{0}', space=vmem, size = 0x1000, scoped, tag = 'input window, operand 5']
    #allocation12 [shape = 's32[2]{0}', space=sflag, size = 0x8, scoped, tag = 'scoped memory for vfsddpm_forward.1']
    #allocation13 [shape = 'u8[196608]{0}', space=vmem, size = 0x30000, scoped, tag = 'input window, operand 6, single buffered']
    #allocation14 [shape = 'u8[512]{0}', space=vmem, size = 0x400, scoped, tag = 'input window, operand 7, single buffered']
    #allocation15 [shape = 's32[1]{0}', space=sflag, size = 0x4, scoped, tag = 'scoped memory for vfsddpm_forward.1']
    #allocation16 [shape = 'u8[32768]{0}', space=vmem, size = 0x8000, scoped, tag = 'input window, operand 8, single buffered']
    #allocation17 [shape = 'u8[512]{0}', space=vmem, size = 0x400, scoped, tag = 'input window, operand 9, single buffered']
    #allocation18 [shape = 's32[1]{0}', space=sflag, size = 0x4, scoped, tag = 'scoped memory for vfsddpm_forward.1']
    #allocation19 [shape = 'u8[32768]{0}', space=vmem, size = 0x8000, scoped, tag = 'input window, operand 10, single buffered']
    #allocation20 [shape = 'u8[512]{0}', space=vmem, size = 0x400, scoped, tag = 'input window, operand 11, single buffered']
    #allocation21 [shape = 's32[1]{0}', space=sflag, size = 0x4, scoped, tag = 'scoped memory for vfsddpm_forward.1']
    #allocation22 [shape = 'u8[32768]{0}', space=vmem, size = 0x8000, scoped, tag = 'input window, operand 12, single buffered']
    #allocation23 [shape = 'u8[512]{0}', space=vmem, size = 0x400, scoped, tag = 'input window, operand 13, single buffered']
    #allocation24 [shape = 's32[1]{0}', space=sflag, size = 0x4, scoped, tag = 'scoped memory for vfsddpm_forward.1']
    #allocation25 [shape = 'u8[32768]{0}', space=vmem, size = 0x8000, scoped, tag = 'input window, operand 14, single buffered']
    #allocation26 [shape = 'u8[512]{0}', space=vmem, size = 0x400, scoped, tag = 'input window, operand 15, single buffered']
    #allocation27 [shape = 's32[1]{0}', space=sflag, size = 0x4, scoped, tag = 'scoped memory for vfsddpm_forward.1']
    #allocation28 [shape = 'u8[32768]{0}', space=vmem, size = 0x8000, scoped, tag = 'input window, operand 16, single buffered']
    #allocation29 [shape = 'u8[512]{0}', space=vmem, size = 0x400, scoped, tag = 'input window, operand 17, single buffered']
    #allocation30 [shape = 's32[1]{0}', space=sflag, size = 0x4, scoped, tag = 'scoped memory for vfsddpm_forward.1']
    #allocation31 [shape = 'u8[196608]{0}', space=vmem, size = 0x30000, scoped, tag = 'input window, operand 18, single buffered']
    #allocation32 [shape = 'u8[32768]{0}', space=vmem, size = 0x8000, scoped, tag = 'input window, operand 19, single buffered']
    #allocation33 [shape = 's32[1]{0}', space=sflag, size = 0x4, scoped, tag = 'scoped memory for vfsddpm_forward.1']
    #allocation34 [shape = 'u8[32768]{0}', space=vmem, size = 0x8000, scoped, tag = 'input window, operand 20, single buffered']
    #allocation35 [shape = 'u8[512]{0}', space=vmem, size = 0x400, scoped, tag = 'input window, operand 21, single buffered']
    #allocation36 [shape = 's32[1]{0}', space=sflag, size = 0x4, scoped, tag = 'scoped memory for vfsddpm_forward.1']
    #allocation37 [shape = 'u8[196608]{0}', space=vmem, size = 0x30000, scoped, tag = 'input window, operand 22, single buffered']
    #allocation38 [shape = 'u8[3072]{0}', space=vmem, size = 0xc00, scoped, tag = 'input window, operand 23, single buffered']
    #allocation39 [shape = 's32[1]{0}', space=sflag, size = 0x4, scoped, tag = 'scoped memory for vfsddpm_forward.1']
    #allocation40 [shape = 'u8[4096]{0}', space=vmem, size = 0x1000, scoped, tag = 'output window, operand 0']
    #allocation41 [shape = 'u8[1024]{0}', space=vmem, size = 0x400, scoped, tag = 'output window, operand 1']
    #allocation42 [shape = 's32[2]{0}', space=sflag, size = 0x8, scoped, tag = 'scoped memory for vfsddpm_forward.1']
    %31 = vsyncpa [#allocation3], 0
    %s32 = scalar_lea.sflag [#allocation3], 1
    %33 = vsyncpa %s32, 0
    %34 = vsyncpa [#allocation6], 0
    %s35 = scalar_lea.sflag [#allocation6], 1
    %36 = vsyncpa %s35, 0
    %37 = vsyncpa [#allocation9], 0
    %s38 = scalar_lea.sflag [#allocation9], 1
    %39 = vsyncpa %s38, 0
    %40 = vsyncpa [#allocation12], 0
    %s41 = scalar_lea.sflag [#allocation12], 1
    %42 = vsyncpa %s41, 0
    %43 = vsyncpa [#allocation15], 0
    %44 = vsyncpa [#allocation18], 0
    %45 = vsyncpa [#allocation21], 0
    %46 = vsyncpa [#allocation24], 0
    %47 = vsyncpa [#allocation27], 0
    %48 = vsyncpa [#allocation30], 0
    %49 = vsyncpa [#allocation33], 0
    %50 = vsyncpa [#allocation36], 0
    %51 = vsyncpa [#allocation39], 0
    %52 = vsyncpa [#allocation4], 0
    %s53 = scalar_lea.sflag [#allocation4], 1
    %54 = vsyncpa %s53, 0
    %55 = vsyncpa [#allocation42], 0
    %s56 = scalar_lea.sflag [#allocation42], 1
    %57 = vsyncpa %s56, 0
    loop: start=0, step=1, limit=4
    $region2: #{vfsddpm_forward.1} parent=1 // loop_pre_header
      _
    $region3: #{vfsddpm_forward.1} parent=1 // loop_header
      %s59 = sphi 0, %s63
      %p60 = scmp.ge.s32.totalorder %s59, 4
      %s69 = sphi 0, %s71
      %s72 = sphi 0, %s69
      %s73 = sphi 0, %s72
      %s89 = sphi 0, %s73
      %s95 = sphi 0, %s97
      %s98 = sphi 0, %s95
      %s99 = sphi 0, %s98
      %s115 = sphi 0, %s99
      %s121 = sphi 0, %s123
      %s124 = sphi 0, %s121
      %s125 = sphi 0, %s124
      %s141 = sphi 0, %s125
      %s147 = sphi 0, %s149
      %s150 = sphi 0, %s147
      %s151 = sphi 0, %s150
      %s167 = sphi 0, %s151
      %s173 = sphi 0, %s175
      %s176 = sphi 0, %s173
      %s177 = sphi 0, %s176
      %s193 = sphi 0, %s177
      %s199 = sphi 0, %s201
      %s202 = sphi 0, %s199
      %s203 = sphi 0, %s202
      %s219 = sphi 0, %s203
      %s223 = sphi 0, %s223
      %s225 = sphi 0, %s223
      %s226 = sphi 0, %s225
      %s240 = sphi 0, %s226
      %s244 = sphi 0, %s244
      %s246 = sphi 0, %s244
      %s247 = sphi 0, %s246
      %s261 = sphi 0, %s247
      %s265 = sphi 0, %s265
      %s267 = sphi 0, %s265
      %s268 = sphi 0, %s267
      %s282 = sphi 0, %s268
      %s286 = sphi 0, %s286
      %s288 = sphi 0, %s286
      %s289 = sphi 0, %s288
      %s303 = sphi 0, %s289
      %s307 = sphi 0, %s307
      %s309 = sphi 0, %s307
      %s310 = sphi 0, %s309
      %s324 = sphi 0, %s310
      %s328 = sphi 0, %s328
      %s330 = sphi 0, %s328
      %s331 = sphi 0, %s330
      %s345 = sphi 0, %s331
      %s349 = sphi 0, %s349
      %s351 = sphi 0, %s349
      %s352 = sphi 0, %s351
      %s366 = sphi 0, %s352
      %s370 = sphi 0, %s370
      %s372 = sphi 0, %s370
      %s373 = sphi 0, %s372
      %s387 = sphi 0, %s373
      %s391 = sphi 0, %s391
      %s393 = sphi 0, %s391
      %s394 = sphi 0, %s393
      %s408 = sphi 0, %s394
      %s412 = sphi 0, %s412
      %s414 = sphi 0, %s412
      %s415 = sphi 0, %s414
      %s429 = sphi 0, %s415
      %s433 = sphi 0, %s433
      %s435 = sphi 0, %s433
      %s436 = sphi 0, %s435
      %s450 = sphi 0, %s436
      %s454 = sphi 0, %s454
      %s456 = sphi 0, %s454
      %s457 = sphi 0, %s456
      %s471 = sphi 0, %s457
      %s475 = sphi 0, %s475
      %s477 = sphi 0, %s475
      %s478 = sphi 0, %s477
      %s492 = sphi 0, %s478
      %s496 = sphi 0, %s496
      %s498 = sphi 0, %s496
      %s499 = sphi 0, %s498
      %s513 = sphi 0, %s499
      %s517 = sphi 0, %s517
      %s519 = sphi 0, %s517
      %s520 = sphi 0, %s519
      %s534 = sphi 0, %s520
      %s538 = sphi 0, %s538
      %s540 = sphi 0, %s538
      %s541 = sphi 0, %s540
      %s555 = sphi 0, %s541
      %s559 = sphi 0, %s559
      %s561 = sphi 0, %s559
      %s562 = sphi 0, %s561
      %s576 = sphi 0, %s562
      %s580 = sphi 0, %s580
      %s582 = sphi 0, %s580
      %s583 = sphi 0, %s582
      %s597 = sphi 0, %s583
      %s603 = sphi 0, %s605
      %s606 = sphi 0, %s603
      %s607 = sphi 0, %s606
      %s623 = sphi 0, %s607
      %s629 = sphi 0, %s631
      %s632 = sphi 0, %s629
      %s633 = sphi 0, %s632
      %s649 = sphi 0, %s633
    $region4: #{vfsddpm_forward.1} parent=1 // loop_header_branch
      %62 = sbr.rel (%p60) target = $region8
    $region5: #{vfsddpm_forward.1} parent=1 // loop_body
      %s64 = ssub.s32 %s59, 1
      %s65 = ssub.s32 %s59, 2
      %s66 = sadd.s32 %s59, 1
      %s67 = ssub.s32 %s59, %s66
      %p68 = scmp.eq.s32.totalorder %s67, 0
      %s70 = sadd.s32 %s69, 1
      %s71 = scalar_select %p68, %s69, %s70
      %p74 = pneg %p68
      %p75 = scmp.eq.s32.totalorder %s59, 1
      %p76 = por %p74, %p75
      %p77 = scmp.ne.s32.totalorder %s69, %s72
      %p78 = scmp.eq.s32.totalorder %s59, 0
      %p79 = por %p77, %p78
      %p80 = scmp.ne.s32.totalorder %s69, %s72
      %p81 = scmp.eq.s32.totalorder %s64, 1
      %p82 = por %p80, %p81
      %p83 = scmp.ne.s32.totalorder %s72, %s73
      %p84 = scmp.eq.s32.totalorder %s64, 0
      %p85 = por %p83, %p84
      %p86 = scmp.ne.s32.totalorder %s72, %s73
      %p87 = scmp.eq.s32.totalorder %s65, 1
      %p88 = por %p86, %p87
      %p90 = scmp.ne.s32.totalorder %s73, %s89
      %p91 = scmp.eq.s32.totalorder %s65, 0
      %p92 = por %p90, %p91
      %s93 = ssub.s32 %s59, %s66
      %p94 = scmp.eq.s32.totalorder %s93, 0
      %s96 = sadd.s32 %s95, 1
      %s97 = scalar_select %p94, %s95, %s96
      %p100 = pneg %p94
      %p101 = scmp.eq.s32.totalorder %s59, 1
      %p102 = por %p100, %p101
      %p103 = scmp.ne.s32.totalorder %s95, %s98
      %p104 = scmp.eq.s32.totalorder %s59, 0
      %p105 = por %p103, %p104
      %p106 = scmp.ne.s32.totalorder %s95, %s98
      %p107 = scmp.eq.s32.totalorder %s64, 1
      %p108 = por %p106, %p107
      %p109 = scmp.ne.s32.totalorder %s98, %s99
      %p110 = scmp.eq.s32.totalorder %s64, 0
      %p111 = por %p109, %p110
      %p112 = scmp.ne.s32.totalorder %s98, %s99
      %p113 = scmp.eq.s32.totalorder %s65, 1
      %p114 = por %p112, %p113
      %p116 = scmp.ne.s32.totalorder %s99, %s115
      %p117 = scmp.eq.s32.totalorder %s65, 0
      %p118 = por %p116, %p117
      %s119 = ssub.s32 %s59, %s66
      %p120 = scmp.eq.s32.totalorder %s119, 0
      %s122 = sadd.s32 %s121, 1
      %s123 = scalar_select %p120, %s121, %s122
      %p126 = pneg %p120
      %p127 = scmp.eq.s32.totalorder %s59, 1
      %p128 = por %p126, %p127
      %p129 = scmp.ne.s32.totalorder %s121, %s124
      %p130 = scmp.eq.s32.totalorder %s59, 0
      %p131 = por %p129, %p130
      %p132 = scmp.ne.s32.totalorder %s121, %s124
      %p133 = scmp.eq.s32.totalorder %s64, 1
      %p134 = por %p132, %p133
      %p135 = scmp.ne.s32.totalorder %s124, %s125
      %p136 = scmp.eq.s32.totalorder %s64, 0
      %p137 = por %p135, %p136
      %p138 = scmp.ne.s32.totalorder %s124, %s125
      %p139 = scmp.eq.s32.totalorder %s65, 1
      %p140 = por %p138, %p139
      %p142 = scmp.ne.s32.totalorder %s125, %s141
      %p143 = scmp.eq.s32.totalorder %s65, 0
      %p144 = por %p142, %p143
      %s145 = ssub.s32 %s59, %s66
      %p146 = scmp.eq.s32.totalorder %s145, 0
      %s148 = sadd.s32 %s147, 1
      %s149 = scalar_select %p146, %s147, %s148
      %p152 = pneg %p146
      %p153 = scmp.eq.s32.totalorder %s59, 1
      %p154 = por %p152, %p153
      %p155 = scmp.ne.s32.totalorder %s147, %s150
      %p156 = scmp.eq.s32.totalorder %s59, 0
      %p157 = por %p155, %p156
      %p158 = scmp.ne.s32.totalorder %s147, %s150
      %p159 = scmp.eq.s32.totalorder %s64, 1
      %p160 = por %p158, %p159
      %p161 = scmp.ne.s32.totalorder %s150, %s151
      %p162 = scmp.eq.s32.totalorder %s64, 0
      %p163 = por %p161, %p162
      %p164 = scmp.ne.s32.totalorder %s150, %s151
      %p165 = scmp.eq.s32.totalorder %s65, 1
      %p166 = por %p164, %p165
      %p168 = scmp.ne.s32.totalorder %s151, %s167
      %p169 = scmp.eq.s32.totalorder %s65, 0
      %p170 = por %p168, %p169
      %s171 = ssub.s32 %s59, %s66
      %p172 = scmp.eq.s32.totalorder %s171, 0
      %s174 = sadd.s32 %s173, 1
      %s175 = scalar_select %p172, %s173, %s174
      %p178 = pneg %p172
      %p179 = scmp.eq.s32.totalorder %s59, 1
      %p180 = por %p178, %p179
      %p181 = scmp.ne.s32.totalorder %s173, %s176
      %p182 = scmp.eq.s32.totalorder %s59, 0
      %p183 = por %p181, %p182
      %p184 = scmp.ne.s32.totalorder %s173, %s176
      %p185 = scmp.eq.s32.totalorder %s64, 1
      %p186 = por %p184, %p185
      %p187 = scmp.ne.s32.totalorder %s176, %s177
      %p188 = scmp.eq.s32.totalorder %s64, 0
      %p189 = por %p187, %p188
      %p190 = scmp.ne.s32.totalorder %s176, %s177
      %p191 = scmp.eq.s32.totalorder %s65, 1
      %p192 = por %p190, %p191
      %p194 = scmp.ne.s32.totalorder %s177, %s193
      %p195 = scmp.eq.s32.totalorder %s65, 0
      %p196 = por %p194, %p195
      %s197 = ssub.s32 %s59, %s66
      %p198 = scmp.eq.s32.totalorder %s197, 0
      %s200 = sadd.s32 %s199, 1
      %s201 = scalar_select %p198, %s199, %s200
      %p204 = pneg %p198
      %p205 = scmp.eq.s32.totalorder %s59, 1
      %p206 = por %p204, %p205
      %p207 = scmp.ne.s32.totalorder %s199, %s202
      %p208 = scmp.eq.s32.totalorder %s59, 0
      %p209 = por %p207, %p208
      %p210 = scmp.ne.s32.totalorder %s199, %s202
      %p211 = scmp.eq.s32.totalorder %s64, 1
      %p212 = por %p210, %p211
      %p213 = scmp.ne.s32.totalorder %s202, %s203
      %p214 = scmp.eq.s32.totalorder %s64, 0
      %p215 = por %p213, %p214
      %p216 = scmp.ne.s32.totalorder %s202, %s203
      %p217 = scmp.eq.s32.totalorder %s65, 1
      %p218 = por %p216, %p217
      %p220 = scmp.ne.s32.totalorder %s203, %s219
      %p221 = scmp.eq.s32.totalorder %s65, 0
      %p222 = por %p220, %p221
      %s224 = sadd.s32 %s223, 1
      %p227 = scmp.eq.s32.totalorder %s59, 1
      %p228 = scmp.ne.s32.totalorder %s223, %s225
      %p229 = scmp.eq.s32.totalorder %s59, 0
      %p230 = por %p228, %p229
      %p231 = scmp.ne.s32.totalorder %s223, %s225
      %p232 = scmp.eq.s32.totalorder %s64, 1
      %p233 = por %p231, %p232
      %p234 = scmp.ne.s32.totalorder %s225, %s226
      %p235 = scmp.eq.s32.totalorder %s64, 0
      %p236 = por %p234, %p235
      %p237 = scmp.ne.s32.totalorder %s225, %s226
      %p238 = scmp.eq.s32.totalorder %s65, 1
      %p239 = por %p237, %p238
      %p241 = scmp.ne.s32.totalorder %s226, %s240
      %p242 = scmp.eq.s32.totalorder %s65, 0
      %p243 = por %p241, %p242
      %s245 = sadd.s32 %s244, 1
      %p248 = scmp.eq.s32.totalorder %s59, 1
      %p249 = scmp.ne.s32.totalorder %s244, %s246
      %p250 = scmp.eq.s32.totalorder %s59, 0
      %p251 = por %p249, %p250
      %p252 = scmp.ne.s32.totalorder %s244, %s246
      %p253 = scmp.eq.s32.totalorder %s64, 1
      %p254 = por %p252, %p253
      %p255 = scmp.ne.s32.totalorder %s246, %s247
      %p256 = scmp.eq.s32.totalorder %s64, 0
      %p257 = por %p255, %p256
      %p258 = scmp.ne.s32.totalorder %s246, %s247
      %p259 = scmp.eq.s32.totalorder %s65, 1
      %p260 = por %p258, %p259
      %p262 = scmp.ne.s32.totalorder %s247, %s261
      %p263 = scmp.eq.s32.totalorder %s65, 0
      %p264 = por %p262, %p263
      %s266 = sadd.s32 %s265, 1
      %p269 = scmp.eq.s32.totalorder %s59, 1
      %p270 = scmp.ne.s32.totalorder %s265, %s267
      %p271 = scmp.eq.s32.totalorder %s59, 0
      %p272 = por %p270, %p271
      %p273 = scmp.ne.s32.totalorder %s265, %s267
      %p274 = scmp.eq.s32.totalorder %s64, 1
      %p275 = por %p273, %p274
      %p276 = scmp.ne.s32.totalorder %s267, %s268
      %p277 = scmp.eq.s32.totalorder %s64, 0
      %p278 = por %p276, %p277
      %p279 = scmp.ne.s32.totalorder %s267, %s268
      %p280 = scmp.eq.s32.totalorder %s65, 1
      %p281 = por %p279, %p280
      %p283 = scmp.ne.s32.totalorder %s268, %s282
      %p284 = scmp.eq.s32.totalorder %s65, 0
      %p285 = por %p283, %p284
      %s287 = sadd.s32 %s286, 1
      %p290 = scmp.eq.s32.totalorder %s59, 1
      %p291 = scmp.ne.s32.totalorder %s286, %s288
      %p292 = scmp.eq.s32.totalorder %s59, 0
      %p293 = por %p291, %p292
      %p294 = scmp.ne.s32.totalorder %s286, %s288
      %p295 = scmp.eq.s32.totalorder %s64, 1
      %p296 = por %p294, %p295
      %p297 = scmp.ne.s32.totalorder %s288, %s289
      %p298 = scmp.eq.s32.totalorder %s64, 0
      %p299 = por %p297, %p298
      %p300 = scmp.ne.s32.totalorder %s288, %s289
      %p301 = scmp.eq.s32.totalorder %s65, 1
      %p302 = por %p300, %p301
      %p304 = scmp.ne.s32.totalorder %s289, %s303
      %p305 = scmp.eq.s32.totalorder %s65, 0
      %p306 = por %p304, %p305
      %s308 = sadd.s32 %s307, 1
      %p311 = scmp.eq.s32.totalorder %s59, 1
      %p312 = scmp.ne.s32.totalorder %s307, %s309
      %p313 = scmp.eq.s32.totalorder %s59, 0
      %p314 = por %p312, %p313
      %p315 = scmp.ne.s32.totalorder %s307, %s309
      %p316 = scmp.eq.s32.totalorder %s64, 1
      %p317 = por %p315, %p316
      %p318 = scmp.ne.s32.totalorder %s309, %s310
      %p319 = scmp.eq.s32.totalorder %s64, 0
      %p320 = por %p318, %p319
      %p321 = scmp.ne.s32.totalorder %s309, %s310
      %p322 = scmp.eq.s32.totalorder %s65, 1
      %p323 = por %p321, %p322
      %p325 = scmp.ne.s32.totalorder %s310, %s324
      %p326 = scmp.eq.s32.totalorder %s65, 0
      %p327 = por %p325, %p326
      %s329 = sadd.s32 %s328, 1
      %p332 = scmp.eq.s32.totalorder %s59, 1
      %p333 = scmp.ne.s32.totalorder %s328, %s330
      %p334 = scmp.eq.s32.totalorder %s59, 0
      %p335 = por %p333, %p334
      %p336 = scmp.ne.s32.totalorder %s328, %s330
      %p337 = scmp.eq.s32.totalorder %s64, 1
      %p338 = por %p336, %p337
      %p339 = scmp.ne.s32.totalorder %s330, %s331
      %p340 = scmp.eq.s32.totalorder %s64, 0
      %p341 = por %p339, %p340
      %p342 = scmp.ne.s32.totalorder %s330, %s331
      %p343 = scmp.eq.s32.totalorder %s65, 1
      %p344 = por %p342, %p343
      %p346 = scmp.ne.s32.totalorder %s331, %s345
      %p347 = scmp.eq.s32.totalorder %s65, 0
      %p348 = por %p346, %p347
      %s350 = sadd.s32 %s349, 1
      %p353 = scmp.eq.s32.totalorder %s59, 1
      %p354 = scmp.ne.s32.totalorder %s349, %s351
      %p355 = scmp.eq.s32.totalorder %s59, 0
      %p356 = por %p354, %p355
      %p357 = scmp.ne.s32.totalorder %s349, %s351
      %p358 = scmp.eq.s32.totalorder %s64, 1
      %p359 = por %p357, %p358
      %p360 = scmp.ne.s32.totalorder %s351, %s352
      %p361 = scmp.eq.s32.totalorder %s64, 0
      %p362 = por %p360, %p361
      %p363 = scmp.ne.s32.totalorder %s351, %s352
      %p364 = scmp.eq.s32.totalorder %s65, 1
      %p365 = por %p363, %p364
      %p367 = scmp.ne.s32.totalorder %s352, %s366
      %p368 = scmp.eq.s32.totalorder %s65, 0
      %p369 = por %p367, %p368
      %s371 = sadd.s32 %s370, 1
      %p374 = scmp.eq.s32.totalorder %s59, 1
      %p375 = scmp.ne.s32.totalorder %s370, %s372
      %p376 = scmp.eq.s32.totalorder %s59, 0
      %p377 = por %p375, %p376
      %p378 = scmp.ne.s32.totalorder %s370, %s372
      %p379 = scmp.eq.s32.totalorder %s64, 1
      %p380 = por %p378, %p379
      %p381 = scmp.ne.s32.totalorder %s372, %s373
      %p382 = scmp.eq.s32.totalorder %s64, 0
      %p383 = por %p381, %p382
      %p384 = scmp.ne.s32.totalorder %s372, %s373
      %p385 = scmp.eq.s32.totalorder %s65, 1
      %p386 = por %p384, %p385
      %p388 = scmp.ne.s32.totalorder %s373, %s387
      %p389 = scmp.eq.s32.totalorder %s65, 0
      %p390 = por %p388, %p389
      %s392 = sadd.s32 %s391, 1
      %p395 = scmp.eq.s32.totalorder %s59, 1
      %p396 = scmp.ne.s32.totalorder %s391, %s393
      %p397 = scmp.eq.s32.totalorder %s59, 0
      %p398 = por %p396, %p397
      %p399 = scmp.ne.s32.totalorder %s391, %s393
      %p400 = scmp.eq.s32.totalorder %s64, 1
      %p401 = por %p399, %p400
      %p402 = scmp.ne.s32.totalorder %s393, %s394
      %p403 = scmp.eq.s32.totalorder %s64, 0
      %p404 = por %p402, %p403
      %p405 = scmp.ne.s32.totalorder %s393, %s394
      %p406 = scmp.eq.s32.totalorder %s65, 1
      %p407 = por %p405, %p406
      %p409 = scmp.ne.s32.totalorder %s394, %s408
      %p410 = scmp.eq.s32.totalorder %s65, 0
      %p411 = por %p409, %p410
      %s413 = sadd.s32 %s412, 1
      %p416 = scmp.eq.s32.totalorder %s59, 1
      %p417 = scmp.ne.s32.totalorder %s412, %s414
      %p418 = scmp.eq.s32.totalorder %s59, 0
      %p419 = por %p417, %p418
      %p420 = scmp.ne.s32.totalorder %s412, %s414
      %p421 = scmp.eq.s32.totalorder %s64, 1
      %p422 = por %p420, %p421
      %p423 = scmp.ne.s32.totalorder %s414, %s415
      %p424 = scmp.eq.s32.totalorder %s64, 0
      %p425 = por %p423, %p424
      %p426 = scmp.ne.s32.totalorder %s414, %s415
      %p427 = scmp.eq.s32.totalorder %s65, 1
      %p428 = por %p426, %p427
      %p430 = scmp.ne.s32.totalorder %s415, %s429
      %p431 = scmp.eq.s32.totalorder %s65, 0
      %p432 = por %p430, %p431
      %s434 = sadd.s32 %s433, 1
      %p437 = scmp.eq.s32.totalorder %s59, 1
      %p438 = scmp.ne.s32.totalorder %s433, %s435
      %p439 = scmp.eq.s32.totalorder %s59, 0
      %p440 = por %p438, %p439
      %p441 = scmp.ne.s32.totalorder %s433, %s435
      %p442 = scmp.eq.s32.totalorder %s64, 1
      %p443 = por %p441, %p442
      %p444 = scmp.ne.s32.totalorder %s435, %s436
      %p445 = scmp.eq.s32.totalorder %s64, 0
      %p446 = por %p444, %p445
      %p447 = scmp.ne.s32.totalorder %s435, %s436
      %p448 = scmp.eq.s32.totalorder %s65, 1
      %p449 = por %p447, %p448
      %p451 = scmp.ne.s32.totalorder %s436, %s450
      %p452 = scmp.eq.s32.totalorder %s65, 0
      %p453 = por %p451, %p452
      %s455 = sadd.s32 %s454, 1
      %p458 = scmp.eq.s32.totalorder %s59, 1
      %p459 = scmp.ne.s32.totalorder %s454, %s456
      %p460 = scmp.eq.s32.totalorder %s59, 0
      %p461 = por %p459, %p460
      %p462 = scmp.ne.s32.totalorder %s454, %s456
      %p463 = scmp.eq.s32.totalorder %s64, 1
      %p464 = por %p462, %p463
      %p465 = scmp.ne.s32.totalorder %s456, %s457
      %p466 = scmp.eq.s32.totalorder %s64, 0
      %p467 = por %p465, %p466
      %p468 = scmp.ne.s32.totalorder %s456, %s457
      %p469 = scmp.eq.s32.totalorder %s65, 1
      %p470 = por %p468, %p469
      %p472 = scmp.ne.s32.totalorder %s457, %s471
      %p473 = scmp.eq.s32.totalorder %s65, 0
      %p474 = por %p472, %p473
      %s476 = sadd.s32 %s475, 1
      %p479 = scmp.eq.s32.totalorder %s59, 1
      %p480 = scmp.ne.s32.totalorder %s475, %s477
      %p481 = scmp.eq.s32.totalorder %s59, 0
      %p482 = por %p480, %p481
      %p483 = scmp.ne.s32.totalorder %s475, %s477
      %p484 = scmp.eq.s32.totalorder %s64, 1
      %p485 = por %p483, %p484
      %p486 = scmp.ne.s32.totalorder %s477, %s478
      %p487 = scmp.eq.s32.totalorder %s64, 0
      %p488 = por %p486, %p487
      %p489 = scmp.ne.s32.totalorder %s477, %s478
      %p490 = scmp.eq.s32.totalorder %s65, 1
      %p491 = por %p489, %p490
      %p493 = scmp.ne.s32.totalorder %s478, %s492
      %p494 = scmp.eq.s32.totalorder %s65, 0
      %p495 = por %p493, %p494
      %s497 = sadd.s32 %s496, 1
      %p500 = scmp.eq.s32.totalorder %s59, 1
      %p501 = scmp.ne.s32.totalorder %s496, %s498
      %p502 = scmp.eq.s32.totalorder %s59, 0
      %p503 = por %p501, %p502
      %p504 = scmp.ne.s32.totalorder %s496, %s498
      %p505 = scmp.eq.s32.totalorder %s64, 1
      %p506 = por %p504, %p505
      %p507 = scmp.ne.s32.totalorder %s498, %s499
      %p508 = scmp.eq.s32.totalorder %s64, 0
      %p509 = por %p507, %p508
      %p510 = scmp.ne.s32.totalorder %s498, %s499
      %p511 = scmp.eq.s32.totalorder %s65, 1
      %p512 = por %p510, %p511
      %p514 = scmp.ne.s32.totalorder %s499, %s513
      %p515 = scmp.eq.s32.totalorder %s65, 0
      %p516 = por %p514, %p515
      %s518 = sadd.s32 %s517, 1
      %p521 = scmp.eq.s32.totalorder %s59, 1
      %p522 = scmp.ne.s32.totalorder %s517, %s519
      %p523 = scmp.eq.s32.totalorder %s59, 0
      %p524 = por %p522, %p523
      %p525 = scmp.ne.s32.totalorder %s517, %s519
      %p526 = scmp.eq.s32.totalorder %s64, 1
      %p527 = por %p525, %p526
      %p528 = scmp.ne.s32.totalorder %s519, %s520
      %p529 = scmp.eq.s32.totalorder %s64, 0
      %p530 = por %p528, %p529
      %p531 = scmp.ne.s32.totalorder %s519, %s520
      %p532 = scmp.eq.s32.totalorder %s65, 1
      %p533 = por %p531, %p532
      %p535 = scmp.ne.s32.totalorder %s520, %s534
      %p536 = scmp.eq.s32.totalorder %s65, 0
      %p537 = por %p535, %p536
      %s539 = sadd.s32 %s538, 1
      %p542 = scmp.eq.s32.totalorder %s59, 1
      %p543 = scmp.ne.s32.totalorder %s538, %s540
      %p544 = scmp.eq.s32.totalorder %s59, 0
      %p545 = por %p543, %p544
      %p546 = scmp.ne.s32.totalorder %s538, %s540
      %p547 = scmp.eq.s32.totalorder %s64, 1
      %p548 = por %p546, %p547
      %p549 = scmp.ne.s32.totalorder %s540, %s541
      %p550 = scmp.eq.s32.totalorder %s64, 0
      %p551 = por %p549, %p550
      %p552 = scmp.ne.s32.totalorder %s540, %s541
      %p553 = scmp.eq.s32.totalorder %s65, 1
      %p554 = por %p552, %p553
      %p556 = scmp.ne.s32.totalorder %s541, %s555
      %p557 = scmp.eq.s32.totalorder %s65, 0
      %p558 = por %p556, %p557
      %s560 = sadd.s32 %s559, 1
      %p563 = scmp.eq.s32.totalorder %s59, 1
      %p564 = scmp.ne.s32.totalorder %s559, %s561
      %p565 = scmp.eq.s32.totalorder %s59, 0
      %p566 = por %p564, %p565
      %p567 = scmp.ne.s32.totalorder %s559, %s561
      %p568 = scmp.eq.s32.totalorder %s64, 1
      %p569 = por %p567, %p568
      %p570 = scmp.ne.s32.totalorder %s561, %s562
      %p571 = scmp.eq.s32.totalorder %s64, 0
      %p572 = por %p570, %p571
      %p573 = scmp.ne.s32.totalorder %s561, %s562
      %p574 = scmp.eq.s32.totalorder %s65, 1
      %p575 = por %p573, %p574
      %p577 = scmp.ne.s32.totalorder %s562, %s576
      %p578 = scmp.eq.s32.totalorder %s65, 0
      %p579 = por %p577, %p578
      %s581 = sadd.s32 %s580, 1
      %p584 = scmp.eq.s32.totalorder %s59, 1
      %p585 = scmp.ne.s32.totalorder %s580, %s582
      %p586 = scmp.eq.s32.totalorder %s59, 0
      %p587 = por %p585, %p586
      %p588 = scmp.ne.s32.totalorder %s580, %s582
      %p589 = scmp.eq.s32.totalorder %s64, 1
      %p590 = por %p588, %p589
      %p591 = scmp.ne.s32.totalorder %s582, %s583
      %p592 = scmp.eq.s32.totalorder %s64, 0
      %p593 = por %p591, %p592
      %p594 = scmp.ne.s32.totalorder %s582, %s583
      %p595 = scmp.eq.s32.totalorder %s65, 1
      %p596 = por %p594, %p595
      %p598 = scmp.ne.s32.totalorder %s583, %s597
      %p599 = scmp.eq.s32.totalorder %s65, 0
      %p600 = por %p598, %p599
      %s601 = ssub.s32 %s59, %s66
      %p602 = scmp.eq.s32.totalorder %s601, 0
      %s604 = sadd.s32 %s603, 1
      %s605 = scalar_select %p602, %s603, %s604
      %p608 = pneg %p602
      %p609 = scmp.eq.s32.totalorder %s59, 1
      %p610 = por %p608, %p609
      %p611 = scmp.ne.s32.totalorder %s603, %s606
      %p612 = scmp.eq.s32.totalorder %s59, 0
      %p613 = por %p611, %p612
      %p614 = scmp.ne.s32.totalorder %s603, %s606
      %p615 = scmp.eq.s32.totalorder %s64, 1
      %p616 = por %p614, %p615
      %p617 = scmp.ne.s32.totalorder %s606, %s607
      %p618 = scmp.eq.s32.totalorder %s64, 0
      %p619 = por %p617, %p618
      %p620 = scmp.ne.s32.totalorder %s606, %s607
      %p621 = scmp.eq.s32.totalorder %s65, 1
      %p622 = por %p620, %p621
      %p624 = scmp.ne.s32.totalorder %s607, %s623
      %p625 = scmp.eq.s32.totalorder %s65, 0
      %p626 = por %p624, %p625
      %s627 = ssub.s32 %s59, %s66
      %p628 = scmp.eq.s32.totalorder %s627, 0
      %s630 = sadd.s32 %s629, 1
      %s631 = scalar_select %p628, %s629, %s630
      %p634 = pneg %p628
      %p635 = scmp.eq.s32.totalorder %s59, 1
      %p636 = por %p634, %p635
      %p637 = scmp.ne.s32.totalorder %s629, %s632
      %p638 = scmp.eq.s32.totalorder %s59, 0
      %p639 = por %p637, %p638
      %p640 = scmp.ne.s32.totalorder %s629, %s632
      %p641 = scmp.eq.s32.totalorder %s64, 1
      %p642 = por %p640, %p641
      %p643 = scmp.ne.s32.totalorder %s632, %s633
      %p644 = scmp.eq.s32.totalorder %s64, 0
      %p645 = por %p643, %p644
      %p646 = scmp.ne.s32.totalorder %s632, %s633
      %p647 = scmp.eq.s32.totalorder %s65, 1
      %p648 = por %p646, %p647
      %p650 = scmp.ne.s32.totalorder %s633, %s649
      %p651 = scmp.eq.s32.totalorder %s65, 0
      %p652 = por %p650, %p651
      %p653 = scmp.le.s32.totalorder 1, %s59
      %p654 = scmp.lt.s32.totalorder %s59, 3
      %p655 = pnand %p653, %p654
      %p656 = pneg %p655
      // Predicated region
      $region9: #{vfsddpm_forward.1} parent=5 // pred_check
        _
      $region10: #{vfsddpm_forward.1} parent=5 // pred_check_branch
        %658 = sbr.rel (%p655) target = $region12
      $region11: #{vfsddpm_forward.1} parent=5 // pred_region
        %s659 = ssub.s32 %s59, 1
        // Predicated region
        $region13: #{vfsddpm_forward.1} parent=11 // pred_check
          %p660 = pneg %p236
        $region14: #{vfsddpm_forward.1} parent=11 // pred_check_branch
          %662 = sbr.rel (%p660) target = $region16
        $region15: #{vfsddpm_forward.1} parent=11 // pred_region
          %s664 = ssub.s32 6144, 6144
          %665 = vsyncadd [#allocation12], %s664
          %s666 = sshll.u32 [#allocation13], 4
          %s667 = int_to_ptr.vmem [resolvable:$true] %s666
          %672 = dma.hbm_to_vmem [thread:$0]  %s6, 6144, %s667, [#allocation12], 64, 64, 4
        $region16: #{vfsddpm_forward.1} parent=11 // pred_fallthru
          _
        // Predicated region
        $region17: #{vfsddpm_forward.1} parent=11 // pred_check
          %p673 = pneg %p257
        $region18: #{vfsddpm_forward.1} parent=11 // pred_check_branch
          %675 = sbr.rel (%p673) target = $region20
        $region19: #{vfsddpm_forward.1} parent=11 // pred_region
          %s677 = ssub.s32 16, 16
          %678 = vsyncadd [#allocation15], %s677
          %s680 = sshll.u32 [#allocation14], 4
          %s681 = int_to_ptr.vmem [resolvable:$true] %s680
          %683 = dma.hbm_to_vmem [thread:$0]  %s7, 16, %s681, [#allocation15]
        $region20: #{vfsddpm_forward.1} parent=11 // pred_fallthru
          _
        // Predicated region
        $region21: #{vfsddpm_forward.1} parent=11 // pred_check
          %p684 = pneg %p278
        $region22: #{vfsddpm_forward.1} parent=11 // pred_check_branch
          %686 = sbr.rel (%p684) target = $region24
        $region23: #{vfsddpm_forward.1} parent=11 // pred_region
          %s688 = ssub.s32 1024, 1024
          %689 = vsyncadd [#allocation15], %s688
          %s690 = sshll.u32 [#allocation16], 4
          %s691 = int_to_ptr.vmem [resolvable:$true] %s690
          %696 = dma.hbm_to_vmem [thread:$0]  %s8, 1024, %s691, [#allocation15], 64, 64, 4
        $region24: #{vfsddpm_forward.1} parent=11 // pred_fallthru
          _
        // Predicated region
        $region25: #{vfsddpm_forward.1} parent=11 // pred_check
          %p697 = pneg %p299
        $region26: #{vfsddpm_forward.1} parent=11 // pred_check_branch
          %699 = sbr.rel (%p697) target = $region28
        $region27: #{vfsddpm_forward.1} parent=11 // pred_region
          %s701 = ssub.s32 16, 16
          %702 = vsyncadd [#allocation18], %s701
          %s704 = sshll.u32 [#allocation17], 4
          %s705 = int_to_ptr.vmem [resolvable:$true] %s704
          %707 = dma.hbm_to_vmem [thread:$0]  %s9, 16, %s705, [#allocation18]
        $region28: #{vfsddpm_forward.1} parent=11 // pred_fallthru
          _
        // Predicated region
        $region29: #{vfsddpm_forward.1} parent=11 // pred_check
          %p708 = pneg %p320
        $region30: #{vfsddpm_forward.1} parent=11 // pred_check_branch
          %710 = sbr.rel (%p708) target = $region32
        $region31: #{vfsddpm_forward.1} parent=11 // pred_region
          %s712 = ssub.s32 1024, 1024
          %713 = vsyncadd [#allocation18], %s712
          %s714 = sshll.u32 [#allocation19], 4
          %s715 = int_to_ptr.vmem [resolvable:$true] %s714
          %720 = dma.hbm_to_vmem [thread:$0]  %s10, 1024, %s715, [#allocation18], 64, 64, 4
        $region32: #{vfsddpm_forward.1} parent=11 // pred_fallthru
          _
        // Predicated region
        $region33: #{vfsddpm_forward.1} parent=11 // pred_check
          %p721 = pneg %p341
        $region34: #{vfsddpm_forward.1} parent=11 // pred_check_branch
          %723 = sbr.rel (%p721) target = $region36
        $region35: #{vfsddpm_forward.1} parent=11 // pred_region
          %s725 = ssub.s32 16, 16
          %726 = vsyncadd [#allocation21], %s725
          %s728 = sshll.u32 [#allocation20], 4
          %s729 = int_to_ptr.vmem [resolvable:$true] %s728
          %731 = dma.hbm_to_vmem [thread:$0]  %s11, 16, %s729, [#allocation21]
        $region36: #{vfsddpm_forward.1} parent=11 // pred_fallthru
          _
        // Predicated region
        $region37: #{vfsddpm_forward.1} parent=11 // pred_check
          %p732 = pneg %p362
        $region38: #{vfsddpm_forward.1} parent=11 // pred_check_branch
          %734 = sbr.rel (%p732) target = $region40
        $region39: #{vfsddpm_forward.1} parent=11 // pred_region
          %s736 = ssub.s32 1024, 1024
          %737 = vsyncadd [#allocation21], %s736
          %s738 = sshll.u32 [#allocation22], 4
          %s739 = int_to_ptr.vmem [resolvable:$true] %s738
          %744 = dma.hbm_to_vmem [thread:$0]  %s12, 1024, %s739, [#allocation21], 64, 64, 4
        $region40: #{vfsddpm_forward.1} parent=11 // pred_fallthru
          _
        // Predicated region
        $region41: #{vfsddpm_forward.1} parent=11 // pred_check
          %p745 = pneg %p383
        $region42: #{vfsddpm_forward.1} parent=11 // pred_check_branch
          %747 = sbr.rel (%p745) target = $region44
        $region43: #{vfsddpm_forward.1} parent=11 // pred_region
          %s749 = ssub.s32 16, 16
          %750 = vsyncadd [#allocation24], %s749
          %s752 = sshll.u32 [#allocation23], 4
          %s753 = int_to_ptr.vmem [resolvable:$true] %s752
          %755 = dma.hbm_to_vmem [thread:$0]  %s13, 16, %s753, [#allocation24]
        $region44: #{vfsddpm_forward.1} parent=11 // pred_fallthru
          _
        // Predicated region
        $region45: #{vfsddpm_forward.1} parent=11 // pred_check
          %p756 = pneg %p404
        $region46: #{vfsddpm_forward.1} parent=11 // pred_check_branch
          %758 = sbr.rel (%p756) target = $region48
        $region47: #{vfsddpm_forward.1} parent=11 // pred_region
          %s760 = ssub.s32 1024, 1024
          %761 = vsyncadd [#allocation24], %s760
          %s762 = sshll.u32 [#allocation25], 4
          %s763 = int_to_ptr.vmem [resolvable:$true] %s762
          %768 = dma.hbm_to_vmem [thread:$0]  %s14, 1024, %s763, [#allocation24], 64, 64, 4
        $region48: #{vfsddpm_forward.1} parent=11 // pred_fallthru
          _
        // Predicated region
        $region49: #{vfsddpm_forward.1} parent=11 // pred_check
          %p769 = pneg %p425
        $region50: #{vfsddpm_forward.1} parent=11 // pred_check_branch
          %771 = sbr.rel (%p769) target = $region52
        $region51: #{vfsddpm_forward.1} parent=11 // pred_region
          %s773 = ssub.s32 16, 16
          %774 = vsyncadd [#allocation27], %s773
          %s776 = sshll.u32 [#allocation26], 4
          %s777 = int_to_ptr.vmem [resolvable:$true] %s776
          %779 = dma.hbm_to_vmem [thread:$0]  %s15, 16, %s777, [#allocation27]
        $region52: #{vfsddpm_forward.1} parent=11 // pred_fallthru
          _
        // Predicated region
        $region53: #{vfsddpm_forward.1} parent=11 // pred_check
          %p780 = pneg %p446
        $region54: #{vfsddpm_forward.1} parent=11 // pred_check_branch
          %782 = sbr.rel (%p780) target = $region56
        $region55: #{vfsddpm_forward.1} parent=11 // pred_region
          %s784 = ssub.s32 1024, 1024
          %785 = vsyncadd [#allocation27], %s784
          %s786 = sshll.u32 [#allocation28], 4
          %s787 = int_to_ptr.vmem [resolvable:$true] %s786
          %792 = dma.hbm_to_vmem [thread:$0]  %s16, 1024, %s787, [#allocation27], 64, 64, 4
        $region56: #{vfsddpm_forward.1} parent=11 // pred_fallthru
          _
        // Predicated region
        $region57: #{vfsddpm_forward.1} parent=11 // pred_check
          %p793 = pneg %p467
        $region58: #{vfsddpm_forward.1} parent=11 // pred_check_branch
          %795 = sbr.rel (%p793) target = $region60
        $region59: #{vfsddpm_forward.1} parent=11 // pred_region
          %s797 = ssub.s32 16, 16
          %798 = vsyncadd [#allocation30], %s797
          %s800 = sshll.u32 [#allocation29], 4
          %s801 = int_to_ptr.vmem [resolvable:$true] %s800
          %803 = dma.hbm_to_vmem [thread:$0]  %s17, 16, %s801, [#allocation30]
        $region60: #{vfsddpm_forward.1} parent=11 // pred_fallthru
          _
        // Predicated region
        $region61: #{vfsddpm_forward.1} parent=11 // pred_check
          %p804 = pneg %p488
        $region62: #{vfsddpm_forward.1} parent=11 // pred_check_branch
          %806 = sbr.rel (%p804) target = $region64
        $region63: #{vfsddpm_forward.1} parent=11 // pred_region
          %s808 = ssub.s32 6144, 6144
          %809 = vsyncadd [#allocation30], %s808
          %s810 = sshll.u32 [#allocation31], 4
          %s811 = int_to_ptr.vmem [resolvable:$true] %s810
          %816 = dma.hbm_to_vmem [thread:$0]  %s18, 6144, %s811, [#allocation30], 64, 64, 4
        $region64: #{vfsddpm_forward.1} parent=11 // pred_fallthru
          _
        // Predicated region
        $region65: #{vfsddpm_forward.1} parent=11 // pred_check
          %p817 = pneg %p509
        $region66: #{vfsddpm_forward.1} parent=11 // pred_check_branch
          %819 = sbr.rel (%p817) target = $region68
        $region67: #{vfsddpm_forward.1} parent=11 // pred_region
          %s821 = ssub.s32 1024, 1024
          %822 = vsyncadd [#allocation33], %s821
          %s823 = sshll.u32 [#allocation32], 4
          %s824 = int_to_ptr.vmem [resolvable:$true] %s823
          %829 = dma.hbm_to_vmem [thread:$0]  %s19, 1024, %s824, [#allocation33], 64, 64, 4
        $region68: #{vfsddpm_forward.1} parent=11 // pred_fallthru
          _
        // Predicated region
        $region69: #{vfsddpm_forward.1} parent=11 // pred_check
          %p830 = pneg %p530
        $region70: #{vfsddpm_forward.1} parent=11 // pred_check_branch
          %832 = sbr.rel (%p830) target = $region72
        $region71: #{vfsddpm_forward.1} parent=11 // pred_region
          %s834 = ssub.s32 1024, 1024
          %835 = vsyncadd [#allocation33], %s834
          %s836 = sshll.u32 [#allocation34], 4
          %s837 = int_to_ptr.vmem [resolvable:$true] %s836
          %842 = dma.hbm_to_vmem [thread:$0]  %s20, 1024, %s837, [#allocation33], 64, 64, 4
        $region72: #{vfsddpm_forward.1} parent=11 // pred_fallthru
          _
        // Predicated region
        $region73: #{vfsddpm_forward.1} parent=11 // pred_check
          %p843 = pneg %p551
        $region74: #{vfsddpm_forward.1} parent=11 // pred_check_branch
          %845 = sbr.rel (%p843) target = $region76
        $region75: #{vfsddpm_forward.1} parent=11 // pred_region
          %s847 = ssub.s32 16, 16
          %848 = vsyncadd [#allocation36], %s847
          %s850 = sshll.u32 [#allocation35], 4
          %s851 = int_to_ptr.vmem [resolvable:$true] %s850
          %853 = dma.hbm_to_vmem [thread:$0]  %s21, 16, %s851, [#allocation36]
        $region76: #{vfsddpm_forward.1} parent=11 // pred_fallthru
          _
        // Predicated region
        $region77: #{vfsddpm_forward.1} parent=11 // pred_check
          %p854 = pneg %p572
        $region78: #{vfsddpm_forward.1} parent=11 // pred_check_branch
          %856 = sbr.rel (%p854) target = $region80
        $region79: #{vfsddpm_forward.1} parent=11 // pred_region
          %s858 = ssub.s32 6144, 6144
          %859 = vsyncadd [#allocation36], %s858
          %s860 = sshll.u32 [#allocation37], 4
          %s861 = int_to_ptr.vmem [resolvable:$true] %s860
          %866 = dma.hbm_to_vmem [thread:$0]  %s22, 6144, %s861, [#allocation36], 384, 384, 24
        $region80: #{vfsddpm_forward.1} parent=11 // pred_fallthru
          _
        // Predicated region
        $region81: #{vfsddpm_forward.1} parent=11 // pred_check
          %p867 = pneg %p593
        $region82: #{vfsddpm_forward.1} parent=11 // pred_check_branch
          %869 = sbr.rel (%p867) target = $region84
        $region83: #{vfsddpm_forward.1} parent=11 // pred_region
          %s871 = ssub.s32 96, 96
          %872 = vsyncadd [#allocation39], %s871
          %s874 = sshll.u32 [#allocation38], 4
          %s875 = int_to_ptr.vmem [resolvable:$true] %s874
          %877 = dma.hbm_to_vmem [thread:$0]  %s23, 96, %s875, [#allocation39]
        $region84: #{vfsddpm_forward.1} parent=11 // pred_fallthru
          _
      $region12: #{vfsddpm_forward.1} parent=5 // pred_fallthru
        _
      %p878 = scmp.lt.s32.totalorder %s59, 2
      // Predicated region
      $region85: #{vfsddpm_forward.1} parent=5 // pred_check
        %p879 = pneg %p878
      $region86: #{vfsddpm_forward.1} parent=5 // pred_check_branch
        %881 = sbr.rel (%p879) target = $region88
      $region87: #{vfsddpm_forward.1} parent=5 // pred_region
        // Predicated region
        $region89: #{vfsddpm_forward.1} parent=87 // pred_check
          %p882 = pneg %p79
        $region90: #{vfsddpm_forward.1} parent=87 // pred_check_branch
          %884 = sbr.rel (%p882) target = $region92
        $region91: #{vfsddpm_forward.1} parent=87 // pred_region
          %s885 = sand.u32 %s69, 1
          %s886 = scalar_lea.sflag [#allocation3], %s885
          %s887 = sand.u32 %s69, 1
          %s888 = smul.addr %s887, 24
          %s889 = scalar_lea.vmem [#allocation2], %s888
          %s891 = ssub.s32 384, 384
          %892 = vsyncadd %s886, %s891
          %s893 = smul.addr %s59, 6
          %s894 = smul.addr %s893, 64
          %s895 = scalar_lea.hbm %s0, %s894
          %s897 = sshll.u32 %s889, 4
          %s898 = int_to_ptr.vmem [resolvable:$true] %s897
          %900 = dma.hbm_to_vmem [thread:$0]  %s895, 384, %s898, %s886
        $region92: #{vfsddpm_forward.1} parent=87 // pred_fallthru
          _
        // Predicated region
        $region93: #{vfsddpm_forward.1} parent=87 // pred_check
          %p901 = pneg %p105
        $region94: #{vfsddpm_forward.1} parent=87 // pred_check_branch
          %903 = sbr.rel (%p901) target = $region96
        $region95: #{vfsddpm_forward.1} parent=87 // pred_region
          %s904 = sand.u32 %s59, 1
          %s905 = scalar_lea.sflag [#allocation6], %s904
          %s906 = sand.u32 %s95, 1
          %s907 = smul.addr %s906, 4
          %s908 = scalar_lea.vmem [#allocation5], %s907
          %s910 = ssub.s32 64, 64
          %911 = vsyncadd %s905, %s910
          %s912 = smul.addr %s59, 64
          %s913 = scalar_lea.hbm %s1, %s912
          %s915 = sshll.u32 %s908, 4
          %s916 = int_to_ptr.vmem [resolvable:$true] %s915
          %918 = dma.hbm_to_vmem [thread:$0]  %s913, 64, %s916, %s905
        $region96: #{vfsddpm_forward.1} parent=87 // pred_fallthru
          _
        // Predicated region
        $region97: #{vfsddpm_forward.1} parent=87 // pred_check
          %p919 = pneg %p131
        $region98: #{vfsddpm_forward.1} parent=87 // pred_check_branch
          %921 = sbr.rel (%p919) target = $region100
        $region99: #{vfsddpm_forward.1} parent=87 // pred_region
          %s922 = sand.u32 %s59, 1
          %s923 = scalar_lea.sflag [#allocation6], %s922
          %s924 = sand.u32 %s121, 1
          %s925 = smul.addr %s924, 24
          %s926 = scalar_lea.vmem [#allocation7], %s925
          %s928 = ssub.s32 384, 384
          %929 = vsyncadd %s923, %s928
          %s930 = smul.addr %s59, 6
          %s931 = smul.addr %s930, 64
          %s932 = scalar_lea.hbm %s2, %s931
          %s934 = sshll.u32 %s926, 4
          %s935 = int_to_ptr.vmem [resolvable:$true] %s934
          %937 = dma.hbm_to_vmem [thread:$0]  %s932, 384, %s935, %s923
        $region100: #{vfsddpm_forward.1} parent=87 // pred_fallthru
          _
        // Predicated region
        $region101: #{vfsddpm_forward.1} parent=87 // pred_check
          %p938 = pneg %p157
        $region102: #{vfsddpm_forward.1} parent=87 // pred_check_branch
          %940 = sbr.rel (%p938) target = $region104
        $region103: #{vfsddpm_forward.1} parent=87 // pred_region
          %s941 = sand.u32 %s59, 1
          %s942 = scalar_lea.sflag [#allocation9], %s941
          %s943 = sand.u32 %s147, 1
          %s944 = smul.addr %s943, 4
          %s945 = scalar_lea.vmem [#allocation8], %s944
          %s947 = ssub.s32 64, 64
          %948 = vsyncadd %s942, %s947
          %s949 = smul.addr %s59, 64
          %s950 = scalar_lea.hbm %s3, %s949
          %s952 = sshll.u32 %s945, 4
          %s953 = int_to_ptr.vmem [resolvable:$true] %s952
          %955 = dma.hbm_to_vmem [thread:$0]  %s950, 64, %s953, %s942
        $region104: #{vfsddpm_forward.1} parent=87 // pred_fallthru
          _
        // Predicated region
        $region105: #{vfsddpm_forward.1} parent=87 // pred_check
          %p956 = pneg %p183
        $region106: #{vfsddpm_forward.1} parent=87 // pred_check_branch
          %958 = sbr.rel (%p956) target = $region108
        $region107: #{vfsddpm_forward.1} parent=87 // pred_region
          %s959 = sand.u32 %s59, 1
          %s960 = scalar_lea.sflag [#allocation9], %s959
          %s961 = sand.u32 %s173, 1
          %s962 = smul.addr %s961, 4
          %s963 = scalar_lea.vmem [#allocation10], %s962
          %s965 = ssub.s32 64, 64
          %966 = vsyncadd %s960, %s965
          %s967 = smul.addr %s59, 64
          %s968 = scalar_lea.hbm %s4, %s967
          %s970 = sshll.u32 %s963, 4
          %s971 = int_to_ptr.vmem [resolvable:$true] %s970
          %973 = dma.hbm_to_vmem [thread:$0]  %s968, 64, %s971, %s960
        $region108: #{vfsddpm_forward.1} parent=87 // pred_fallthru
          _
        // Predicated region
        $region109: #{vfsddpm_forward.1} parent=87 // pred_check
          %p974 = pneg %p209
        $region110: #{vfsddpm_forward.1} parent=87 // pred_check_branch
          %976 = sbr.rel (%p974) target = $region112
        $region111: #{vfsddpm_forward.1} parent=87 // pred_region
          %s977 = sand.u32 %s59, 1
          %s978 = scalar_lea.sflag [#allocation12], %s977
          %s979 = sand.u32 %s199, 1
          %s980 = smul.addr %s979, 4
          %s981 = scalar_lea.vmem [#allocation11], %s980
          %s983 = ssub.s32 64, 64
          %984 = vsyncadd %s978, %s983
          %s985 = smul.addr %s59, 64
          %s986 = scalar_lea.hbm %s5, %s985
          %s988 = sshll.u32 %s981, 4
          %s989 = int_to_ptr.vmem [resolvable:$true] %s988
          %991 = dma.hbm_to_vmem [thread:$0]  %s986, 64, %s989, %s978
        $region112: #{vfsddpm_forward.1} parent=87 // pred_fallthru
          _
      $region88: #{vfsddpm_forward.1} parent=5 // pred_fallthru
        _
      %p992 = scmp.le.s32.totalorder 1, %s59
      %p993 = scmp.lt.s32.totalorder %s59, 3
      %p994 = pnand %p992, %p993
      %p995 = pneg %p994
      // Predicated region
      $region113: #{vfsddpm_forward.1} parent=5 // pred_check
        _
      $region114: #{vfsddpm_forward.1} parent=5 // pred_check_branch
        %997 = sbr.rel (%p994) target = $region116
      $region115: #{vfsddpm_forward.1} parent=5 // pred_region
        %s998 = ssub.s32 %s59, 1
        %s999 = sand.u32 %s72, 1
        %s1000 = scalar_lea.sflag [#allocation3], %s999
        %s1001 = sand.u32 %s72, 1
        %s1002 = smul.addr %s1001, 24
        %s1003 = scalar_lea.vmem [#allocation2], %s1002
        // Predicated region
        $region117: #{vfsddpm_forward.1} parent=115 // pred_check
          %p1004 = pneg %p85
        $region118: #{vfsddpm_forward.1} parent=115 // pred_check_branch
          %1006 = sbr.rel (%p1004) target = $region120
        $region119: #{vfsddpm_forward.1} parent=115 // pred_region
          %1007 = dma.done %s1000, 384
        $region120: #{vfsddpm_forward.1} parent=115 // pred_fallthru
          _
        %s1008 = sand.u32 %s64, 1
        %s1009 = scalar_lea.sflag [#allocation6], %s1008
        %s1010 = sand.u32 %s98, 1
        %s1011 = smul.addr %s1010, 4
        %s1012 = scalar_lea.vmem [#allocation5], %s1011
        // Predicated region
        $region121: #{vfsddpm_forward.1} parent=115 // pred_check
          %p1013 = pneg %p111
        $region122: #{vfsddpm_forward.1} parent=115 // pred_check_branch
          %1015 = sbr.rel (%p1013) target = $region124
        $region123: #{vfsddpm_forward.1} parent=115 // pred_region
          %1016 = dma.done %s1009, 64
        $region124: #{vfsddpm_forward.1} parent=115 // pred_fallthru
          _
        %s1017 = sand.u32 %s64, 1
        %s1018 = scalar_lea.sflag [#allocation6], %s1017
        %s1019 = sand.u32 %s124, 1
        %s1020 = smul.addr %s1019, 24
        %s1021 = scalar_lea.vmem [#allocation7], %s1020
        // Predicated region
        $region125: #{vfsddpm_forward.1} parent=115 // pred_check
          %p1022 = pneg %p137
        $region126: #{vfsddpm_forward.1} parent=115 // pred_check_branch
          %1024 = sbr.rel (%p1022) target = $region128
        $region127: #{vfsddpm_forward.1} parent=115 // pred_region
          %1025 = dma.done %s1018, 384
        $region128: #{vfsddpm_forward.1} parent=115 // pred_fallthru
          _
        %s1026 = sand.u32 %s64, 1
        %s1027 = scalar_lea.sflag [#allocation9], %s1026
        %s1028 = sand.u32 %s150, 1
        %s1029 = smul.addr %s1028, 4
        %s1030 = scalar_lea.vmem [#allocation8], %s1029
        // Predicated region
        $region129: #{vfsddpm_forward.1} parent=115 // pred_check
          %p1031 = pneg %p163
        $region130: #{vfsddpm_forward.1} parent=115 // pred_check_branch
          %1033 = sbr.rel (%p1031) target = $region132
        $region131: #{vfsddpm_forward.1} parent=115 // pred_region
          %1034 = dma.done %s1027, 64
        $region132: #{vfsddpm_forward.1} parent=115 // pred_fallthru
          _
        %s1035 = sand.u32 %s64, 1
        %s1036 = scalar_lea.sflag [#allocation9], %s1035
        %s1037 = sand.u32 %s176, 1
        %s1038 = smul.addr %s1037, 4
        %s1039 = scalar_lea.vmem [#allocation10], %s1038
        // Predicated region
        $region133: #{vfsddpm_forward.1} parent=115 // pred_check
          %p1040 = pneg %p189
        $region134: #{vfsddpm_forward.1} parent=115 // pred_check_branch
          %1042 = sbr.rel (%p1040) target = $region136
        $region135: #{vfsddpm_forward.1} parent=115 // pred_region
          %1043 = dma.done %s1036, 64
        $region136: #{vfsddpm_forward.1} parent=115 // pred_fallthru
          _
        %s1044 = sand.u32 %s64, 1
        %s1045 = scalar_lea.sflag [#allocation12], %s1044
        %s1046 = sand.u32 %s202, 1
        %s1047 = smul.addr %s1046, 4
        %s1048 = scalar_lea.vmem [#allocation11], %s1047
        // Predicated region
        $region137: #{vfsddpm_forward.1} parent=115 // pred_check
          %p1049 = pneg %p215
        $region138: #{vfsddpm_forward.1} parent=115 // pred_check_branch
          %1051 = sbr.rel (%p1049) target = $region140
        $region139: #{vfsddpm_forward.1} parent=115 // pred_region
          %1052 = dma.done %s1045, 64
        $region140: #{vfsddpm_forward.1} parent=115 // pred_fallthru
          _
        // Predicated region
        $region141: #{vfsddpm_forward.1} parent=115 // pred_check
          %p1053 = pneg %p236
        $region142: #{vfsddpm_forward.1} parent=115 // pred_check_branch
          %1055 = sbr.rel (%p1053) target = $region144
        $region143: #{vfsddpm_forward.1} parent=115 // pred_region
          %1056 = dma.done [#allocation12], 6144
        $region144: #{vfsddpm_forward.1} parent=115 // pred_fallthru
          _
        // Predicated region
        $region145: #{vfsddpm_forward.1} parent=115 // pred_check
          %p1057 = pneg %p257
        $region146: #{vfsddpm_forward.1} parent=115 // pred_check_branch
          %1059 = sbr.rel (%p1057) target = $region148
        $region147: #{vfsddpm_forward.1} parent=115 // pred_region
          %1060 = dma.done [#allocation15], 16
        $region148: #{vfsddpm_forward.1} parent=115 // pred_fallthru
          _
        // Predicated region
        $region149: #{vfsddpm_forward.1} parent=115 // pred_check
          %p1061 = pneg %p278
        $region150: #{vfsddpm_forward.1} parent=115 // pred_check_branch
          %1063 = sbr.rel (%p1061) target = $region152
        $region151: #{vfsddpm_forward.1} parent=115 // pred_region
          %1064 = dma.done [#allocation15], 1024
        $region152: #{vfsddpm_forward.1} parent=115 // pred_fallthru
          _
        // Predicated region
        $region153: #{vfsddpm_forward.1} parent=115 // pred_check
          %p1065 = pneg %p299
        $region154: #{vfsddpm_forward.1} parent=115 // pred_check_branch
          %1067 = sbr.rel (%p1065) target = $region156
        $region155: #{vfsddpm_forward.1} parent=115 // pred_region
          %1068 = dma.done [#allocation18], 16
        $region156: #{vfsddpm_forward.1} parent=115 // pred_fallthru
          _
        // Predicated region
        $region157: #{vfsddpm_forward.1} parent=115 // pred_check
          %p1069 = pneg %p320
        $region158: #{vfsddpm_forward.1} parent=115 // pred_check_branch
          %1071 = sbr.rel (%p1069) target = $region160
        $region159: #{vfsddpm_forward.1} parent=115 // pred_region
          %1072 = dma.done [#allocation18], 1024
        $region160: #{vfsddpm_forward.1} parent=115 // pred_fallthru
          _
        // Predicated region
        $region161: #{vfsddpm_forward.1} parent=115 // pred_check
          %p1073 = pneg %p341
        $region162: #{vfsddpm_forward.1} parent=115 // pred_check_branch
          %1075 = sbr.rel (%p1073) target = $region164
        $region163: #{vfsddpm_forward.1} parent=115 // pred_region
          %1076 = dma.done [#allocation21], 16
        $region164: #{vfsddpm_forward.1} parent=115 // pred_fallthru
          _
        // Predicated region
        $region165: #{vfsddpm_forward.1} parent=115 // pred_check
          %p1077 = pneg %p362
        $region166: #{vfsddpm_forward.1} parent=115 // pred_check_branch
          %1079 = sbr.rel (%p1077) target = $region168
        $region167: #{vfsddpm_forward.1} parent=115 // pred_region
          %1080 = dma.done [#allocation21], 1024
        $region168: #{vfsddpm_forward.1} parent=115 // pred_fallthru
          _
        // Predicated region
        $region169: #{vfsddpm_forward.1} parent=115 // pred_check
          %p1081 = pneg %p383
        $region170: #{vfsddpm_forward.1} parent=115 // pred_check_branch
          %1083 = sbr.rel (%p1081) target = $region172
        $region171: #{vfsddpm_forward.1} parent=115 // pred_region
          %1084 = dma.done [#allocation24], 16
        $region172: #{vfsddpm_forward.1} parent=115 // pred_fallthru
          _
        // Predicated region
        $region173: #{vfsddpm_forward.1} parent=115 // pred_check
          %p1085 = pneg %p404
        $region174: #{vfsddpm_forward.1} parent=115 // pred_check_branch
          %1087 = sbr.rel (%p1085) target = $region176
        $region175: #{vfsddpm_forward.1} parent=115 // pred_region
          %1088 = dma.done [#allocation24], 1024
        $region176: #{vfsddpm_forward.1} parent=115 // pred_fallthru
          _
        // Predicated region
        $region177: #{vfsddpm_forward.1} parent=115 // pred_check
          %p1089 = pneg %p425
        $region178: #{vfsddpm_forward.1} parent=115 // pred_check_branch
          %1091 = sbr.rel (%p1089) target = $region180
        $region179: #{vfsddpm_forward.1} parent=115 // pred_region
          %1092 = dma.done [#allocation27], 16
        $region180: #{vfsddpm_forward.1} parent=115 // pred_fallthru
          _
        // Predicated region
        $region181: #{vfsddpm_forward.1} parent=115 // pred_check
          %p1093 = pneg %p446
        $region182: #{vfsddpm_forward.1} parent=115 // pred_check_branch
          %1095 = sbr.rel (%p1093) target = $region184
        $region183: #{vfsddpm_forward.1} parent=115 // pred_region
          %1096 = dma.done [#allocation27], 1024
        $region184: #{vfsddpm_forward.1} parent=115 // pred_fallthru
          _
        // Predicated region
        $region185: #{vfsddpm_forward.1} parent=115 // pred_check
          %p1097 = pneg %p467
        $region186: #{vfsddpm_forward.1} parent=115 // pred_check_branch
          %1099 = sbr.rel (%p1097) target = $region188
        $region187: #{vfsddpm_forward.1} parent=115 // pred_region
          %1100 = dma.done [#allocation30], 16
        $region188: #{vfsddpm_forward.1} parent=115 // pred_fallthru
          _
        // Predicated region
        $region189: #{vfsddpm_forward.1} parent=115 // pred_check
          %p1101 = pneg %p488
        $region190: #{vfsddpm_forward.1} parent=115 // pred_check_branch
          %1103 = sbr.rel (%p1101) target = $region192
        $region191: #{vfsddpm_forward.1} parent=115 // pred_region
          %1104 = dma.done [#allocation30], 6144
        $region192: #{vfsddpm_forward.1} parent=115 // pred_fallthru
          _
        // Predicated region
        $region193: #{vfsddpm_forward.1} parent=115 // pred_check
          %p1105 = pneg %p509
        $region194: #{vfsddpm_forward.1} parent=115 // pred_check_branch
          %1107 = sbr.rel (%p1105) target = $region196
        $region195: #{vfsddpm_forward.1} parent=115 // pred_region
          %1108 = dma.done [#allocation33], 1024
        $region196: #{vfsddpm_forward.1} parent=115 // pred_fallthru
          _
        // Predicated region
        $region197: #{vfsddpm_forward.1} parent=115 // pred_check
          %p1109 = pneg %p530
        $region198: #{vfsddpm_forward.1} parent=115 // pred_check_branch
          %1111 = sbr.rel (%p1109) target = $region200
        $region199: #{vfsddpm_forward.1} parent=115 // pred_region
          %1112 = dma.done [#allocation33], 1024
        $region200: #{vfsddpm_forward.1} parent=115 // pred_fallthru
          _
        // Predicated region
        $region201: #{vfsddpm_forward.1} parent=115 // pred_check
          %p1113 = pneg %p551
        $region202: #{vfsddpm_forward.1} parent=115 // pred_check_branch
          %1115 = sbr.rel (%p1113) target = $region204
        $region203: #{vfsddpm_forward.1} parent=115 // pred_region
          %1116 = dma.done [#allocation36], 16
        $region204: #{vfsddpm_forward.1} parent=115 // pred_fallthru
          _
        // Predicated region
        $region205: #{vfsddpm_forward.1} parent=115 // pred_check
          %p1117 = pneg %p572
        $region206: #{vfsddpm_forward.1} parent=115 // pred_check_branch
          %1119 = sbr.rel (%p1117) target = $region208
        $region207: #{vfsddpm_forward.1} parent=115 // pred_region
          %1120 = dma.done [#allocation36], 6144
        $region208: #{vfsddpm_forward.1} parent=115 // pred_fallthru
          _
        // Predicated region
        $region209: #{vfsddpm_forward.1} parent=115 // pred_check
          %p1121 = pneg %p593
        $region210: #{vfsddpm_forward.1} parent=115 // pred_check_branch
          %1123 = sbr.rel (%p1121) target = $region212
        $region211: #{vfsddpm_forward.1} parent=115 // pred_region
          %1124 = dma.done [#allocation39], 96
        $region212: #{vfsddpm_forward.1} parent=115 // pred_fallthru
          _
        %s1125 = sand.u32 %s72, 1
        %s1126 = scalar_lea.sflag [#allocation3], %s1125
        %s1127 = sand.u32 %s72, 1
        %s1128 = smul.addr %s1127, 24
        %s1129 = scalar_lea.vmem [#allocation2], %s1128
        %p1130 = pneg %p85
        %p1131 = pneg %p82
        %s1132 = sand.u32 %s64, 1
        %s1133 = scalar_lea.sflag [#allocation6], %s1132
        %s1134 = sand.u32 %s98, 1
        %s1135 = smul.addr %s1134, 4
        %s1136 = scalar_lea.vmem [#allocation5], %s1135
        %p1137 = pneg %p111
        %p1138 = pneg %p108
        %s1139 = sand.u32 %s64, 1
        %s1140 = scalar_lea.sflag [#allocation6], %s1139
        %s1141 = sand.u32 %s124, 1
        %s1142 = smul.addr %s1141, 24
        %s1143 = scalar_lea.vmem [#allocation7], %s1142
        %p1144 = pneg %p137
        %p1145 = pneg %p134
        %s1146 = sand.u32 %s64, 1
        %s1147 = scalar_lea.sflag [#allocation9], %s1146
        %s1148 = sand.u32 %s150, 1
        %s1149 = smul.addr %s1148, 4
        %s1150 = scalar_lea.vmem [#allocation8], %s1149
        %p1151 = pneg %p163
        %p1152 = pneg %p160
        %s1153 = sand.u32 %s64, 1
        %s1154 = scalar_lea.sflag [#allocation9], %s1153
        %s1155 = sand.u32 %s176, 1
        %s1156 = smul.addr %s1155, 4
        %s1157 = scalar_lea.vmem [#allocation10], %s1156
        %p1158 = pneg %p189
        %p1159 = pneg %p186
        %s1160 = sand.u32 %s64, 1
        %s1161 = scalar_lea.sflag [#allocation12], %s1160
        %s1162 = sand.u32 %s202, 1
        %s1163 = smul.addr %s1162, 4
        %s1164 = scalar_lea.vmem [#allocation11], %s1163
        %p1165 = pneg %p215
        %p1166 = pneg %p212
        %p1167 = pneg %p236
        %p1168 = pneg %p233
        %p1169 = pneg %p257
        %p1170 = pneg %p254
        %p1171 = pneg %p278
        %p1172 = pneg %p275
        %p1173 = pneg %p299
        %p1174 = pneg %p296
        %p1175 = pneg %p320
        %p1176 = pneg %p317
        %p1177 = pneg %p341
        %p1178 = pneg %p338
        %p1179 = pneg %p362
        %p1180 = pneg %p359
        %p1181 = pneg %p383
        %p1182 = pneg %p380
        %p1183 = pneg %p404
        %p1184 = pneg %p401
        %p1185 = pneg %p425
        %p1186 = pneg %p422
        %p1187 = pneg %p446
        %p1188 = pneg %p443
        %p1189 = pneg %p467
        %p1190 = pneg %p464
        %p1191 = pneg %p488
        %p1192 = pneg %p485
        %p1193 = pneg %p509
        %p1194 = pneg %p506
        %p1195 = pneg %p530
        %p1196 = pneg %p527
        %p1197 = pneg %p551
        %p1198 = pneg %p548
        %p1199 = pneg %p572
        %p1200 = pneg %p569
        %p1201 = pneg %p593
        %p1202 = pneg %p590
        %p1203 = pneg %p619
        %p1204 = pneg %p616
        %s1205 = sand.u32 %s606, 1
        %s1206 = scalar_lea.sflag [#allocation4], %s1205
        %s1207 = sand.u32 %s606, 1
        %s1208 = smul.addr %s1207, 4
        %s1209 = scalar_lea.vmem [#allocation40], %s1208
        %p1210 = pneg %p645
        %p1211 = pneg %p642
        %s1212 = sand.u32 %s632, 1
        %s1213 = scalar_lea.sflag [#allocation42], %s1212
        %s1214 = sand.u32 %s632, 1
        %s1215 = scalar_lea.vmem [#allocation41], %s1214
        %v1217 = vld [vmem:[%s1003] sm:$0xff]
        %v1218 = vld [vmem:[%s1003 + $0x8] sm:$0xff]
        %v1219 = vld [vmem:[%s1003 + $0x10] sm:$0xff]
        %v1223 = vcombine.high %v1217, %v1217
        %v1224 = vcombine.high %v1218, %v1218
        %v1225 = vcombine.high %v1219, %v1219
        %v1229 = vpack.c.bf16 %v1217, %v1217
        %v1230 = vpack.c.bf16 %v1223, %v1223
        %v1231 = vpack.c.bf16 %v1218, %v1218
        %v1232 = vpack.c.bf16 %v1224, %v1224
        %v1233 = vpack.c.bf16 %v1219, %v1219
        %v1234 = vpack.c.bf16 %v1225, %v1225
        %v1235 = vld [vmem:[#allocation13] sm:$0xf]
        %v1236 = vld [vmem:[#allocation13 + $0x4] sm:$0xf]
        %v1237 = vld [vmem:[#allocation13 + $0x8] sm:$0xf]
        %v1238 = vld [vmem:[#allocation13 + $0xc] sm:$0xf]
        %v1239 = vld [vmem:[#allocation13 + $0x10] sm:$0xf]
        %v1240 = vld [vmem:[#allocation13 + $0x14] sm:$0xf]
        %v1241 = vld [vmem:[#allocation13 + $0x18] sm:$0xf]
        %v1242 = vld [vmem:[#allocation13 + $0x1c] sm:$0xf]
        %v1243 = vld [vmem:[#allocation13 + $0x20] sm:$0xf]
        %v1244 = vld [vmem:[#allocation13 + $0x24] sm:$0xf]
        %v1245 = vld [vmem:[#allocation13 + $0x28] sm:$0xf]
        %v1246 = vld [vmem:[#allocation13 + $0x2c] sm:$0xf]
        %v1247 = vld [vmem:[#allocation13 + $0x30] sm:$0xf]
        %v1248 = vld [vmem:[#allocation13 + $0x34] sm:$0xf]
        %v1249 = vld [vmem:[#allocation13 + $0x38] sm:$0xf]
        %v1250 = vld [vmem:[#allocation13 + $0x3c] sm:$0xf]
        %v1251 = vld [vmem:[#allocation13 + $0x40] sm:$0xf]
        %v1252 = vld [vmem:[#allocation13 + $0x44] sm:$0xf]
        %v1253 = vld [vmem:[#allocation13 + $0x48] sm:$0xf]
        %v1254 = vld [vmem:[#allocation13 + $0x4c] sm:$0xf]
        %v1255 = vld [vmem:[#allocation13 + $0x50] sm:$0xf]
        %v1256 = vld [vmem:[#allocation13 + $0x54] sm:$0xf]
        %v1257 = vld [vmem:[#allocation13 + $0x58] sm:$0xf]
        %v1258 = vld [vmem:[#allocation13 + $0x5c] sm:$0xf]
        %v1259 = vld [vmem:[#allocation13 + $0x60] sm:$0xf]
        %v1260 = vld [vmem:[#allocation13 + $0x64] sm:$0xf]
        %v1261 = vld [vmem:[#allocation13 + $0x68] sm:$0xf]
        %v1262 = vld [vmem:[#allocation13 + $0x6c] sm:$0xf]
        %v1263 = vld [vmem:[#allocation13 + $0x70] sm:$0xf]
        %v1264 = vld [vmem:[#allocation13 + $0x74] sm:$0xf]
        %v1265 = vld [vmem:[#allocation13 + $0x78] sm:$0xf]
        %v1266 = vld [vmem:[#allocation13 + $0x7c] sm:$0xf]
        %v1267 = vld [vmem:[#allocation13 + $0x80] sm:$0xf]
        %v1268 = vld [vmem:[#allocation13 + $0x84] sm:$0xf]
        %v1269 = vld [vmem:[#allocation13 + $0x88] sm:$0xf]
        %v1270 = vld [vmem:[#allocation13 + $0x8c] sm:$0xf]
        %v1271 = vld [vmem:[#allocation13 + $0x90] sm:$0xf]
        %v1272 = vld [vmem:[#allocation13 + $0x94] sm:$0xf]
        %v1273 = vld [vmem:[#allocation13 + $0x98] sm:$0xf]
        %v1274 = vld [vmem:[#allocation13 + $0x9c] sm:$0xf]
        %v1275 = vld [vmem:[#allocation13 + $0xa0] sm:$0xf]
        %v1276 = vld [vmem:[#allocation13 + $0xa4] sm:$0xf]
        %v1277 = vld [vmem:[#allocation13 + $0xa8] sm:$0xf]
        %v1278 = vld [vmem:[#allocation13 + $0xac] sm:$0xf]
        %v1279 = vld [vmem:[#allocation13 + $0xb0] sm:$0xf]
        %v1280 = vld [vmem:[#allocation13 + $0xb4] sm:$0xf]
        %v1281 = vld [vmem:[#allocation13 + $0xb8] sm:$0xf]
        %v1282 = vld [vmem:[#allocation13 + $0xbc] sm:$0xf]
        %v1283 = vld [vmem:[#allocation13 + $0xc0] sm:$0xf]
        %v1284 = vld [vmem:[#allocation13 + $0xc4] sm:$0xf]
        %v1285 = vld [vmem:[#allocation13 + $0xc8] sm:$0xf]
        %v1286 = vld [vmem:[#allocation13 + $0xcc] sm:$0xf]
        %v1287 = vld [vmem:[#allocation13 + $0xd0] sm:$0xf]
        %v1288 = vld [vmem:[#allocation13 + $0xd4] sm:$0xf]
        %v1289 = vld [vmem:[#allocation13 + $0xd8] sm:$0xf]
        %v1290 = vld [vmem:[#allocation13 + $0xdc] sm:$0xf]
        %v1291 = vld [vmem:[#allocation13 + $0xe0] sm:$0xf]
        %v1292 = vld [vmem:[#allocation13 + $0xe4] sm:$0xf]
        %v1293 = vld [vmem:[#allocation13 + $0xe8] sm:$0xf]
        %v1294 = vld [vmem:[#allocation13 + $0xec] sm:$0xf]
        %v1295 = vld [vmem:[#allocation13 + $0xf0] sm:$0xf]
        %v1296 = vld [vmem:[#allocation13 + $0xf4] sm:$0xf]
        %v1297 = vld [vmem:[#allocation13 + $0xf8] sm:$0xf]
        %v1298 = vld [vmem:[#allocation13 + $0xfc] sm:$0xf]
        %v1299 = vld [vmem:[#allocation13 + $0x100] sm:$0xf]
        %v1300 = vld [vmem:[#allocation13 + $0x104] sm:$0xf]
        %v1301 = vld [vmem:[#allocation13 + $0x108] sm:$0xf]
        %v1302 = vld [vmem:[#allocation13 + $0x10c] sm:$0xf]
        %v1303 = vld [vmem:[#allocation13 + $0x110] sm:$0xf]
        %v1304 = vld [vmem:[#allocation13 + $0x114] sm:$0xf]
        %v1305 = vld [vmem:[#allocation13 + $0x118] sm:$0xf]
        %v1306 = vld [vmem:[#allocation13 + $0x11c] sm:$0xf]
        %v1307 = vld [vmem:[#allocation13 + $0x120] sm:$0xf]
        %v1308 = vld [vmem:[#allocation13 + $0x124] sm:$0xf]
        %v1309 = vld [vmem:[#allocation13 + $0x128] sm:$0xf]
        %v1310 = vld [vmem:[#allocation13 + $0x12c] sm:$0xf]
        %v1311 = vld [vmem:[#allocation13 + $0x130] sm:$0xf]
        %v1312 = vld [vmem:[#allocation13 + $0x134] sm:$0xf]
        %v1313 = vld [vmem:[#allocation13 + $0x138] sm:$0xf]
        %v1314 = vld [vmem:[#allocation13 + $0x13c] sm:$0xf]
        %v1315 = vld [vmem:[#allocation13 + $0x140] sm:$0xf]
        %v1316 = vld [vmem:[#allocation13 + $0x144] sm:$0xf]
        %v1317 = vld [vmem:[#allocation13 + $0x148] sm:$0xf]
        %v1318 = vld [vmem:[#allocation13 + $0x14c] sm:$0xf]
        %v1319 = vld [vmem:[#allocation13 + $0x150] sm:$0xf]
        %v1320 = vld [vmem:[#allocation13 + $0x154] sm:$0xf]
        %v1321 = vld [vmem:[#allocation13 + $0x158] sm:$0xf]
        %v1322 = vld [vmem:[#allocation13 + $0x15c] sm:$0xf]
        %v1323 = vld [vmem:[#allocation13 + $0x160] sm:$0xf]
        %v1324 = vld [vmem:[#allocation13 + $0x164] sm:$0xf]
        %v1325 = vld [vmem:[#allocation13 + $0x168] sm:$0xf]
        %v1326 = vld [vmem:[#allocation13 + $0x16c] sm:$0xf]
        %v1327 = vld [vmem:[#allocation13 + $0x170] sm:$0xf]
        %v1328 = vld [vmem:[#allocation13 + $0x174] sm:$0xf]
        %v1329 = vld [vmem:[#allocation13 + $0x178] sm:$0xf]
        %v1330 = vld [vmem:[#allocation13 + $0x17c] sm:$0xf]
        %v1331 = vld [vmem:[#allocation14] sm:$0x1]
        %v1333 = vlaneseq
        %v1334 = vshrl.u32 %v1333, 7
        %v1335 = vsub.s32 0, %v1334
        %v1336 = vrot.slane %v1331, %v1335
        %v1434 = vunpack.c.l.b16 %v1235
        %v1435 = vunpack.c.l.b16 %v1236
        %v1436 = vunpack.c.l.b16 %v1237
        %v1437 = vunpack.c.l.b16 %v1238
        %v1438 = vunpack.c.l.b16 %v1239
        %v1439 = vunpack.c.l.b16 %v1240
        %v1440 = vunpack.c.l.b16 %v1241
        %v1441 = vunpack.c.l.b16 %v1242
        %v1442 = vunpack.c.l.b16 %v1243
        %v1443 = vunpack.c.l.b16 %v1244
        %v1444 = vunpack.c.l.b16 %v1245
        %v1445 = vunpack.c.l.b16 %v1246
        %v1446 = vunpack.c.l.b16 %v1247
        %v1447 = vunpack.c.l.b16 %v1248
        %v1448 = vunpack.c.l.b16 %v1249
        %v1449 = vunpack.c.l.b16 %v1250
        %v1450 = vunpack.c.l.b16 %v1251
        %v1451 = vunpack.c.l.b16 %v1252
        %v1452 = vunpack.c.l.b16 %v1253
        %v1453 = vunpack.c.l.b16 %v1254
        %v1454 = vunpack.c.l.b16 %v1255
        %v1455 = vunpack.c.l.b16 %v1256
        %v1456 = vunpack.c.l.b16 %v1257
        %v1457 = vunpack.c.l.b16 %v1258
        %v1458 = vunpack.c.l.b16 %v1259
        %v1459 = vunpack.c.l.b16 %v1260
        %v1460 = vunpack.c.l.b16 %v1261
        %v1461 = vunpack.c.l.b16 %v1262
        %v1462 = vunpack.c.l.b16 %v1263
        %v1463 = vunpack.c.l.b16 %v1264
        %v1464 = vunpack.c.l.b16 %v1265
        %v1465 = vunpack.c.l.b16 %v1266
        %v1466 = vunpack.c.l.b16 %v1267
        %v1467 = vunpack.c.l.b16 %v1268
        %v1468 = vunpack.c.l.b16 %v1269
        %v1469 = vunpack.c.l.b16 %v1270
        %v1470 = vunpack.c.l.b16 %v1271
        %v1471 = vunpack.c.l.b16 %v1272
        %v1472 = vunpack.c.l.b16 %v1273
        %v1473 = vunpack.c.l.b16 %v1274
        %v1474 = vunpack.c.l.b16 %v1275
        %v1475 = vunpack.c.l.b16 %v1276
        %v1476 = vunpack.c.l.b16 %v1277
        %v1477 = vunpack.c.l.b16 %v1278
        %v1478 = vunpack.c.l.b16 %v1279
        %v1479 = vunpack.c.l.b16 %v1280
        %v1480 = vunpack.c.l.b16 %v1281
        %v1481 = vunpack.c.l.b16 %v1282
        %v1482 = vunpack.c.l.b16 %v1283
        %v1483 = vunpack.c.l.b16 %v1284
        %v1484 = vunpack.c.l.b16 %v1285
        %v1485 = vunpack.c.l.b16 %v1286
        %v1486 = vunpack.c.l.b16 %v1287
        %v1487 = vunpack.c.l.b16 %v1288
        %v1488 = vunpack.c.l.b16 %v1289
        %v1489 = vunpack.c.l.b16 %v1290
        %v1490 = vunpack.c.l.b16 %v1291
        %v1491 = vunpack.c.l.b16 %v1292
        %v1492 = vunpack.c.l.b16 %v1293
        %v1493 = vunpack.c.l.b16 %v1294
        %v1494 = vunpack.c.l.b16 %v1295
        %v1495 = vunpack.c.l.b16 %v1296
        %v1496 = vunpack.c.l.b16 %v1297
        %v1497 = vunpack.c.l.b16 %v1298
        %v1498 = vunpack.c.l.b16 %v1299
        %v1499 = vunpack.c.l.b16 %v1300
        %v1500 = vunpack.c.l.b16 %v1301
        %v1501 = vunpack.c.l.b16 %v1302
        %v1502 = vunpack.c.l.b16 %v1303
        %v1503 = vunpack.c.l.b16 %v1304
        %v1504 = vunpack.c.l.b16 %v1305
        %v1505 = vunpack.c.l.b16 %v1306
        %v1506 = vunpack.c.l.b16 %v1307
        %v1507 = vunpack.c.l.b16 %v1308
        %v1508 = vunpack.c.l.b16 %v1309
        %v1509 = vunpack.c.l.b16 %v1310
        %v1510 = vunpack.c.l.b16 %v1311
        %v1511 = vunpack.c.l.b16 %v1312
        %v1512 = vunpack.c.l.b16 %v1313
        %v1513 = vunpack.c.l.b16 %v1314
        %v1514 = vunpack.c.l.b16 %v1315
        %v1515 = vunpack.c.l.b16 %v1316
        %v1516 = vunpack.c.l.b16 %v1317
        %v1517 = vunpack.c.l.b16 %v1318
        %v1518 = vunpack.c.l.b16 %v1319
        %v1519 = vunpack.c.l.b16 %v1320
        %v1520 = vunpack.c.l.b16 %v1321
        %v1521 = vunpack.c.l.b16 %v1322
        %v1522 = vunpack.c.l.b16 %v1323
        %v1523 = vunpack.c.l.b16 %v1324
        %v1524 = vunpack.c.l.b16 %v1325
        %v1525 = vunpack.c.l.b16 %v1326
        %v1526 = vunpack.c.l.b16 %v1327
        %v1527 = vunpack.c.l.b16 %v1328
        %v1528 = vunpack.c.l.b16 %v1329
        %v1529 = vunpack.c.l.b16 %v1330
        %v1530 = vpack.c.b16 %v1435, %v1434
        %v1531 = vpack.c.b16 %v1437, %v1436
        %v1532 = vpack.c.b16 %v1439, %v1438
        %v1533 = vpack.c.b16 %v1441, %v1440
        %v1534 = vpack.c.b16 %v1443, %v1442
        %v1535 = vpack.c.b16 %v1445, %v1444
        %v1536 = vpack.c.b16 %v1447, %v1446
        %v1537 = vpack.c.b16 %v1449, %v1448
        %v1538 = vpack.c.b16 %v1451, %v1450
        %v1539 = vpack.c.b16 %v1453, %v1452
        %v1540 = vpack.c.b16 %v1455, %v1454
        %v1541 = vpack.c.b16 %v1457, %v1456
        %v1542 = vpack.c.b16 %v1459, %v1458
        %v1543 = vpack.c.b16 %v1461, %v1460
        %v1544 = vpack.c.b16 %v1463, %v1462
        %v1545 = vpack.c.b16 %v1465, %v1464
        %v1546 = vpack.c.b16 %v1467, %v1466
        %v1547 = vpack.c.b16 %v1469, %v1468
        %v1548 = vpack.c.b16 %v1471, %v1470
        %v1549 = vpack.c.b16 %v1473, %v1472
        %v1550 = vpack.c.b16 %v1475, %v1474
        %v1551 = vpack.c.b16 %v1477, %v1476
        %v1552 = vpack.c.b16 %v1479, %v1478
        %v1553 = vpack.c.b16 %v1481, %v1480
        %v1554 = vpack.c.b16 %v1483, %v1482
        %v1555 = vpack.c.b16 %v1485, %v1484
        %v1556 = vpack.c.b16 %v1487, %v1486
        %v1557 = vpack.c.b16 %v1489, %v1488
        %v1558 = vpack.c.b16 %v1491, %v1490
        %v1559 = vpack.c.b16 %v1493, %v1492
        %v1560 = vpack.c.b16 %v1495, %v1494
        %v1561 = vpack.c.b16 %v1497, %v1496
        %v1562 = vpack.c.b16 %v1499, %v1498
        %v1563 = vpack.c.b16 %v1501, %v1500
        %v1564 = vpack.c.b16 %v1503, %v1502
        %v1565 = vpack.c.b16 %v1505, %v1504
        %v1566 = vpack.c.b16 %v1507, %v1506
        %v1567 = vpack.c.b16 %v1509, %v1508
        %v1568 = vpack.c.b16 %v1511, %v1510
        %v1569 = vpack.c.b16 %v1513, %v1512
        %v1570 = vpack.c.b16 %v1515, %v1514
        %v1571 = vpack.c.b16 %v1517, %v1516
        %v1572 = vpack.c.b16 %v1519, %v1518
        %v1573 = vpack.c.b16 %v1521, %v1520
        %v1574 = vpack.c.b16 %v1523, %v1522
        %v1575 = vpack.c.b16 %v1525, %v1524
        %v1576 = vpack.c.b16 %v1527, %v1526
        %v1577 = vpack.c.b16 %v1529, %v1528
        %1626 = vmatprep.subr.bf16.mxu0 0
        %1627 = vmatpush1.bf16.msra.mxu0 %v1530
        %1628 = vmatprep.subr.bf16.mxu0 0
        %1629 = vmatpush1.bf16.msra.mxu0 %v1531
        %1630 = vmatprep.subr.bf16.mxu0 0
        %1631 = vmatpush1.bf16.msra.mxu0 %v1532
        %1632 = vmatprep.subr.bf16.mxu0 0
        %1633 = vmatpush1.bf16.msra.mxu0 %v1533
        %1634 = vmatprep.subr.bf16.mxu0 0
        %1635 = vmatpush1.bf16.msra.mxu0 %v1534
        %1636 = vmatprep.subr.bf16.mxu0 0
        %1637 = vmatpush1.bf16.msra.mxu0 %v1535
        %1638 = vmatprep.subr.bf16.mxu0 0
        %1639 = vmatpush1.bf16.msra.mxu0 %v1536
        %1640 = vmatprep.subr.bf16.mxu0 0
        %1641 = vmatpush1.bf16.msra.mxu0 %v1537
        %1642 = vmatprep.subr.bf16.mxu0 0
        %1643 = vmatpush1.bf16.msra.mxu0 %v1538
        %1644 = vmatprep.subr.bf16.mxu0 0
        %1645 = vmatpush1.bf16.msra.mxu0 %v1539
        %1646 = vmatprep.subr.bf16.mxu0 0
        %1647 = vmatpush1.bf16.msra.mxu0 %v1540
        %1648 = vmatprep.subr.bf16.mxu0 0
        %1649 = vmatpush1.bf16.msra.mxu0 %v1541
        %1650 = vmatprep.subr.bf16.mxu0 0
        %1651 = vmatpush1.bf16.msra.mxu0 %v1542
        %1652 = vmatprep.subr.bf16.mxu0 0
        %1653 = vmatpush1.bf16.msra.mxu0 %v1543
        %1654 = vmatprep.subr.bf16.mxu0 0
        %1655 = vmatpush1.bf16.msra.mxu0 %v1544
        %1656 = vmatprep.subr.bf16.mxu0 0
        %1657 = vmatpush1.bf16.msra.mxu0 %v1545
        %1658 = vmatprep.mubr.bf16.mxu0 %v1230
        %1659 = vmatmul.mubr.bf16.gmra.mrb[0].mxu0 %v1229
        %v1660 = vpop.f32.mrb[0].mxu0
        %v1661 = vadd.f32 %v1336, %v1660
        %v1662 = vpop.f32.mrb[0].mxu0
        %v1663 = vpop.f32.mrb[0].mxu0
        %v1664 = vpop.f32.mrb[0].mxu0
        %1665 = vdwg.mxu0
        %1666 = vmatprep.subr.bf16.mxu0 0
        %1667 = vmatpush1.bf16.msra.mxu0 %v1546
        %1668 = vmatprep.subr.bf16.mxu0 0
        %1669 = vmatpush1.bf16.msra.mxu0 %v1547
        %1670 = vmatprep.subr.bf16.mxu0 0
        %1671 = vmatpush1.bf16.msra.mxu0 %v1548
        %1672 = vmatprep.subr.bf16.mxu0 0
        %1673 = vmatpush1.bf16.msra.mxu0 %v1549
        %1674 = vmatprep.subr.bf16.mxu0 0
        %1675 = vmatpush1.bf16.msra.mxu0 %v1550
        %1676 = vmatprep.subr.bf16.mxu0 0
        %1677 = vmatpush1.bf16.msra.mxu0 %v1551
        %1678 = vmatprep.subr.bf16.mxu0 0
        %1679 = vmatpush1.bf16.msra.mxu0 %v1552
        %1680 = vmatprep.subr.bf16.mxu0 0
        %1681 = vmatpush1.bf16.msra.mxu0 %v1553
        %1682 = vmatprep.subr.bf16.mxu0 0
        %1683 = vmatpush1.bf16.msra.mxu0 %v1554
        %1684 = vmatprep.subr.bf16.mxu0 0
        %1685 = vmatpush1.bf16.msra.mxu0 %v1555
        %1686 = vmatprep.subr.bf16.mxu0 0
        %1687 = vmatpush1.bf16.msra.mxu0 %v1556
        %1688 = vmatprep.subr.bf16.mxu0 0
        %1689 = vmatpush1.bf16.msra.mxu0 %v1557
        %1690 = vmatprep.subr.bf16.mxu0 0
        %1691 = vmatpush1.bf16.msra.mxu0 %v1558
        %1692 = vmatprep.subr.bf16.mxu0 0
        %1693 = vmatpush1.bf16.msra.mxu0 %v1559
        %1694 = vmatprep.subr.bf16.mxu0 0
        %1695 = vmatpush1.bf16.msra.mxu0 %v1560
        %1696 = vmatprep.subr.bf16.mxu0 0
        %1697 = vmatpush1.bf16.msra.mxu0 %v1561
        %1698 = vmatprep.mubr.bf16.mxu0 %v1232
        %1699 = vmatmul.mubr.bf16.gmra.mrb[0].mxu0 %v1231
        %v1700 = vpop.f32.mrb[0].mxu0
        %v1701 = vadd.f32 %v1661, %v1700
        %v1702 = vpop.f32.mrb[0].mxu0
        %v1703 = vpop.f32.mrb[0].mxu0
        %v1704 = vpop.f32.mrb[0].mxu0
        %1705 = vdwg.mxu0
        %1706 = vmatprep.subr.bf16.mxu0 0
        %1707 = vmatpush1.bf16.msra.mxu0 %v1562
        %1708 = vmatprep.subr.bf16.mxu0 0
        %1709 = vmatpush1.bf16.msra.mxu0 %v1563
        %1710 = vmatprep.subr.bf16.mxu0 0
        %1711 = vmatpush1.bf16.msra.mxu0 %v1564
        %1712 = vmatprep.subr.bf16.mxu0 0
        %1713 = vmatpush1.bf16.msra.mxu0 %v1565
        %1714 = vmatprep.subr.bf16.mxu0 0
        %1715 = vmatpush1.bf16.msra.mxu0 %v1566
        %1716 = vmatprep.subr.bf16.mxu0 0
        %1717 = vmatpush1.bf16.msra.mxu0 %v1567
        %1718 = vmatprep.subr.bf16.mxu0 0
        %1719 = vmatpush1.bf16.msra.mxu0 %v1568
        %1720 = vmatprep.subr.bf16.mxu0 0
        %1721 = vmatpush1.bf16.msra.mxu0 %v1569
        %1722 = vmatprep.subr.bf16.mxu0 0
        %1723 = vmatpush1.bf16.msra.mxu0 %v1570
        %1724 = vmatprep.subr.bf16.mxu0 0
        %1725 = vmatpush1.bf16.msra.mxu0 %v1571
        %1726 = vmatprep.subr.bf16.mxu0 0
        %1727 = vmatpush1.bf16.msra.mxu0 %v1572
        %1728 = vmatprep.subr.bf16.mxu0 0
        %1729 = vmatpush1.bf16.msra.mxu0 %v1573
        %1730 = vmatprep.subr.bf16.mxu0 0
        %1731 = vmatpush1.bf16.msra.mxu0 %v1574
        %1732 = vmatprep.subr.bf16.mxu0 0
        %1733 = vmatpush1.bf16.msra.mxu0 %v1575
        %1734 = vmatprep.subr.bf16.mxu0 0
        %1735 = vmatpush1.bf16.msra.mxu0 %v1576
        %1736 = vmatprep.subr.bf16.mxu0 0
        %1737 = vmatpush1.bf16.msra.mxu0 %v1577
        %1738 = vmatprep.mubr.bf16.mxu0 %v1234
        %1739 = vmatmul.mubr.bf16.gmra.mrb[0].mxu0 %v1233
        %v1740 = vpop.f32.mrb[0].mxu0
        %v1741 = vadd.f32 %v1701, %v1740
        %v1742 = vpop.f32.mrb[0].mxu0
        %v1743 = vpop.f32.mrb[0].mxu0
        %v1744 = vpop.f32.mrb[0].mxu0
        %1745 = vdwg.mxu0
        %v1746 = vxor.u32 %v1741, 2147483648
        %v1747 = vmul.f32 %v1746, 1.442695
        %v1748 = vpow.pop %v1747
        %v1749 = vadd.f32 %v1748, 1.0
        %v1750 = vrcp.pop %v1749
        %v1751 = vmul.f32 1.0, %v1750
        %v1752 = vmul.f32 %v1741, %v1751
        %vm1753 = vcmask 1043456
        %v1754 = vsel %vm1753, %v1752, 0.0
        %v1755 = vrot.slane %v1754, 4
        %v1756 = vadd.f32 %v1754, %v1755
        %v1757 = vrot.slane %v1756, 2
        %v1758 = vadd.f32 %v1756, %v1757
        %v1759 = vrot.slane %v1758, 1
        %v1760 = vadd.f32 %v1758, %v1759
        %v1761 = vsub.f32 %v1760, %v1752
        %v1762 = vmul.f32 %v1761, 0.33333334
        %v1763 = vpack.c.bf16 %v1762, %v1762
        %v1764 = vld [vmem:[#allocation16] sm:$0xf]
        %v1765 = vld [vmem:[#allocation16 + $0x4] sm:$0xf]
        %v1766 = vld [vmem:[#allocation16 + $0x8] sm:$0xf]
        %v1767 = vld [vmem:[#allocation16 + $0xc] sm:$0xf]
        %v1768 = vld [vmem:[#allocation16 + $0x10] sm:$0xf]
        %v1769 = vld [vmem:[#allocation16 + $0x14] sm:$0xf]
        %v1770 = vld [vmem:[#allocation16 + $0x18] sm:$0xf]
        %v1771 = vld [vmem:[#allocation16 + $0x1c] sm:$0xf]
        %v1772 = vld [vmem:[#allocation16 + $0x20] sm:$0xf]
        %v1773 = vld [vmem:[#allocation16 + $0x24] sm:$0xf]
        %v1774 = vld [vmem:[#allocation16 + $0x28] sm:$0xf]
        %v1775 = vld [vmem:[#allocation16 + $0x2c] sm:$0xf]
        %v1776 = vld [vmem:[#allocation16 + $0x30] sm:$0xf]
        %v1777 = vld [vmem:[#allocation16 + $0x34] sm:$0xf]
        %v1778 = vld [vmem:[#allocation16 + $0x38] sm:$0xf]
        %v1779 = vld [vmem:[#allocation16 + $0x3c] sm:$0xf]
        %v1780 = vld [vmem:[#allocation17] sm:$0x1]
        %v1782 = vlaneseq
        %v1783 = vshrl.u32 %v1782, 7
        %v1784 = vsub.s32 0, %v1783
        %v1785 = vrot.slane %v1780, %v1784
        %v1803 = vunpack.c.l.b16 %v1764
        %v1804 = vunpack.c.l.b16 %v1765
        %v1805 = vunpack.c.l.b16 %v1766
        %v1806 = vunpack.c.l.b16 %v1767
        %v1807 = vunpack.c.l.b16 %v1768
        %v1808 = vunpack.c.l.b16 %v1769
        %v1809 = vunpack.c.l.b16 %v1770
        %v1810 = vunpack.c.l.b16 %v1771
        %v1811 = vunpack.c.l.b16 %v1772
        %v1812 = vunpack.c.l.b16 %v1773
        %v1813 = vunpack.c.l.b16 %v1774
        %v1814 = vunpack.c.l.b16 %v1775
        %v1815 = vunpack.c.l.b16 %v1776
        %v1816 = vunpack.c.l.b16 %v1777
        %v1817 = vunpack.c.l.b16 %v1778
        %v1818 = vunpack.c.l.b16 %v1779
        %v1819 = vpack.c.b16 %v1804, %v1803
        %v1820 = vpack.c.b16 %v1806, %v1805
        %v1821 = vpack.c.b16 %v1808, %v1807
        %v1822 = vpack.c.b16 %v1810, %v1809
        %v1823 = vpack.c.b16 %v1812, %v1811
        %v1824 = vpack.c.b16 %v1814, %v1813
        %v1825 = vpack.c.b16 %v1816, %v1815
        %v1826 = vpack.c.b16 %v1818, %v1817
        %1835 = vmatprep.subr.bf16.mxu0 0
        %1836 = vmatpush1.bf16.msra.mxu0 %v1819
        %1837 = vmatprep.subr.bf16.mxu0 0
        %1838 = vmatpush1.bf16.msra.mxu0 %v1820
        %1839 = vmatprep.subr.bf16.mxu0 0
        %1840 = vmatpush1.bf16.msra.mxu0 %v1821
        %1841 = vmatprep.subr.bf16.mxu0 0
        %1842 = vmatpush1.bf16.msra.mxu0 %v1822
        %1843 = vmatprep.subr.bf16.mxu0 0
        %1844 = vmatpush1.bf16.msra.mxu0 %v1823
        %1845 = vmatprep.subr.bf16.mxu0 0
        %1846 = vmatpush1.bf16.msra.mxu0 %v1824
        %1847 = vmatprep.subr.bf16.mxu0 0
        %1848 = vmatpush1.bf16.msra.mxu0 %v1825
        %1849 = vmatprep.subr.bf16.mxu0 0
        %1850 = vmatpush1.bf16.msra.mxu0 %v1826
        %1851 = vmatprep.subr.bf16.mxu0 0
        %1852 = vmatpush1.bf16.msra.mxu0 0
        %1853 = vmatprep.subr.bf16.mxu0 0
        %1854 = vmatpush1.bf16.msra.mxu0 0
        %1855 = vmatprep.subr.bf16.mxu0 0
        %1856 = vmatpush1.bf16.msra.mxu0 0
        %1857 = vmatprep.subr.bf16.mxu0 0
        %1858 = vmatpush1.bf16.msra.mxu0 0
        %1859 = vmatprep.subr.bf16.mxu0 0
        %1860 = vmatpush1.bf16.msra.mxu0 0
        %1861 = vmatprep.subr.bf16.mxu0 0
        %1862 = vmatpush1.bf16.msra.mxu0 0
        %1863 = vmatprep.subr.bf16.mxu0 0
        %1864 = vmatpush1.bf16.msra.mxu0 0
        %1865 = vmatprep.subr.bf16.mxu0 0
        %1866 = vmatpush1.bf16.msra.mxu0 0
        %1867 = vmatprep.mubr.bf16.mxu0 0
        %1868 = vmatmul.mubr.bf16.gmra.mrb[0].mxu0 %v1763
        %v1869 = vpop.f32.mrb[0].mxu0
        %v1870 = vadd.f32 %v1785, %v1869
        %v1871 = vpop.f32.mrb[0].mxu0
        %v1872 = vpop.f32.mrb[0].mxu0
        %v1873 = vpop.f32.mrb[0].mxu0
        %1874 = vdwg.mxu0
        %v1875 = vxor.u32 %v1870, 2147483648
        %v1876 = vmul.f32 %v1875, 1.442695
        %v1877 = vpow.pop %v1876
        %v1878 = vadd.f32 %v1877, 1.0
        %v1879 = vrcp.pop %v1878
        %v1880 = vmul.f32 1.0, %v1879
        %v1881 = vmul.f32 %v1870, %v1880
        %v1882 = vpack.c.bf16 %v1881, %v1881
        %v1883 = vld [vmem:[#allocation19] sm:$0xf]
        %v1884 = vld [vmem:[#allocation19 + $0x4] sm:$0xf]
        %v1885 = vld [vmem:[#allocation19 + $0x8] sm:$0xf]
        %v1886 = vld [vmem:[#allocation19 + $0xc] sm:$0xf]
        %v1887 = vld [vmem:[#allocation19 + $0x10] sm:$0xf]
        %v1888 = vld [vmem:[#allocation19 + $0x14] sm:$0xf]
        %v1889 = vld [vmem:[#allocation19 + $0x18] sm:$0xf]
        %v1890 = vld [vmem:[#allocation19 + $0x1c] sm:$0xf]
        %v1891 = vld [vmem:[#allocation19 + $0x20] sm:$0xf]
        %v1892 = vld [vmem:[#allocation19 + $0x24] sm:$0xf]
        %v1893 = vld [vmem:[#allocation19 + $0x28] sm:$0xf]
        %v1894 = vld [vmem:[#allocation19 + $0x2c] sm:$0xf]
        %v1895 = vld [vmem:[#allocation19 + $0x30] sm:$0xf]
        %v1896 = vld [vmem:[#allocation19 + $0x34] sm:$0xf]
        %v1897 = vld [vmem:[#allocation19 + $0x38] sm:$0xf]
        %v1898 = vld [vmem:[#allocation19 + $0x3c] sm:$0xf]
        %v1899 = vld [vmem:[#allocation20] sm:$0x1]
        %v1901 = vlaneseq
        %v1902 = vshrl.u32 %v1901, 7
        %v1903 = vsub.s32 0, %v1902
        %v1904 = vrot.slane %v1899, %v1903
        %v1922 = vunpack.c.l.b16 %v1883
        %v1923 = vunpack.c.l.b16 %v1884
        %v1924 = vunpack.c.l.b16 %v1885
        %v1925 = vunpack.c.l.b16 %v1886
        %v1926 = vunpack.c.l.b16 %v1887
        %v1927 = vunpack.c.l.b16 %v1888
        %v1928 = vunpack.c.l.b16 %v1889
        %v1929 = vunpack.c.l.b16 %v1890
        %v1930 = vunpack.c.l.b16 %v1891
        %v1931 = vunpack.c.l.b16 %v1892
        %v1932 = vunpack.c.l.b16 %v1893
        %v1933 = vunpack.c.l.b16 %v1894
        %v1934 = vunpack.c.l.b16 %v1895
        %v1935 = vunpack.c.l.b16 %v1896
        %v1936 = vunpack.c.l.b16 %v1897
        %v1937 = vunpack.c.l.b16 %v1898
        %v1938 = vpack.c.b16 %v1923, %v1922
        %v1939 = vpack.c.b16 %v1925, %v1924
        %v1940 = vpack.c.b16 %v1927, %v1926
        %v1941 = vpack.c.b16 %v1929, %v1928
        %v1942 = vpack.c.b16 %v1931, %v1930
        %v1943 = vpack.c.b16 %v1933, %v1932
        %v1944 = vpack.c.b16 %v1935, %v1934
        %v1945 = vpack.c.b16 %v1937, %v1936
        %1954 = vmatprep.subr.bf16.mxu0 0
        %1955 = vmatpush1.bf16.msra.mxu0 %v1938
        %1956 = vmatprep.subr.bf16.mxu0 0
        %1957 = vmatpush1.bf16.msra.mxu0 %v1939
        %1958 = vmatprep.subr.bf16.mxu0 0
        %1959 = vmatpush1.bf16.msra.mxu0 %v1940
        %1960 = vmatprep.subr.bf16.mxu0 0
        %1961 = vmatpush1.bf16.msra.mxu0 %v1941
        %1962 = vmatprep.subr.bf16.mxu0 0
        %1963 = vmatpush1.bf16.msra.mxu0 %v1942
        %1964 = vmatprep.subr.bf16.mxu0 0
        %1965 = vmatpush1.bf16.msra.mxu0 %v1943
        %1966 = vmatprep.subr.bf16.mxu0 0
        %1967 = vmatpush1.bf16.msra.mxu0 %v1944
        %1968 = vmatprep.subr.bf16.mxu0 0
        %1969 = vmatpush1.bf16.msra.mxu0 %v1945
        %1970 = vmatprep.subr.bf16.mxu0 0
        %1971 = vmatpush1.bf16.msra.mxu0 0
        %1972 = vmatprep.subr.bf16.mxu0 0
        %1973 = vmatpush1.bf16.msra.mxu0 0
        %1974 = vmatprep.subr.bf16.mxu0 0
        %1975 = vmatpush1.bf16.msra.mxu0 0
        %1976 = vmatprep.subr.bf16.mxu0 0
        %1977 = vmatpush1.bf16.msra.mxu0 0
        %1978 = vmatprep.subr.bf16.mxu0 0
        %1979 = vmatpush1.bf16.msra.mxu0 0
        %1980 = vmatprep.subr.bf16.mxu0 0
        %1981 = vmatpush1.bf16.msra.mxu0 0
        %1982 = vmatprep.subr.bf16.mxu0 0
        %1983 = vmatpush1.bf16.msra.mxu0 0
        %1984 = vmatprep.subr.bf16.mxu0 0
        %1985 = vmatpush1.bf16.msra.mxu0 0
        %1986 = vmatprep.mubr.bf16.mxu0 0
        %1987 = vmatmul.mubr.bf16.gmra.mrb[0].mxu0 %v1882
        %v1988 = vpop.f32.mrb[0].mxu0
        %v1989 = vadd.f32 %v1904, %v1988
        %v1990 = vpop.f32.mrb[0].mxu0
        %v1991 = vpop.f32.mrb[0].mxu0
        %v1992 = vpop.f32.mrb[0].mxu0
        %1993 = vdwg.mxu0
        %v1994 = vld [vmem:[#allocation22] sm:$0xf]
        %v1995 = vld [vmem:[#allocation22 + $0x4] sm:$0xf]
        %v1996 = vld [vmem:[#allocation22 + $0x8] sm:$0xf]
        %v1997 = vld [vmem:[#allocation22 + $0xc] sm:$0xf]
        %v1998 = vld [vmem:[#allocation22 + $0x10] sm:$0xf]
        %v1999 = vld [vmem:[#allocation22 + $0x14] sm:$0xf]
        %v2000 = vld [vmem:[#allocation22 + $0x18] sm:$0xf]
        %v2001 = vld [vmem:[#allocation22 + $0x1c] sm:$0xf]
        %v2002 = vld [vmem:[#allocation22 + $0x20] sm:$0xf]
        %v2003 = vld [vmem:[#allocation22 + $0x24] sm:$0xf]
        %v2004 = vld [vmem:[#allocation22 + $0x28] sm:$0xf]
        %v2005 = vld [vmem:[#allocation22 + $0x2c] sm:$0xf]
        %v2006 = vld [vmem:[#allocation22 + $0x30] sm:$0xf]
        %v2007 = vld [vmem:[#allocation22 + $0x34] sm:$0xf]
        %v2008 = vld [vmem:[#allocation22 + $0x38] sm:$0xf]
        %v2009 = vld [vmem:[#allocation22 + $0x3c] sm:$0xf]
        %v2010 = vld [vmem:[#allocation23] sm:$0x1]
        %v2012 = vlaneseq
        %v2013 = vshrl.u32 %v2012, 7
        %v2014 = vsub.s32 0, %v2013
        %v2015 = vrot.slane %v2010, %v2014
        %v2033 = vunpack.c.l.b16 %v1994
        %v2034 = vunpack.c.l.b16 %v1995
        %v2035 = vunpack.c.l.b16 %v1996
        %v2036 = vunpack.c.l.b16 %v1997
        %v2037 = vunpack.c.l.b16 %v1998
        %v2038 = vunpack.c.l.b16 %v1999
        %v2039 = vunpack.c.l.b16 %v2000
        %v2040 = vunpack.c.l.b16 %v2001
        %v2041 = vunpack.c.l.b16 %v2002
        %v2042 = vunpack.c.l.b16 %v2003
        %v2043 = vunpack.c.l.b16 %v2004
        %v2044 = vunpack.c.l.b16 %v2005
        %v2045 = vunpack.c.l.b16 %v2006
        %v2046 = vunpack.c.l.b16 %v2007
        %v2047 = vunpack.c.l.b16 %v2008
        %v2048 = vunpack.c.l.b16 %v2009
        %v2049 = vpack.c.b16 %v2034, %v2033
        %v2050 = vpack.c.b16 %v2036, %v2035
        %v2051 = vpack.c.b16 %v2038, %v2037
        %v2052 = vpack.c.b16 %v2040, %v2039
        %v2053 = vpack.c.b16 %v2042, %v2041
        %v2054 = vpack.c.b16 %v2044, %v2043
        %v2055 = vpack.c.b16 %v2046, %v2045
        %v2056 = vpack.c.b16 %v2048, %v2047
        %2065 = vmatprep.subr.bf16.mxu0 0
        %2066 = vmatpush1.bf16.msra.mxu0 %v2049
        %2067 = vmatprep.subr.bf16.mxu0 0
        %2068 = vmatpush1.bf16.msra.mxu0 %v2050
        %2069 = vmatprep.subr.bf16.mxu0 0
        %2070 = vmatpush1.bf16.msra.mxu0 %v2051
        %2071 = vmatprep.subr.bf16.mxu0 0
        %2072 = vmatpush1.bf16.msra.mxu0 %v2052
        %2073 = vmatprep.subr.bf16.mxu0 0
        %2074 = vmatpush1.bf16.msra.mxu0 %v2053
        %2075 = vmatprep.subr.bf16.mxu0 0
        %2076 = vmatpush1.bf16.msra.mxu0 %v2054
        %2077 = vmatprep.subr.bf16.mxu0 0
        %2078 = vmatpush1.bf16.msra.mxu0 %v2055
        %2079 = vmatprep.subr.bf16.mxu0 0
        %2080 = vmatpush1.bf16.msra.mxu0 %v2056
        %2081 = vmatprep.subr.bf16.mxu0 0
        %2082 = vmatpush1.bf16.msra.mxu0 0
        %2083 = vmatprep.subr.bf16.mxu0 0
        %2084 = vmatpush1.bf16.msra.mxu0 0
        %2085 = vmatprep.subr.bf16.mxu0 0
        %2086 = vmatpush1.bf16.msra.mxu0 0
        %2087 = vmatprep.subr.bf16.mxu0 0
        %2088 = vmatpush1.bf16.msra.mxu0 0
        %2089 = vmatprep.subr.bf16.mxu0 0
        %2090 = vmatpush1.bf16.msra.mxu0 0
        %2091 = vmatprep.subr.bf16.mxu0 0
        %2092 = vmatpush1.bf16.msra.mxu0 0
        %2093 = vmatprep.subr.bf16.mxu0 0
        %2094 = vmatpush1.bf16.msra.mxu0 0
        %2095 = vmatprep.subr.bf16.mxu0 0
        %2096 = vmatpush1.bf16.msra.mxu0 0
        %2097 = vmatprep.mubr.bf16.mxu0 0
        %2098 = vmatmul.mubr.bf16.gmra.mrb[0].mxu0 %v1882
        %v2099 = vpop.f32.mrb[0].mxu0
        %v2100 = vadd.f32 %v2015, %v2099
        %v2101 = vpop.f32.mrb[0].mxu0
        %v2102 = vpop.f32.mrb[0].mxu0
        %v2103 = vpop.f32.mrb[0].mxu0
        %2104 = vdwg.mxu0
        %v2105 = vmul.f32 %v2100, 0.5
        %v2106 = vmul.f32 %v2105, 1.442695
        %v2107 = vpow.pop %v2106
        %v2108 = vld [vmem:[%s1012] sm:$0xf]
        %v2109 = vmul.f32 %v2107, %v2108
        %v2110 = vadd.f32 %v1989, %v2109
        %v2111 = vmul.f32 %v2100, 1.442695
        %v2112 = vpow.pop %v2111
        %v2113 = vmul.f32 %v1989, %v1989
        %v2114 = vadd.f32 %v2112, %v2113
        %v2115 = vsub.f32 %v2114, 1.0
        %v2116 = vsub.f32 %v2115, %v2100
        %v2117 = vmul.f32 %v2116, 0.5
        %2118 = vst [vmem:[%s1215 - $0x3] sm:$0x8] %v2117
        %v2119 = vld [vmem:[%s1021] sm:$0xff]
        %v2120 = vld [vmem:[%s1021 + $0x8] sm:$0xff]
        %v2121 = vld [vmem:[%s1021 + $0x10] sm:$0xff]
        %v2122 = vld [vmem:[%s1030] sm:$0xf]
        %2124 = vset.pattern.permute.xlu0 0
        %2125 = vperm.xlu0 %2124, %v2122
        %v2126 = vpop.permute.xlu0 %2125
        %v2128 = vmul.f32 %v2126, %v1217
        %v2129 = vmul.f32 %v2126, %v1223
        %v2130 = vmul.f32 %v2126, %v1218
        %v2131 = vmul.f32 %v2126, %v1224
        %v2132 = vmul.f32 %v2126, %v1219
        %v2133 = vmul.f32 %v2126, %v1225
        %v2134 = vld [vmem:[%s1039] sm:$0xf]
        %2136 = vset.pattern.permute.xlu0 0
        %2137 = vperm.xlu0 %2136, %v2134
        %v2138 = vpop.permute.xlu0 %2137
        %v2143 = vcombine.high %v2119, %v2119
        %v2144 = vcombine.high %v2120, %v2120
        %v2145 = vcombine.high %v2121, %v2121
        %v2149 = vmul.f32 %v2138, %v2119
        %v2150 = vmul.f32 %v2138, %v2143
        %v2151 = vmul.f32 %v2138, %v2120
        %v2152 = vmul.f32 %v2138, %v2144
        %v2153 = vmul.f32 %v2138, %v2121
        %v2154 = vmul.f32 %v2138, %v2145
        %v2155 = vadd.f32 %v2128, %v2149
        %v2156 = vadd.f32 %v2129, %v2150
        %v2157 = vadd.f32 %v2130, %v2151
        %v2158 = vadd.f32 %v2131, %v2152
        %v2159 = vadd.f32 %v2132, %v2153
        %v2160 = vadd.f32 %v2133, %v2154
        %v2161 = vld [vmem:[%s1048] sm:$0xf]
        %v2162 = vpack.c.bf16 %v2161, %v2161
        %v2163 = vld [vmem:[#allocation25] sm:$0xf]
        %v2164 = vld [vmem:[#allocation25 + $0x4] sm:$0xf]
        %v2165 = vld [vmem:[#allocation25 + $0x8] sm:$0xf]
        %v2166 = vld [vmem:[#allocation25 + $0xc] sm:$0xf]
        %v2167 = vld [vmem:[#allocation25 + $0x10] sm:$0xf]
        %v2168 = vld [vmem:[#allocation25 + $0x14] sm:$0xf]
        %v2169 = vld [vmem:[#allocation25 + $0x18] sm:$0xf]
        %v2170 = vld [vmem:[#allocation25 + $0x1c] sm:$0xf]
        %v2171 = vld [vmem:[#allocation25 + $0x20] sm:$0xf]
        %v2172 = vld [vmem:[#allocation25 + $0x24] sm:$0xf]
        %v2173 = vld [vmem:[#allocation25 + $0x28] sm:$0xf]
        %v2174 = vld [vmem:[#allocation25 + $0x2c] sm:$0xf]
        %v2175 = vld [vmem:[#allocation25 + $0x30] sm:$0xf]
        %v2176 = vld [vmem:[#allocation25 + $0x34] sm:$0xf]
        %v2177 = vld [vmem:[#allocation25 + $0x38] sm:$0xf]
        %v2178 = vld [vmem:[#allocation25 + $0x3c] sm:$0xf]
        %v2179 = vld [vmem:[#allocation26] sm:$0x1]
        %v2181 = vlaneseq
        %v2182 = vshrl.u32 %v2181, 7
        %v2183 = vsub.s32 0, %v2182
        %v2184 = vrot.slane %v2179, %v2183
        %v2202 = vunpack.c.l.b16 %v2163
        %v2203 = vunpack.c.l.b16 %v2164
        %v2204 = vunpack.c.l.b16 %v2165
        %v2205 = vunpack.c.l.b16 %v2166
        %v2206 = vunpack.c.l.b16 %v2167
        %v2207 = vunpack.c.l.b16 %v2168
        %v2208 = vunpack.c.l.b16 %v2169
        %v2209 = vunpack.c.l.b16 %v2170
        %v2210 = vunpack.c.l.b16 %v2171
        %v2211 = vunpack.c.l.b16 %v2172
        %v2212 = vunpack.c.l.b16 %v2173
        %v2213 = vunpack.c.l.b16 %v2174
        %v2214 = vunpack.c.l.b16 %v2175
        %v2215 = vunpack.c.l.b16 %v2176
        %v2216 = vunpack.c.l.b16 %v2177
        %v2217 = vunpack.c.l.b16 %v2178
        %v2218 = vpack.c.b16 %v2203, %v2202
        %v2219 = vpack.c.b16 %v2205, %v2204
        %v2220 = vpack.c.b16 %v2207, %v2206
        %v2221 = vpack.c.b16 %v2209, %v2208
        %v2222 = vpack.c.b16 %v2211, %v2210
        %v2223 = vpack.c.b16 %v2213, %v2212
        %v2224 = vpack.c.b16 %v2215, %v2214
        %v2225 = vpack.c.b16 %v2217, %v2216
        %2234 = vmatprep.subr.bf16.mxu0 0
        %2235 = vmatpush1.bf16.msra.mxu0 %v2218
        %2236 = vmatprep.subr.bf16.mxu0 0
        %2237 = vmatpush1.bf16.msra.mxu0 %v2219
        %2238 = vmatprep.subr.bf16.mxu0 0
        %2239 = vmatpush1.bf16.msra.mxu0 %v2220
        %2240 = vmatprep.subr.bf16.mxu0 0
        %2241 = vmatpush1.bf16.msra.mxu0 %v2221
        %2242 = vmatprep.subr.bf16.mxu0 0
        %2243 = vmatpush1.bf16.msra.mxu0 %v2222
        %2244 = vmatprep.subr.bf16.mxu0 0
        %2245 = vmatpush1.bf16.msra.mxu0 %v2223
        %2246 = vmatprep.subr.bf16.mxu0 0
        %2247 = vmatpush1.bf16.msra.mxu0 %v2224
        %2248 = vmatprep.subr.bf16.mxu0 0
        %2249 = vmatpush1.bf16.msra.mxu0 %v2225
        %2250 = vmatprep.subr.bf16.mxu0 0
        %2251 = vmatpush1.bf16.msra.mxu0 0
        %2252 = vmatprep.subr.bf16.mxu0 0
        %2253 = vmatpush1.bf16.msra.mxu0 0
        %2254 = vmatprep.subr.bf16.mxu0 0
        %2255 = vmatpush1.bf16.msra.mxu0 0
        %2256 = vmatprep.subr.bf16.mxu0 0
        %2257 = vmatpush1.bf16.msra.mxu0 0
        %2258 = vmatprep.subr.bf16.mxu0 0
        %2259 = vmatpush1.bf16.msra.mxu0 0
        %2260 = vmatprep.subr.bf16.mxu0 0
        %2261 = vmatpush1.bf16.msra.mxu0 0
        %2262 = vmatprep.subr.bf16.mxu0 0
        %2263 = vmatpush1.bf16.msra.mxu0 0
        %2264 = vmatprep.subr.bf16.mxu0 0
        %2265 = vmatpush1.bf16.msra.mxu0 0
        %2266 = vmatprep.mubr.bf16.mxu0 0
        %2267 = vmatmul.mubr.bf16.gmra.mrb[0].mxu0 %v2162
        %v2268 = vpop.f32.mrb[0].mxu0
        %v2269 = vadd.f32 %v2184, %v2268
        %v2270 = vpop.f32.mrb[0].mxu0
        %v2271 = vpop.f32.mrb[0].mxu0
        %v2272 = vpop.f32.mrb[0].mxu0
        %2273 = vdwg.mxu0
        %v2274 = vxor.u32 %v2269, 2147483648
        %v2275 = vmul.f32 %v2274, 1.442695
        %v2276 = vpow.pop %v2275
        %v2277 = vadd.f32 %v2276, 1.0
        %v2278 = vrcp.pop %v2277
        %v2279 = vmul.f32 1.0, %v2278
        %v2280 = vmul.f32 %v2269, %v2279
        %v2281 = vpack.c.bf16 %v2280, %v2280
        %v2282 = vld [vmem:[#allocation28] sm:$0xf]
        %v2283 = vld [vmem:[#allocation28 + $0x4] sm:$0xf]
        %v2284 = vld [vmem:[#allocation28 + $0x8] sm:$0xf]
        %v2285 = vld [vmem:[#allocation28 + $0xc] sm:$0xf]
        %v2286 = vld [vmem:[#allocation28 + $0x10] sm:$0xf]
        %v2287 = vld [vmem:[#allocation28 + $0x14] sm:$0xf]
        %v2288 = vld [vmem:[#allocation28 + $0x18] sm:$0xf]
        %v2289 = vld [vmem:[#allocation28 + $0x1c] sm:$0xf]
        %v2290 = vld [vmem:[#allocation28 + $0x20] sm:$0xf]
        %v2291 = vld [vmem:[#allocation28 + $0x24] sm:$0xf]
        %v2292 = vld [vmem:[#allocation28 + $0x28] sm:$0xf]
        %v2293 = vld [vmem:[#allocation28 + $0x2c] sm:$0xf]
        %v2294 = vld [vmem:[#allocation28 + $0x30] sm:$0xf]
        %v2295 = vld [vmem:[#allocation28 + $0x34] sm:$0xf]
        %v2296 = vld [vmem:[#allocation28 + $0x38] sm:$0xf]
        %v2297 = vld [vmem:[#allocation28 + $0x3c] sm:$0xf]
        %v2298 = vld [vmem:[#allocation29] sm:$0x1]
        %v2300 = vlaneseq
        %v2301 = vshrl.u32 %v2300, 7
        %v2302 = vsub.s32 0, %v2301
        %v2303 = vrot.slane %v2298, %v2302
        %v2321 = vunpack.c.l.b16 %v2282
        %v2322 = vunpack.c.l.b16 %v2283
        %v2323 = vunpack.c.l.b16 %v2284
        %v2324 = vunpack.c.l.b16 %v2285
        %v2325 = vunpack.c.l.b16 %v2286
        %v2326 = vunpack.c.l.b16 %v2287
        %v2327 = vunpack.c.l.b16 %v2288
        %v2328 = vunpack.c.l.b16 %v2289
        %v2329 = vunpack.c.l.b16 %v2290
        %v2330 = vunpack.c.l.b16 %v2291
        %v2331 = vunpack.c.l.b16 %v2292
        %v2332 = vunpack.c.l.b16 %v2293
        %v2333 = vunpack.c.l.b16 %v2294
        %v2334 = vunpack.c.l.b16 %v2295
        %v2335 = vunpack.c.l.b16 %v2296
        %v2336 = vunpack.c.l.b16 %v2297
        %v2337 = vpack.c.b16 %v2322, %v2321
        %v2338 = vpack.c.b16 %v2324, %v2323
        %v2339 = vpack.c.b16 %v2326, %v2325
        %v2340 = vpack.c.b16 %v2328, %v2327
        %v2341 = vpack.c.b16 %v2330, %v2329
        %v2342 = vpack.c.b16 %v2332, %v2331
        %v2343 = vpack.c.b16 %v2334, %v2333
        %v2344 = vpack.c.b16 %v2336, %v2335
        %2353 = vmatprep.subr.bf16.mxu0 0
        %2354 = vmatpush1.bf16.msra.mxu0 %v2337
        %2355 = vmatprep.subr.bf16.mxu0 0
        %2356 = vmatpush1.bf16.msra.mxu0 %v2338
        %2357 = vmatprep.subr.bf16.mxu0 0
        %2358 = vmatpush1.bf16.msra.mxu0 %v2339
        %2359 = vmatprep.subr.bf16.mxu0 0
        %2360 = vmatpush1.bf16.msra.mxu0 %v2340
        %2361 = vmatprep.subr.bf16.mxu0 0
        %2362 = vmatpush1.bf16.msra.mxu0 %v2341
        %2363 = vmatprep.subr.bf16.mxu0 0
        %2364 = vmatpush1.bf16.msra.mxu0 %v2342
        %2365 = vmatprep.subr.bf16.mxu0 0
        %2366 = vmatpush1.bf16.msra.mxu0 %v2343
        %2367 = vmatprep.subr.bf16.mxu0 0
        %2368 = vmatpush1.bf16.msra.mxu0 %v2344
        %2369 = vmatprep.subr.bf16.mxu0 0
        %2370 = vmatpush1.bf16.msra.mxu0 0
        %2371 = vmatprep.subr.bf16.mxu0 0
        %2372 = vmatpush1.bf16.msra.mxu0 0
        %2373 = vmatprep.subr.bf16.mxu0 0
        %2374 = vmatpush1.bf16.msra.mxu0 0
        %2375 = vmatprep.subr.bf16.mxu0 0
        %2376 = vmatpush1.bf16.msra.mxu0 0
        %2377 = vmatprep.subr.bf16.mxu0 0
        %2378 = vmatpush1.bf16.msra.mxu0 0
        %2379 = vmatprep.subr.bf16.mxu0 0
        %2380 = vmatpush1.bf16.msra.mxu0 0
        %2381 = vmatprep.subr.bf16.mxu0 0
        %2382 = vmatpush1.bf16.msra.mxu0 0
        %2383 = vmatprep.subr.bf16.mxu0 0
        %2384 = vmatpush1.bf16.msra.mxu0 0
        %2385 = vmatprep.mubr.bf16.mxu0 0
        %2386 = vmatmul.mubr.bf16.gmra.mrb[0].mxu0 %v2281
        %v2387 = vpop.f32.mrb[0].mxu0
        %v2388 = vadd.f32 %v2303, %v2387
        %v2389 = vpop.f32.mrb[0].mxu0
        %v2390 = vpop.f32.mrb[0].mxu0
        %v2391 = vpop.f32.mrb[0].mxu0
        %2392 = vdwg.mxu0
        %v2393 = vpack.c.bf16 %v2155, %v2155
        %v2394 = vpack.c.bf16 %v2156, %v2156
        %v2395 = vpack.c.bf16 %v2157, %v2157
        %v2396 = vpack.c.bf16 %v2158, %v2158
        %v2397 = vpack.c.bf16 %v2159, %v2159
        %v2398 = vpack.c.bf16 %v2160, %v2160
        %v2399 = vld [vmem:[#allocation31] sm:$0xf]
        %v2400 = vld [vmem:[#allocation31 + $0x4] sm:$0xf]
        %v2401 = vld [vmem:[#allocation31 + $0x8] sm:$0xf]
        %v2402 = vld [vmem:[#allocation31 + $0xc] sm:$0xf]
        %v2403 = vld [vmem:[#allocation31 + $0x10] sm:$0xf]
        %v2404 = vld [vmem:[#allocation31 + $0x14] sm:$0xf]
        %v2405 = vld [vmem:[#allocation31 + $0x18] sm:$0xf]
        %v2406 = vld [vmem:[#allocation31 + $0x1c] sm:$0xf]
        %v2407 = vld [vmem:[#allocation31 + $0x20] sm:$0xf]
        %v2408 = vld [vmem:[#allocation31 + $0x24] sm:$0xf]
        %v2409 = vld [vmem:[#allocation31 + $0x28] sm:$0xf]
        %v2410 = vld [vmem:[#allocation31 + $0x2c] sm:$0xf]
        %v2411 = vld [vmem:[#allocation31 + $0x30] sm:$0xf]
        %v2412 = vld [vmem:[#allocation31 + $0x34] sm:$0xf]
        %v2413 = vld [vmem:[#allocation31 + $0x38] sm:$0xf]
        %v2414 = vld [vmem:[#allocation31 + $0x3c] sm:$0xf]
        %v2415 = vld [vmem:[#allocation31 + $0x40] sm:$0xf]
        %v2416 = vld [vmem:[#allocation31 + $0x44] sm:$0xf]
        %v2417 = vld [vmem:[#allocation31 + $0x48] sm:$0xf]
        %v2418 = vld [vmem:[#allocation31 + $0x4c] sm:$0xf]
        %v2419 = vld [vmem:[#allocation31 + $0x50] sm:$0xf]
        %v2420 = vld [vmem:[#allocation31 + $0x54] sm:$0xf]
        %v2421 = vld [vmem:[#allocation31 + $0x58] sm:$0xf]
        %v2422 = vld [vmem:[#allocation31 + $0x5c] sm:$0xf]
        %v2423 = vld [vmem:[#allocation31 + $0x60] sm:$0xf]
        %v2424 = vld [vmem:[#allocation31 + $0x64] sm:$0xf]
        %v2425 = vld [vmem:[#allocation31 + $0x68] sm:$0xf]
        %v2426 = vld [vmem:[#allocation31 + $0x6c] sm:$0xf]
        %v2427 = vld [vmem:[#allocation31 + $0x70] sm:$0xf]
        %v2428 = vld [vmem:[#allocation31 + $0x74] sm:$0xf]
        %v2429 = vld [vmem:[#allocation31 + $0x78] sm:$0xf]
        %v2430 = vld [vmem:[#allocation31 + $0x7c] sm:$0xf]
        %v2431 = vld [vmem:[#allocation31 + $0x80] sm:$0xf]
        %v2432 = vld [vmem:[#allocation31 + $0x84] sm:$0xf]
        %v2433 = vld [vmem:[#allocation31 + $0x88] sm:$0xf]
        %v2434 = vld [vmem:[#allocation31 + $0x8c] sm:$0xf]
        %v2435 = vld [vmem:[#allocation31 + $0x90] sm:$0xf]
        %v2436 = vld [vmem:[#allocation31 + $0x94] sm:$0xf]
        %v2437 = vld [vmem:[#allocation31 + $0x98] sm:$0xf]
        %v2438 = vld [vmem:[#allocation31 + $0x9c] sm:$0xf]
        %v2439 = vld [vmem:[#allocation31 + $0xa0] sm:$0xf]
        %v2440 = vld [vmem:[#allocation31 + $0xa4] sm:$0xf]
        %v2441 = vld [vmem:[#allocation31 + $0xa8] sm:$0xf]
        %v2442 = vld [vmem:[#allocation31 + $0xac] sm:$0xf]
        %v2443 = vld [vmem:[#allocation31 + $0xb0] sm:$0xf]
        %v2444 = vld [vmem:[#allocation31 + $0xb4] sm:$0xf]
        %v2445 = vld [vmem:[#allocation31 + $0xb8] sm:$0xf]
        %v2446 = vld [vmem:[#allocation31 + $0xbc] sm:$0xf]
        %v2447 = vld [vmem:[#allocation31 + $0xc0] sm:$0xf]
        %v2448 = vld [vmem:[#allocation31 + $0xc4] sm:$0xf]
        %v2449 = vld [vmem:[#allocation31 + $0xc8] sm:$0xf]
        %v2450 = vld [vmem:[#allocation31 + $0xcc] sm:$0xf]
        %v2451 = vld [vmem:[#allocation31 + $0xd0] sm:$0xf]
        %v2452 = vld [vmem:[#allocation31 + $0xd4] sm:$0xf]
        %v2453 = vld [vmem:[#allocation31 + $0xd8] sm:$0xf]
        %v2454 = vld [vmem:[#allocation31 + $0xdc] sm:$0xf]
        %v2455 = vld [vmem:[#allocation31 + $0xe0] sm:$0xf]
        %v2456 = vld [vmem:[#allocation31 + $0xe4] sm:$0xf]
        %v2457 = vld [vmem:[#allocation31 + $0xe8] sm:$0xf]
        %v2458 = vld [vmem:[#allocation31 + $0xec] sm:$0xf]
        %v2459 = vld [vmem:[#allocation31 + $0xf0] sm:$0xf]
        %v2460 = vld [vmem:[#allocation31 + $0xf4] sm:$0xf]
        %v2461 = vld [vmem:[#allocation31 + $0xf8] sm:$0xf]
        %v2462 = vld [vmem:[#allocation31 + $0xfc] sm:$0xf]
        %v2463 = vld [vmem:[#allocation31 + $0x100] sm:$0xf]
        %v2464 = vld [vmem:[#allocation31 + $0x104] sm:$0xf]
        %v2465 = vld [vmem:[#allocation31 + $0x108] sm:$0xf]
        %v2466 = vld [vmem:[#allocation31 + $0x10c] sm:$0xf]
        %v2467 = vld [vmem:[#allocation31 + $0x110] sm:$0xf]
        %v2468 = vld [vmem:[#allocation31 + $0x114] sm:$0xf]
        %v2469 = vld [vmem:[#allocation31 + $0x118] sm:$0xf]
        %v2470 = vld [vmem:[#allocation31 + $0x11c] sm:$0xf]
        %v2471 = vld [vmem:[#allocation31 + $0x120] sm:$0xf]
        %v2472 = vld [vmem:[#allocation31 + $0x124] sm:$0xf]
        %v2473 = vld [vmem:[#allocation31 + $0x128] sm:$0xf]
        %v2474 = vld [vmem:[#allocation31 + $0x12c] sm:$0xf]
        %v2475 = vld [vmem:[#allocation31 + $0x130] sm:$0xf]
        %v2476 = vld [vmem:[#allocation31 + $0x134] sm:$0xf]
        %v2477 = vld [vmem:[#allocation31 + $0x138] sm:$0xf]
        %v2478 = vld [vmem:[#allocation31 + $0x13c] sm:$0xf]
        %v2479 = vld [vmem:[#allocation31 + $0x140] sm:$0xf]
        %v2480 = vld [vmem:[#allocation31 + $0x144] sm:$0xf]
        %v2481 = vld [vmem:[#allocation31 + $0x148] sm:$0xf]
        %v2482 = vld [vmem:[#allocation31 + $0x14c] sm:$0xf]
        %v2483 = vld [vmem:[#allocation31 + $0x150] sm:$0xf]
        %v2484 = vld [vmem:[#allocation31 + $0x154] sm:$0xf]
        %v2485 = vld [vmem:[#allocation31 + $0x158] sm:$0xf]
        %v2486 = vld [vmem:[#allocation31 + $0x15c] sm:$0xf]
        %v2487 = vld [vmem:[#allocation31 + $0x160] sm:$0xf]
        %v2488 = vld [vmem:[#allocation31 + $0x164] sm:$0xf]
        %v2489 = vld [vmem:[#allocation31 + $0x168] sm:$0xf]
        %v2490 = vld [vmem:[#allocation31 + $0x16c] sm:$0xf]
        %v2491 = vld [vmem:[#allocation31 + $0x170] sm:$0xf]
        %v2492 = vld [vmem:[#allocation31 + $0x174] sm:$0xf]
        %v2493 = vld [vmem:[#allocation31 + $0x178] sm:$0xf]
        %v2494 = vld [vmem:[#allocation31 + $0x17c] sm:$0xf]
        %v2495 = vpack.c.bf16 %v2388, %v2388
        %v2496 = vld [vmem:[#allocation32] sm:$0xf]
        %v2497 = vld [vmem:[#allocation32 + $0x4] sm:$0xf]
        %v2498 = vld [vmem:[#allocation32 + $0x8] sm:$0xf]
        %v2499 = vld [vmem:[#allocation32 + $0xc] sm:$0xf]
        %v2500 = vld [vmem:[#allocation32 + $0x10] sm:$0xf]
        %v2501 = vld [vmem:[#allocation32 + $0x14] sm:$0xf]
        %v2502 = vld [vmem:[#allocation32 + $0x18] sm:$0xf]
        %v2503 = vld [vmem:[#allocation32 + $0x1c] sm:$0xf]
        %v2504 = vld [vmem:[#allocation32 + $0x20] sm:$0xf]
        %v2505 = vld [vmem:[#allocation32 + $0x24] sm:$0xf]
        %v2506 = vld [vmem:[#allocation32 + $0x28] sm:$0xf]
        %v2507 = vld [vmem:[#allocation32 + $0x2c] sm:$0xf]
        %v2508 = vld [vmem:[#allocation32 + $0x30] sm:$0xf]
        %v2509 = vld [vmem:[#allocation32 + $0x34] sm:$0xf]
        %v2510 = vld [vmem:[#allocation32 + $0x38] sm:$0xf]
        %v2511 = vld [vmem:[#allocation32 + $0x3c] sm:$0xf]
        %v2528 = vunpack.c.l.b16 %v2496
        %v2529 = vunpack.c.l.b16 %v2497
        %v2530 = vunpack.c.l.b16 %v2498
        %v2531 = vunpack.c.l.b16 %v2499
        %v2532 = vunpack.c.l.b16 %v2500
        %v2533 = vunpack.c.l.b16 %v2501
        %v2534 = vunpack.c.l.b16 %v2502
        %v2535 = vunpack.c.l.b16 %v2503
        %v2536 = vunpack.c.l.b16 %v2504
        %v2537 = vunpack.c.l.b16 %v2505
        %v2538 = vunpack.c.l.b16 %v2506
        %v2539 = vunpack.c.l.b16 %v2507
        %v2540 = vunpack.c.l.b16 %v2508
        %v2541 = vunpack.c.l.b16 %v2509
        %v2542 = vunpack.c.l.b16 %v2510
        %v2543 = vunpack.c.l.b16 %v2511
        %v2544 = vpack.c.b16 %v2529, %v2528
        %v2545 = vpack.c.b16 %v2531, %v2530
        %v2546 = vpack.c.b16 %v2533, %v2532
        %v2547 = vpack.c.b16 %v2535, %v2534
        %v2548 = vpack.c.b16 %v2537, %v2536
        %v2549 = vpack.c.b16 %v2539, %v2538
        %v2550 = vpack.c.b16 %v2541, %v2540
        %v2551 = vpack.c.b16 %v2543, %v2542
        %2560 = vmatprep.subr.bf16.mxu0 0
        %2561 = vmatpush1.bf16.msra.mxu0 %v2544
        %2562 = vmatprep.subr.bf16.mxu0 0
        %2563 = vmatpush1.bf16.msra.mxu0 %v2545
        %2564 = vmatprep.subr.bf16.mxu0 0
        %2565 = vmatpush1.bf16.msra.mxu0 %v2546
        %2566 = vmatprep.subr.bf16.mxu0 0
        %2567 = vmatpush1.bf16.msra.mxu0 %v2547
        %2568 = vmatprep.subr.bf16.mxu0 0
        %2569 = vmatpush1.bf16.msra.mxu0 %v2548
        %2570 = vmatprep.subr.bf16.mxu0 0
        %2571 = vmatpush1.bf16.msra.mxu0 %v2549
        %2572 = vmatprep.subr.bf16.mxu0 0
        %2573 = vmatpush1.bf16.msra.mxu0 %v2550
        %2574 = vmatprep.subr.bf16.mxu0 0
        %2575 = vmatpush1.bf16.msra.mxu0 %v2551
        %2576 = vmatprep.subr.bf16.mxu0 0
        %2577 = vmatpush1.bf16.msra.mxu0 0
        %2578 = vmatprep.subr.bf16.mxu0 0
        %2579 = vmatpush1.bf16.msra.mxu0 0
        %2580 = vmatprep.subr.bf16.mxu0 0
        %2581 = vmatpush1.bf16.msra.mxu0 0
        %2582 = vmatprep.subr.bf16.mxu0 0
        %2583 = vmatpush1.bf16.msra.mxu0 0
        %2584 = vmatprep.subr.bf16.mxu0 0
        %2585 = vmatpush1.bf16.msra.mxu0 0
        %2586 = vmatprep.subr.bf16.mxu0 0
        %2587 = vmatpush1.bf16.msra.mxu0 0
        %2588 = vmatprep.subr.bf16.mxu0 0
        %2589 = vmatpush1.bf16.msra.mxu0 0
        %2590 = vmatprep.subr.bf16.mxu0 0
        %2591 = vmatpush1.bf16.msra.mxu0 0
        %2592 = vmatprep.mubr.bf16.mxu0 0
        %2593 = vmatmul.mubr.bf16.gmra.mrb[0].mxu0 %v2495
        %v2594 = vpop.f32.mrb[0].mxu0
        %v2595 = vadd.f32 0.0, %v2594
        %v2596 = vpop.f32.mrb[0].mxu0
        %v2597 = vpop.f32.mrb[0].mxu0
        %v2598 = vpop.f32.mrb[0].mxu0
        %2599 = vdwg.mxu0
        %v2696 = vunpack.c.l.b16 %v2399
        %v2697 = vunpack.c.l.b16 %v2400
        %v2698 = vunpack.c.l.b16 %v2401
        %v2699 = vunpack.c.l.b16 %v2402
        %v2700 = vunpack.c.l.b16 %v2403
        %v2701 = vunpack.c.l.b16 %v2404
        %v2702 = vunpack.c.l.b16 %v2405
        %v2703 = vunpack.c.l.b16 %v2406
        %v2704 = vunpack.c.l.b16 %v2407
        %v2705 = vunpack.c.l.b16 %v2408
        %v2706 = vunpack.c.l.b16 %v2409
        %v2707 = vunpack.c.l.b16 %v2410
        %v2708 = vunpack.c.l.b16 %v2411
        %v2709 = vunpack.c.l.b16 %v2412
        %v2710 = vunpack.c.l.b16 %v2413
        %v2711 = vunpack.c.l.b16 %v2414
        %v2712 = vunpack.c.l.b16 %v2415
        %v2713 = vunpack.c.l.b16 %v2416
        %v2714 = vunpack.c.l.b16 %v2417
        %v2715 = vunpack.c.l.b16 %v2418
        %v2716 = vunpack.c.l.b16 %v2419
        %v2717 = vunpack.c.l.b16 %v2420
        %v2718 = vunpack.c.l.b16 %v2421
        %v2719 = vunpack.c.l.b16 %v2422
        %v2720 = vunpack.c.l.b16 %v2423
        %v2721 = vunpack.c.l.b16 %v2424
        %v2722 = vunpack.c.l.b16 %v2425
        %v2723 = vunpack.c.l.b16 %v2426
        %v2724 = vunpack.c.l.b16 %v2427
        %v2725 = vunpack.c.l.b16 %v2428
        %v2726 = vunpack.c.l.b16 %v2429
        %v2727 = vunpack.c.l.b16 %v2430
        %v2728 = vunpack.c.l.b16 %v2431
        %v2729 = vunpack.c.l.b16 %v2432
        %v2730 = vunpack.c.l.b16 %v2433
        %v2731 = vunpack.c.l.b16 %v2434
        %v2732 = vunpack.c.l.b16 %v2435
        %v2733 = vunpack.c.l.b16 %v2436
        %v2734 = vunpack.c.l.b16 %v2437
        %v2735 = vunpack.c.l.b16 %v2438
        %v2736 = vunpack.c.l.b16 %v2439
        %v2737 = vunpack.c.l.b16 %v2440
        %v2738 = vunpack.c.l.b16 %v2441
        %v2739 = vunpack.c.l.b16 %v2442
        %v2740 = vunpack.c.l.b16 %v2443
        %v2741 = vunpack.c.l.b16 %v2444
        %v2742 = vunpack.c.l.b16 %v2445
        %v2743 = vunpack.c.l.b16 %v2446
        %v2744 = vunpack.c.l.b16 %v2447
        %v2745 = vunpack.c.l.b16 %v2448
        %v2746 = vunpack.c.l.b16 %v2449
        %v2747 = vunpack.c.l.b16 %v2450
        %v2748 = vunpack.c.l.b16 %v2451
        %v2749 = vunpack.c.l.b16 %v2452
        %v2750 = vunpack.c.l.b16 %v2453
        %v2751 = vunpack.c.l.b16 %v2454
        %v2752 = vunpack.c.l.b16 %v2455
        %v2753 = vunpack.c.l.b16 %v2456
        %v2754 = vunpack.c.l.b16 %v2457
        %v2755 = vunpack.c.l.b16 %v2458
        %v2756 = vunpack.c.l.b16 %v2459
        %v2757 = vunpack.c.l.b16 %v2460
        %v2758 = vunpack.c.l.b16 %v2461
        %v2759 = vunpack.c.l.b16 %v2462
        %v2760 = vunpack.c.l.b16 %v2463
        %v2761 = vunpack.c.l.b16 %v2464
        %v2762 = vunpack.c.l.b16 %v2465
        %v2763 = vunpack.c.l.b16 %v2466
        %v2764 = vunpack.c.l.b16 %v2467
        %v2765 = vunpack.c.l.b16 %v2468
        %v2766 = vunpack.c.l.b16 %v2469
        %v2767 = vunpack.c.l.b16 %v2470
        %v2768 = vunpack.c.l.b16 %v2471
        %v2769 = vunpack.c.l.b16 %v2472
        %v2770 = vunpack.c.l.b16 %v2473
        %v2771 = vunpack.c.l.b16 %v2474
        %v2772 = vunpack.c.l.b16 %v2475
        %v2773 = vunpack.c.l.b16 %v2476
        %v2774 = vunpack.c.l.b16 %v2477
        %v2775 = vunpack.c.l.b16 %v2478
        %v2776 = vunpack.c.l.b16 %v2479
        %v2777 = vunpack.c.l.b16 %v2480
        %v2778 = vunpack.c.l.b16 %v2481
        %v2779 = vunpack.c.l.b16 %v2482
        %v2780 = vunpack.c.l.b16 %v2483
        %v2781 = vunpack.c.l.b16 %v2484
        %v2782 = vunpack.c.l.b16 %v2485
        %v2783 = vunpack.c.l.b16 %v2486
        %v2784 = vunpack.c.l.b16 %v2487
        %v2785 = vunpack.c.l.b16 %v2488
        %v2786 = vunpack.c.l.b16 %v2489
        %v2787 = vunpack.c.l.b16 %v2490
        %v2788 = vunpack.c.l.b16 %v2491
        %v2789 = vunpack.c.l.b16 %v2492
        %v2790 = vunpack.c.l.b16 %v2493
        %v2791 = vunpack.c.l.b16 %v2494
        %v2792 = vpack.c.b16 %v2697, %v2696
        %v2793 = vpack.c.b16 %v2699, %v2698
        %v2794 = vpack.c.b16 %v2701, %v2700
        %v2795 = vpack.c.b16 %v2703, %v2702
        %v2796 = vpack.c.b16 %v2705, %v2704
        %v2797 = vpack.c.b16 %v2707, %v2706
        %v2798 = vpack.c.b16 %v2709, %v2708
        %v2799 = vpack.c.b16 %v2711, %v2710
        %v2800 = vpack.c.b16 %v2713, %v2712
        %v2801 = vpack.c.b16 %v2715, %v2714
        %v2802 = vpack.c.b16 %v2717, %v2716
        %v2803 = vpack.c.b16 %v2719, %v2718
        %v2804 = vpack.c.b16 %v2721, %v2720
        %v2805 = vpack.c.b16 %v2723, %v2722
        %v2806 = vpack.c.b16 %v2725, %v2724
        %v2807 = vpack.c.b16 %v2727, %v2726
        %v2808 = vpack.c.b16 %v2729, %v2728
        %v2809 = vpack.c.b16 %v2731, %v2730
        %v2810 = vpack.c.b16 %v2733, %v2732
        %v2811 = vpack.c.b16 %v2735, %v2734
        %v2812 = vpack.c.b16 %v2737, %v2736
        %v2813 = vpack.c.b16 %v2739, %v2738
        %v2814 = vpack.c.b16 %v2741, %v2740
        %v2815 = vpack.c.b16 %v2743, %v2742
        %v2816 = vpack.c.b16 %v2745, %v2744
        %v2817 = vpack.c.b16 %v2747, %v2746
        %v2818 = vpack.c.b16 %v2749, %v2748
        %v2819 = vpack.c.b16 %v2751, %v2750
        %v2820 = vpack.c.b16 %v2753, %v2752
        %v2821 = vpack.c.b16 %v2755, %v2754
        %v2822 = vpack.c.b16 %v2757, %v2756
        %v2823 = vpack.c.b16 %v2759, %v2758
        %v2824 = vpack.c.b16 %v2761, %v2760
        %v2825 = vpack.c.b16 %v2763, %v2762
        %v2826 = vpack.c.b16 %v2765, %v2764
        %v2827 = vpack.c.b16 %v2767, %v2766
        %v2828 = vpack.c.b16 %v2769, %v2768
        %v2829 = vpack.c.b16 %v2771, %v2770
        %v2830 = vpack.c.b16 %v2773, %v2772
        %v2831 = vpack.c.b16 %v2775, %v2774
        %v2832 = vpack.c.b16 %v2777, %v2776
        %v2833 = vpack.c.b16 %v2779, %v2778
        %v2834 = vpack.c.b16 %v2781, %v2780
        %v2835 = vpack.c.b16 %v2783, %v2782
        %v2836 = vpack.c.b16 %v2785, %v2784
        %v2837 = vpack.c.b16 %v2787, %v2786
        %v2838 = vpack.c.b16 %v2789, %v2788
        %v2839 = vpack.c.b16 %v2791, %v2790
        %2888 = vmatprep.subr.bf16.mxu0 0
        %2889 = vmatpush1.bf16.msra.mxu0 %v2792
        %2890 = vmatprep.subr.bf16.mxu0 0
        %2891 = vmatpush1.bf16.msra.mxu0 %v2793
        %2892 = vmatprep.subr.bf16.mxu0 0
        %2893 = vmatpush1.bf16.msra.mxu0 %v2794
        %2894 = vmatprep.subr.bf16.mxu0 0
        %2895 = vmatpush1.bf16.msra.mxu0 %v2795
        %2896 = vmatprep.subr.bf16.mxu0 0
        %2897 = vmatpush1.bf16.msra.mxu0 %v2796
        %2898 = vmatprep.subr.bf16.mxu0 0
        %2899 = vmatpush1.bf16.msra.mxu0 %v2797
        %2900 = vmatprep.subr.bf16.mxu0 0
        %2901 = vmatpush1.bf16.msra.mxu0 %v2798
        %2902 = vmatprep.subr.bf16.mxu0 0
        %2903 = vmatpush1.bf16.msra.mxu0 %v2799
        %2904 = vmatprep.subr.bf16.mxu0 0
        %2905 = vmatpush1.bf16.msra.mxu0 %v2800
        %2906 = vmatprep.subr.bf16.mxu0 0
        %2907 = vmatpush1.bf16.msra.mxu0 %v2801
        %2908 = vmatprep.subr.bf16.mxu0 0
        %2909 = vmatpush1.bf16.msra.mxu0 %v2802
        %2910 = vmatprep.subr.bf16.mxu0 0
        %2911 = vmatpush1.bf16.msra.mxu0 %v2803
        %2912 = vmatprep.subr.bf16.mxu0 0
        %2913 = vmatpush1.bf16.msra.mxu0 %v2804
        %2914 = vmatprep.subr.bf16.mxu0 0
        %2915 = vmatpush1.bf16.msra.mxu0 %v2805
        %2916 = vmatprep.subr.bf16.mxu0 0
        %2917 = vmatpush1.bf16.msra.mxu0 %v2806
        %2918 = vmatprep.subr.bf16.mxu0 0
        %2919 = vmatpush1.bf16.msra.mxu0 %v2807
        %2920 = vmatprep.mubr.bf16.mxu0 %v2394
        %2921 = vmatmul.mubr.bf16.gmra.mrb[0].mxu0 %v2393
        %v2922 = vpop.f32.mrb[0].mxu0
        %v2923 = vadd.f32 %v2595, %v2922
        %v2924 = vpop.f32.mrb[0].mxu0
        %v2925 = vpop.f32.mrb[0].mxu0
        %v2926 = vpop.f32.mrb[0].mxu0
        %2927 = vdwg.mxu0
        %2928 = vmatprep.subr.bf16.mxu0 0
        %2929 = vmatpush1.bf16.msra.mxu0 %v2808
        %2930 = vmatprep.subr.bf16.mxu0 0
        %2931 = vmatpush1.bf16.msra.mxu0 %v2809
        %2932 = vmatprep.subr.bf16.mxu0 0
        %2933 = vmatpush1.bf16.msra.mxu0 %v2810
        %2934 = vmatprep.subr.bf16.mxu0 0
        %2935 = vmatpush1.bf16.msra.mxu0 %v2811
        %2936 = vmatprep.subr.bf16.mxu0 0
        %2937 = vmatpush1.bf16.msra.mxu0 %v2812
        %2938 = vmatprep.subr.bf16.mxu0 0
        %2939 = vmatpush1.bf16.msra.mxu0 %v2813
        %2940 = vmatprep.subr.bf16.mxu0 0
        %2941 = vmatpush1.bf16.msra.mxu0 %v2814
        %2942 = vmatprep.subr.bf16.mxu0 0
        %2943 = vmatpush1.bf16.msra.mxu0 %v2815
        %2944 = vmatprep.subr.bf16.mxu0 0
        %2945 = vmatpush1.bf16.msra.mxu0 %v2816
        %2946 = vmatprep.subr.bf16.mxu0 0
        %2947 = vmatpush1.bf16.msra.mxu0 %v2817
        %2948 = vmatprep.subr.bf16.mxu0 0
        %2949 = vmatpush1.bf16.msra.mxu0 %v2818
        %2950 = vmatprep.subr.bf16.mxu0 0
        %2951 = vmatpush1.bf16.msra.mxu0 %v2819
        %2952 = vmatprep.subr.bf16.mxu0 0
        %2953 = vmatpush1.bf16.msra.mxu0 %v2820
        %2954 = vmatprep.subr.bf16.mxu0 0
        %2955 = vmatpush1.bf16.msra.mxu0 %v2821
        %2956 = vmatprep.subr.bf16.mxu0 0
        %2957 = vmatpush1.bf16.msra.mxu0 %v2822
        %2958 = vmatprep.subr.bf16.mxu0 0
        %2959 = vmatpush1.bf16.msra.mxu0 %v2823
        %2960 = vmatprep.mubr.bf16.mxu0 %v2396
        %2961 = vmatmul.mubr.bf16.gmra.mrb[0].mxu0 %v2395
        %v2962 = vpop.f32.mrb[0].mxu0
        %v2963 = vadd.f32 %v2923, %v2962
        %v2964 = vpop.f32.mrb[0].mxu0
        %v2965 = vpop.f32.mrb[0].mxu0
        %v2966 = vpop.f32.mrb[0].mxu0
        %2967 = vdwg.mxu0
        %2968 = vmatprep.subr.bf16.mxu0 0
        %2969 = vmatpush1.bf16.msra.mxu0 %v2824
        %2970 = vmatprep.subr.bf16.mxu0 0
        %2971 = vmatpush1.bf16.msra.mxu0 %v2825
        %2972 = vmatprep.subr.bf16.mxu0 0
        %2973 = vmatpush1.bf16.msra.mxu0 %v2826
        %2974 = vmatprep.subr.bf16.mxu0 0
        %2975 = vmatpush1.bf16.msra.mxu0 %v2827
        %2976 = vmatprep.subr.bf16.mxu0 0
        %2977 = vmatpush1.bf16.msra.mxu0 %v2828
        %2978 = vmatprep.subr.bf16.mxu0 0
        %2979 = vmatpush1.bf16.msra.mxu0 %v2829
        %2980 = vmatprep.subr.bf16.mxu0 0
        %2981 = vmatpush1.bf16.msra.mxu0 %v2830
        %2982 = vmatprep.subr.bf16.mxu0 0
        %2983 = vmatpush1.bf16.msra.mxu0 %v2831
        %2984 = vmatprep.subr.bf16.mxu0 0
        %2985 = vmatpush1.bf16.msra.mxu0 %v2832
        %2986 = vmatprep.subr.bf16.mxu0 0
        %2987 = vmatpush1.bf16.msra.mxu0 %v2833
        %2988 = vmatprep.subr.bf16.mxu0 0
        %2989 = vmatpush1.bf16.msra.mxu0 %v2834
        %2990 = vmatprep.subr.bf16.mxu0 0
        %2991 = vmatpush1.bf16.msra.mxu0 %v2835
        %2992 = vmatprep.subr.bf16.mxu0 0
        %2993 = vmatpush1.bf16.msra.mxu0 %v2836
        %2994 = vmatprep.subr.bf16.mxu0 0
        %2995 = vmatpush1.bf16.msra.mxu0 %v2837
        %2996 = vmatprep.subr.bf16.mxu0 0
        %2997 = vmatpush1.bf16.msra.mxu0 %v2838
        %2998 = vmatprep.subr.bf16.mxu0 0
        %2999 = vmatpush1.bf16.msra.mxu0 %v2839
        %3000 = vmatprep.mubr.bf16.mxu0 %v2398
        %3001 = vmatmul.mubr.bf16.gmra.mrb[0].mxu0 %v2397
        %v3002 = vpop.f32.mrb[0].mxu0
        %v3003 = vadd.f32 %v2963, %v3002
        %v3004 = vpop.f32.mrb[0].mxu0
        %v3005 = vpop.f32.mrb[0].mxu0
        %v3006 = vpop.f32.mrb[0].mxu0
        %3007 = vdwg.mxu0
        %v3008 = vpack.c.bf16 %v2110, %v2110
        %v3009 = vld [vmem:[#allocation34] sm:$0xf]
        %v3010 = vld [vmem:[#allocation34 + $0x4] sm:$0xf]
        %v3011 = vld [vmem:[#allocation34 + $0x8] sm:$0xf]
        %v3012 = vld [vmem:[#allocation34 + $0xc] sm:$0xf]
        %v3013 = vld [vmem:[#allocation34 + $0x10] sm:$0xf]
        %v3014 = vld [vmem:[#allocation34 + $0x14] sm:$0xf]
        %v3015 = vld [vmem:[#allocation34 + $0x18] sm:$0xf]
        %v3016 = vld [vmem:[#allocation34 + $0x1c] sm:$0xf]
        %v3017 = vld [vmem:[#allocation34 + $0x20] sm:$0xf]
        %v3018 = vld [vmem:[#allocation34 + $0x24] sm:$0xf]
        %v3019 = vld [vmem:[#allocation34 + $0x28] sm:$0xf]
        %v3020 = vld [vmem:[#allocation34 + $0x2c] sm:$0xf]
        %v3021 = vld [vmem:[#allocation34 + $0x30] sm:$0xf]
        %v3022 = vld [vmem:[#allocation34 + $0x34] sm:$0xf]
        %v3023 = vld [vmem:[#allocation34 + $0x38] sm:$0xf]
        %v3024 = vld [vmem:[#allocation34 + $0x3c] sm:$0xf]
        %v3041 = vunpack.c.l.b16 %v3009
        %v3042 = vunpack.c.l.b16 %v3010
        %v3043 = vunpack.c.l.b16 %v3011
        %v3044 = vunpack.c.l.b16 %v3012
        %v3045 = vunpack.c.l.b16 %v3013
        %v3046 = vunpack.c.l.b16 %v3014
        %v3047 = vunpack.c.l.b16 %v3015
        %v3048 = vunpack.c.l.b16 %v3016
        %v3049 = vunpack.c.l.b16 %v3017
        %v3050 = vunpack.c.l.b16 %v3018
        %v3051 = vunpack.c.l.b16 %v3019
        %v3052 = vunpack.c.l.b16 %v3020
        %v3053 = vunpack.c.l.b16 %v3021
        %v3054 = vunpack.c.l.b16 %v3022
        %v3055 = vunpack.c.l.b16 %v3023
        %v3056 = vunpack.c.l.b16 %v3024
        %v3057 = vpack.c.b16 %v3042, %v3041
        %v3058 = vpack.c.b16 %v3044, %v3043
        %v3059 = vpack.c.b16 %v3046, %v3045
        %v3060 = vpack.c.b16 %v3048, %v3047
        %v3061 = vpack.c.b16 %v3050, %v3049
        %v3062 = vpack.c.b16 %v3052, %v3051
        %v3063 = vpack.c.b16 %v3054, %v3053
        %v3064 = vpack.c.b16 %v3056, %v3055
        %3073 = vmatprep.subr.bf16.mxu0 0
        %3074 = vmatpush1.bf16.msra.mxu0 %v3057
        %3075 = vmatprep.subr.bf16.mxu0 0
        %3076 = vmatpush1.bf16.msra.mxu0 %v3058
        %3077 = vmatprep.subr.bf16.mxu0 0
        %3078 = vmatpush1.bf16.msra.mxu0 %v3059
        %3079 = vmatprep.subr.bf16.mxu0 0
        %3080 = vmatpush1.bf16.msra.mxu0 %v3060
        %3081 = vmatprep.subr.bf16.mxu0 0
        %3082 = vmatpush1.bf16.msra.mxu0 %v3061
        %3083 = vmatprep.subr.bf16.mxu0 0
        %3084 = vmatpush1.bf16.msra.mxu0 %v3062
        %3085 = vmatprep.subr.bf16.mxu0 0
        %3086 = vmatpush1.bf16.msra.mxu0 %v3063
        %3087 = vmatprep.subr.bf16.mxu0 0
        %3088 = vmatpush1.bf16.msra.mxu0 %v3064
        %3089 = vmatprep.subr.bf16.mxu0 0
        %3090 = vmatpush1.bf16.msra.mxu0 0
        %3091 = vmatprep.subr.bf16.mxu0 0
        %3092 = vmatpush1.bf16.msra.mxu0 0
        %3093 = vmatprep.subr.bf16.mxu0 0
        %3094 = vmatpush1.bf16.msra.mxu0 0
        %3095 = vmatprep.subr.bf16.mxu0 0
        %3096 = vmatpush1.bf16.msra.mxu0 0
        %3097 = vmatprep.subr.bf16.mxu0 0
        %3098 = vmatpush1.bf16.msra.mxu0 0
        %3099 = vmatprep.subr.bf16.mxu0 0
        %3100 = vmatpush1.bf16.msra.mxu0 0
        %3101 = vmatprep.subr.bf16.mxu0 0
        %3102 = vmatpush1.bf16.msra.mxu0 0
        %3103 = vmatprep.subr.bf16.mxu0 0
        %3104 = vmatpush1.bf16.msra.mxu0 0
        %3105 = vmatprep.mubr.bf16.mxu0 0
        %3106 = vmatmul.mubr.bf16.gmra.mrb[0].mxu0 %v3008
        %v3107 = vpop.f32.mrb[0].mxu0
        %v3108 = vadd.f32 0.0, %v3107
        %v3109 = vpop.f32.mrb[0].mxu0
        %v3110 = vpop.f32.mrb[0].mxu0
        %v3111 = vpop.f32.mrb[0].mxu0
        %3112 = vdwg.mxu0
        %v3113 = vadd.f32 %v3003, %v3108
        %v3114 = vld [vmem:[#allocation35] sm:$0x1]
        %v3116 = vlaneseq
        %v3117 = vshrl.u32 %v3116, 7
        %v3118 = vsub.s32 0, %v3117
        %v3119 = vrot.slane %v3114, %v3118
        %v3121 = vadd.f32 %v3113, %v3119
        %v3122 = vxor.u32 %v3121, 2147483648
        %v3123 = vmul.f32 %v3122, 1.442695
        %v3124 = vpow.pop %v3123
        %v3125 = vadd.f32 %v3124, 1.0
        %v3126 = vrcp.pop %v3125
        %v3127 = vmul.f32 1.0, %v3126
        %v3128 = vmul.f32 %v3121, %v3127
        %v3129 = vpack.c.bf16 %v3128, %v3128
        %v3130 = vld [vmem:[#allocation37] sm:$0xff]
        %v3131 = vld [vmem:[#allocation37 + $0x8] sm:$0xff]
        %v3132 = vld [vmem:[#allocation37 + $0x10] sm:$0xff]
        %v3133 = vld [vmem:[#allocation37 + $0x18] sm:$0xff]
        %v3134 = vld [vmem:[#allocation37 + $0x20] sm:$0xff]
        %v3135 = vld [vmem:[#allocation37 + $0x28] sm:$0xff]
        %v3136 = vld [vmem:[#allocation37 + $0x30] sm:$0xff]
        %v3137 = vld [vmem:[#allocation37 + $0x38] sm:$0xff]
        %v3138 = vld [vmem:[#allocation37 + $0x40] sm:$0xff]
        %v3139 = vld [vmem:[#allocation37 + $0x48] sm:$0xff]
        %v3140 = vld [vmem:[#allocation37 + $0x50] sm:$0xff]
        %v3141 = vld [vmem:[#allocation37 + $0x58] sm:$0xff]
        %v3142 = vld [vmem:[#allocation37 + $0x60] sm:$0xff]
        %v3143 = vld [vmem:[#allocation37 + $0x68] sm:$0xff]
        %v3144 = vld [vmem:[#allocation37 + $0x70] sm:$0xff]
        %v3145 = vld [vmem:[#allocation37 + $0x78] sm:$0xff]
        %v3146 = vld [vmem:[#allocation37 + $0x80] sm:$0xff]
        %v3147 = vld [vmem:[#allocation37 + $0x88] sm:$0xff]
        %v3148 = vld [vmem:[#allocation37 + $0x90] sm:$0xff]
        %v3149 = vld [vmem:[#allocation37 + $0x98] sm:$0xff]
        %v3150 = vld [vmem:[#allocation37 + $0xa0] sm:$0xff]
        %v3151 = vld [vmem:[#allocation37 + $0xa8] sm:$0xff]
        %v3152 = vld [vmem:[#allocation37 + $0xb0] sm:$0xff]
        %v3153 = vld [vmem:[#allocation37 + $0xb8] sm:$0xff]
        %v3154 = vld [vmem:[#allocation37 + $0xc0] sm:$0xff]
        %v3155 = vld [vmem:[#allocation37 + $0xc8] sm:$0xff]
        %v3156 = vld [vmem:[#allocation37 + $0xd0] sm:$0xff]
        %v3157 = vld [vmem:[#allocation37 + $0xd8] sm:$0xff]
        %v3158 = vld [vmem:[#allocation37 + $0xe0] sm:$0xff]
        %v3159 = vld [vmem:[#allocation37 + $0xe8] sm:$0xff]
        %v3160 = vld [vmem:[#allocation37 + $0xf0] sm:$0xff]
        %v3161 = vld [vmem:[#allocation37 + $0xf8] sm:$0xff]
        %v3162 = vld [vmem:[#allocation37 + $0x100] sm:$0xff]
        %v3163 = vld [vmem:[#allocation37 + $0x108] sm:$0xff]
        %v3164 = vld [vmem:[#allocation37 + $0x110] sm:$0xff]
        %v3165 = vld [vmem:[#allocation37 + $0x118] sm:$0xff]
        %v3166 = vld [vmem:[#allocation37 + $0x120] sm:$0xff]
        %v3167 = vld [vmem:[#allocation37 + $0x128] sm:$0xff]
        %v3168 = vld [vmem:[#allocation37 + $0x130] sm:$0xff]
        %v3169 = vld [vmem:[#allocation37 + $0x138] sm:$0xff]
        %v3170 = vld [vmem:[#allocation37 + $0x140] sm:$0xff]
        %v3171 = vld [vmem:[#allocation37 + $0x148] sm:$0xff]
        %v3172 = vld [vmem:[#allocation37 + $0x150] sm:$0xff]
        %v3173 = vld [vmem:[#allocation37 + $0x158] sm:$0xff]
        %v3174 = vld [vmem:[#allocation37 + $0x160] sm:$0xff]
        %v3175 = vld [vmem:[#allocation37 + $0x168] sm:$0xff]
        %v3176 = vld [vmem:[#allocation37 + $0x170] sm:$0xff]
        %v3177 = vld [vmem:[#allocation37 + $0x178] sm:$0xff]
        %v3178 = vld [vmem:[#allocation38] sm:$0x3f]
        %v3180 = vlaneseq
        %v3181 = vshrl.u32 %v3180, 7
        %v3182 = vsub.s32 0, %v3181
        %v3183 = vrot.slane %v3178, %v3182
        %v3184 = vlaneseq
        %v3185 = vshrl.u32 %v3184, 7
        %v3186 = vsub.s32 1, %v3185
        %v3187 = vrot.slane %v3178, %v3186
        %v3188 = vlaneseq
        %v3189 = vshrl.u32 %v3188, 7
        %v3190 = vsub.s32 2, %v3189
        %v3191 = vrot.slane %v3178, %v3190
        %v3192 = vlaneseq
        %v3193 = vshrl.u32 %v3192, 7
        %v3194 = vsub.s32 3, %v3193
        %v3195 = vrot.slane %v3178, %v3194
        %v3196 = vlaneseq
        %v3197 = vshrl.u32 %v3196, 7
        %v3198 = vsub.s32 4, %v3197
        %v3199 = vrot.slane %v3178, %v3198
        %v3200 = vlaneseq
        %v3201 = vshrl.u32 %v3200, 7
        %v3202 = vsub.s32 5, %v3201
        %v3203 = vrot.slane %v3178, %v3202
        %v3258 = vunpack.c.l.b16 %v3130
        %v3259 = vunpack.c.h.b16 %v3130
        %v3260 = vunpack.c.l.b16 %v3131
        %v3261 = vunpack.c.h.b16 %v3131
        %v3262 = vunpack.c.l.b16 %v3132
        %v3263 = vunpack.c.h.b16 %v3132
        %v3264 = vunpack.c.l.b16 %v3133
        %v3265 = vunpack.c.h.b16 %v3133
        %v3266 = vunpack.c.l.b16 %v3134
        %v3267 = vunpack.c.h.b16 %v3134
        %v3268 = vunpack.c.l.b16 %v3135
        %v3269 = vunpack.c.h.b16 %v3135
        %v3270 = vunpack.c.l.b16 %v3136
        %v3271 = vunpack.c.h.b16 %v3136
        %v3272 = vunpack.c.l.b16 %v3137
        %v3273 = vunpack.c.h.b16 %v3137
        %v3274 = vunpack.c.l.b16 %v3138
        %v3275 = vunpack.c.h.b16 %v3138
        %v3276 = vunpack.c.l.b16 %v3139
        %v3277 = vunpack.c.h.b16 %v3139
        %v3278 = vunpack.c.l.b16 %v3140
        %v3279 = vunpack.c.h.b16 %v3140
        %v3280 = vunpack.c.l.b16 %v3141
        %v3281 = vunpack.c.h.b16 %v3141
        %v3282 = vunpack.c.l.b16 %v3142
        %v3283 = vunpack.c.h.b16 %v3142
        %v3284 = vunpack.c.l.b16 %v3143
        %v3285 = vunpack.c.h.b16 %v3143
        %v3286 = vunpack.c.l.b16 %v3144
        %v3287 = vunpack.c.h.b16 %v3144
        %v3288 = vunpack.c.l.b16 %v3145
        %v3289 = vunpack.c.h.b16 %v3145
        %v3290 = vunpack.c.l.b16 %v3146
        %v3291 = vunpack.c.h.b16 %v3146
        %v3292 = vunpack.c.l.b16 %v3147
        %v3293 = vunpack.c.h.b16 %v3147
        %v3294 = vunpack.c.l.b16 %v3148
        %v3295 = vunpack.c.h.b16 %v3148
        %v3296 = vunpack.c.l.b16 %v3149
        %v3297 = vunpack.c.h.b16 %v3149
        %v3298 = vunpack.c.l.b16 %v3150
        %v3299 = vunpack.c.h.b16 %v3150
        %v3300 = vunpack.c.l.b16 %v3151
        %v3301 = vunpack.c.h.b16 %v3151
        %v3302 = vunpack.c.l.b16 %v3152
        %v3303 = vunpack.c.h.b16 %v3152
        %v3304 = vunpack.c.l.b16 %v3153
        %v3305 = vunpack.c.h.b16 %v3153
        %v3306 = vunpack.c.l.b16 %v3154
        %v3307 = vunpack.c.h.b16 %v3154
        %v3308 = vunpack.c.l.b16 %v3155
        %v3309 = vunpack.c.h.b16 %v3155
        %v3310 = vunpack.c.l.b16 %v3156
        %v3311 = vunpack.c.h.b16 %v3156
        %v3312 = vunpack.c.l.b16 %v3157
        %v3313 = vunpack.c.h.b16 %v3157
        %v3314 = vunpack.c.l.b16 %v3158
        %v3315 = vunpack.c.h.b16 %v3158
        %v3316 = vunpack.c.l.b16 %v3159
        %v3317 = vunpack.c.h.b16 %v3159
        %v3318 = vunpack.c.l.b16 %v3160
        %v3319 = vunpack.c.h.b16 %v3160
        %v3320 = vunpack.c.l.b16 %v3161
        %v3321 = vunpack.c.h.b16 %v3161
        %v3322 = vunpack.c.l.b16 %v3162
        %v3323 = vunpack.c.h.b16 %v3162
        %v3324 = vunpack.c.l.b16 %v3163
        %v3325 = vunpack.c.h.b16 %v3163
        %v3326 = vunpack.c.l.b16 %v3164
        %v3327 = vunpack.c.h.b16 %v3164
        %v3328 = vunpack.c.l.b16 %v3165
        %v3329 = vunpack.c.h.b16 %v3165
        %v3330 = vunpack.c.l.b16 %v3166
        %v3331 = vunpack.c.h.b16 %v3166
        %v3332 = vunpack.c.l.b16 %v3167
        %v3333 = vunpack.c.h.b16 %v3167
        %v3334 = vunpack.c.l.b16 %v3168
        %v3335 = vunpack.c.h.b16 %v3168
        %v3336 = vunpack.c.l.b16 %v3169
        %v3337 = vunpack.c.h.b16 %v3169
        %v3338 = vunpack.c.l.b16 %v3170
        %v3339 = vunpack.c.h.b16 %v3170
        %v3340 = vunpack.c.l.b16 %v3171
        %v3341 = vunpack.c.h.b16 %v3171
        %v3342 = vunpack.c.l.b16 %v3172
        %v3343 = vunpack.c.h.b16 %v3172
        %v3344 = vunpack.c.l.b16 %v3173
        %v3345 = vunpack.c.h.b16 %v3173
        %v3346 = vunpack.c.l.b16 %v3174
        %v3347 = vunpack.c.h.b16 %v3174
        %v3348 = vunpack.c.l.b16 %v3175
        %v3349 = vunpack.c.h.b16 %v3175
        %v3350 = vunpack.c.l.b16 %v3176
        %v3351 = vunpack.c.h.b16 %v3176
        %v3352 = vunpack.c.l.b16 %v3177
        %v3353 = vunpack.c.h.b16 %v3177
        %v3354 = vpack.c.b16 %v3264, %v3258
        %v3355 = vpack.c.b16 %v3265, %v3259
        %v3356 = vpack.c.b16 %v3266, %v3260
        %v3357 = vpack.c.b16 %v3267, %v3261
        %v3358 = vpack.c.b16 %v3268, %v3262
        %v3359 = vpack.c.b16 %v3269, %v3263
        %v3360 = vpack.c.b16 %v3276, %v3270
        %v3361 = vpack.c.b16 %v3277, %v3271
        %v3362 = vpack.c.b16 %v3278, %v3272
        %v3363 = vpack.c.b16 %v3279, %v3273
        %v3364 = vpack.c.b16 %v3280, %v3274
        %v3365 = vpack.c.b16 %v3281, %v3275
        %v3366 = vpack.c.b16 %v3288, %v3282
        %v3367 = vpack.c.b16 %v3289, %v3283
        %v3368 = vpack.c.b16 %v3290, %v3284
        %v3369 = vpack.c.b16 %v3291, %v3285
        %v3370 = vpack.c.b16 %v3292, %v3286
        %v3371 = vpack.c.b16 %v3293, %v3287
        %v3372 = vpack.c.b16 %v3300, %v3294
        %v3373 = vpack.c.b16 %v3301, %v3295
        %v3374 = vpack.c.b16 %v3302, %v3296
        %v3375 = vpack.c.b16 %v3303, %v3297
        %v3376 = vpack.c.b16 %v3304, %v3298
        %v3377 = vpack.c.b16 %v3305, %v3299
        %v3378 = vpack.c.b16 %v3312, %v3306
        %v3379 = vpack.c.b16 %v3313, %v3307
        %v3380 = vpack.c.b16 %v3314, %v3308
        %v3381 = vpack.c.b16 %v3315, %v3309
        %v3382 = vpack.c.b16 %v3316, %v3310
        %v3383 = vpack.c.b16 %v3317, %v3311
        %v3384 = vpack.c.b16 %v3324, %v3318
        %v3385 = vpack.c.b16 %v3325, %v3319
        %v3386 = vpack.c.b16 %v3326, %v3320
        %v3387 = vpack.c.b16 %v3327, %v3321
        %v3388 = vpack.c.b16 %v3328, %v3322
        %v3389 = vpack.c.b16 %v3329, %v3323
        %v3390 = vpack.c.b16 %v3336, %v3330
        %v3391 = vpack.c.b16 %v3337, %v3331
        %v3392 = vpack.c.b16 %v3338, %v3332
        %v3393 = vpack.c.b16 %v3339, %v3333
        %v3394 = vpack.c.b16 %v3340, %v3334
        %v3395 = vpack.c.b16 %v3341, %v3335
        %v3396 = vpack.c.b16 %v3348, %v3342
        %v3397 = vpack.c.b16 %v3349, %v3343
        %v3398 = vpack.c.b16 %v3350, %v3344
        %v3399 = vpack.c.b16 %v3351, %v3345
        %v3400 = vpack.c.b16 %v3352, %v3346
        %v3401 = vpack.c.b16 %v3353, %v3347
        %3450 = vmatprep.subr.bf16.mxu0 %v3355
        %3451 = vmatpush1.bf16.msra.mxu0 %v3354
        %3452 = vmatprep.subr.bf16.mxu0 %v3361
        %3453 = vmatpush1.bf16.msra.mxu0 %v3360
        %3454 = vmatprep.subr.bf16.mxu0 %v3367
        %3455 = vmatpush1.bf16.msra.mxu0 %v3366
        %3456 = vmatprep.subr.bf16.mxu0 %v3373
        %3457 = vmatpush1.bf16.msra.mxu0 %v3372
        %3458 = vmatprep.subr.bf16.mxu0 %v3379
        %3459 = vmatpush1.bf16.msra.mxu0 %v3378
        %3460 = vmatprep.subr.bf16.mxu0 %v3385
        %3461 = vmatpush1.bf16.msra.mxu0 %v3384
        %3462 = vmatprep.subr.bf16.mxu0 %v3391
        %3463 = vmatpush1.bf16.msra.mxu0 %v3390
        %3464 = vmatprep.subr.bf16.mxu0 %v3397
        %3465 = vmatpush1.bf16.msra.mxu0 %v3396
        %3466 = vmatprep.subr.bf16.mxu0 0
        %3467 = vmatpush1.bf16.msra.mxu0 0
        %3468 = vmatprep.subr.bf16.mxu0 0
        %3469 = vmatpush1.bf16.msra.mxu0 0
        %3470 = vmatprep.subr.bf16.mxu0 0
        %3471 = vmatpush1.bf16.msra.mxu0 0
        %3472 = vmatprep.subr.bf16.mxu0 0
        %3473 = vmatpush1.bf16.msra.mxu0 0
        %3474 = vmatprep.subr.bf16.mxu0 0
        %3475 = vmatpush1.bf16.msra.mxu0 0
        %3476 = vmatprep.subr.bf16.mxu0 0
        %3477 = vmatpush1.bf16.msra.mxu0 0
        %3478 = vmatprep.subr.bf16.mxu0 0
        %3479 = vmatpush1.bf16.msra.mxu0 0
        %3480 = vmatprep.subr.bf16.mxu0 0
        %3481 = vmatpush1.bf16.msra.mxu0 0
        %3482 = vmatprep.mubr.bf16.mxu0 0
        %3483 = vmatmul.mubr.bf16.gmra.mrb[0].mxu0 %v3129
        %v3484 = vpop.f32.mrb[0].mxu0
        %v3485 = vadd.f32 %v3183, %v3484
        %v3486 = vpop.f32.mrb[0].mxu0
        %v3487 = vadd.f32 %v3187, %v3486
        %v3488 = vpop.f32.mrb[0].mxu0
        %v3489 = vpop.f32.mrb[0].mxu0
        %3490 = vdwg.mxu0
        %3491 = vmatprep.subr.bf16.mxu0 %v3357
        %3492 = vmatpush1.bf16.msra.mxu0 %v3356
        %3493 = vmatprep.subr.bf16.mxu0 %v3363
        %3494 = vmatpush1.bf16.msra.mxu0 %v3362
        %3495 = vmatprep.subr.bf16.mxu0 %v3369
        %3496 = vmatpush1.bf16.msra.mxu0 %v3368
        %3497 = vmatprep.subr.bf16.mxu0 %v3375
        %3498 = vmatpush1.bf16.msra.mxu0 %v3374
        %3499 = vmatprep.subr.bf16.mxu0 %v3381
        %3500 = vmatpush1.bf16.msra.mxu0 %v3380
        %3501 = vmatprep.subr.bf16.mxu0 %v3387
        %3502 = vmatpush1.bf16.msra.mxu0 %v3386
        %3503 = vmatprep.subr.bf16.mxu0 %v3393
        %3504 = vmatpush1.bf16.msra.mxu0 %v3392
        %3505 = vmatprep.subr.bf16.mxu0 %v3399
        %3506 = vmatpush1.bf16.msra.mxu0 %v3398
        %3507 = vmatprep.subr.bf16.mxu0 0
        %3508 = vmatpush1.bf16.msra.mxu0 0
        %3509 = vmatprep.subr.bf16.mxu0 0
        %3510 = vmatpush1.bf16.msra.mxu0 0
        %3511 = vmatprep.subr.bf16.mxu0 0
        %3512 = vmatpush1.bf16.msra.mxu0 0
        %3513 = vmatprep.subr.bf16.mxu0 0
        %3514 = vmatpush1.bf16.msra.mxu0 0
        %3515 = vmatprep.subr.bf16.mxu0 0
        %3516 = vmatpush1.bf16.msra.mxu0 0
        %3517 = vmatprep.subr.bf16.mxu0 0
        %3518 = vmatpush1.bf16.msra.mxu0 0
        %3519 = vmatprep.subr.bf16.mxu0 0
        %3520 = vmatpush1.bf16.msra.mxu0 0
        %3521 = vmatprep.subr.bf16.mxu0 0
        %3522 = vmatpush1.bf16.msra.mxu0 0
        %3523 = vmatprep.mubr.bf16.mxu0 0
        %3524 = vmatmul.mubr.bf16.gmra.mrb[0].mxu0 %v3129
        %v3525 = vpop.f32.mrb[0].mxu0
        %v3526 = vadd.f32 %v3191, %v3525
        %v3527 = vpop.f32.mrb[0].mxu0
        %v3528 = vadd.f32 %v3195, %v3527
        %v3529 = vpop.f32.mrb[0].mxu0
        %v3530 = vpop.f32.mrb[0].mxu0
        %3531 = vdwg.mxu0
        %3532 = vmatprep.subr.bf16.mxu0 %v3359
        %3533 = vmatpush1.bf16.msra.mxu0 %v3358
        %3534 = vmatprep.subr.bf16.mxu0 %v3365
        %3535 = vmatpush1.bf16.msra.mxu0 %v3364
        %3536 = vmatprep.subr.bf16.mxu0 %v3371
        %3537 = vmatpush1.bf16.msra.mxu0 %v3370
        %3538 = vmatprep.subr.bf16.mxu0 %v3377
        %3539 = vmatpush1.bf16.msra.mxu0 %v3376
        %3540 = vmatprep.subr.bf16.mxu0 %v3383
        %3541 = vmatpush1.bf16.msra.mxu0 %v3382
        %3542 = vmatprep.subr.bf16.mxu0 %v3389
        %3543 = vmatpush1.bf16.msra.mxu0 %v3388
        %3544 = vmatprep.subr.bf16.mxu0 %v3395
        %3545 = vmatpush1.bf16.msra.mxu0 %v3394
        %3546 = vmatprep.subr.bf16.mxu0 %v3401
        %3547 = vmatpush1.bf16.msra.mxu0 %v3400
        %3548 = vmatprep.subr.bf16.mxu0 0
        %3549 = vmatpush1.bf16.msra.mxu0 0
        %3550 = vmatprep.subr.bf16.mxu0 0
        %3551 = vmatpush1.bf16.msra.mxu0 0
        %3552 = vmatprep.subr.bf16.mxu0 0
        %3553 = vmatpush1.bf16.msra.mxu0 0
        %3554 = vmatprep.subr.bf16.mxu0 0
        %3555 = vmatpush1.bf16.msra.mxu0 0
        %3556 = vmatprep.subr.bf16.mxu0 0
        %3557 = vmatpush1.bf16.msra.mxu0 0
        %3558 = vmatprep.subr.bf16.mxu0 0
        %3559 = vmatpush1.bf16.msra.mxu0 0
        %3560 = vmatprep.subr.bf16.mxu0 0
        %3561 = vmatpush1.bf16.msra.mxu0 0
        %3562 = vmatprep.subr.bf16.mxu0 0
        %3563 = vmatpush1.bf16.msra.mxu0 0
        %3564 = vmatprep.mubr.bf16.mxu0 0
        %3565 = vmatmul.mubr.bf16.gmra.mrb[0].mxu0 %v3129
        %v3566 = vpop.f32.mrb[0].mxu0
        %v3567 = vadd.f32 %v3199, %v3566
        %v3568 = vpop.f32.mrb[0].mxu0
        %v3569 = vadd.f32 %v3203, %v3568
        %v3570 = vpop.f32.mrb[0].mxu0
        %v3571 = vpop.f32.mrb[0].mxu0
        %3572 = vdwg.mxu0
        %v3573 = vsub.f32 %v3485, %v2119
        %v3574 = vsub.f32 %v3487, %v2143
        %v3575 = vsub.f32 %v3526, %v2120
        %v3576 = vsub.f32 %v3528, %v2144
        %v3577 = vsub.f32 %v3567, %v2121
        %v3578 = vsub.f32 %v3569, %v2145
        %v3579 = vmul.f32 %v3573, %v3573
        %v3580 = vmul.f32 %v3574, %v3574
        %v3581 = vmul.f32 %v3575, %v3575
        %v3582 = vmul.f32 %v3576, %v3576
        %v3583 = vmul.f32 %v3577, %v3577
        %v3584 = vmul.f32 %v3578, %v3578
        %v3585 = vsel %vm1753, %v3579, 0.0
        %v3586 = vsel %vm1753, %v3580, 0.0
        %v3587 = vadd.f32 %v3585, %v3586
        %v3588 = vsel %vm1753, %v3581, 0.0
        %v3589 = vadd.f32 %v3587, %v3588
        %v3590 = vsel %vm1753, %v3582, 0.0
        %v3591 = vadd.f32 %v3589, %v3590
        %v3592 = vsel %vm1753, %v3583, 0.0
        %v3593 = vadd.f32 %v3591, %v3592
        %v3594 = vsel %vm1753, %v3584, 0.0
        %v3595 = vadd.f32 %v3593, %v3594
        %3596 = vadd.xlane.f32.xlu0 %v3595
        %v3597 = vpop.xlane.xlu0 %3596
        %v3598 = vmul.f32 %v3597, 0.0013020834
        %3599 = vst [vmem:[%s1209] sm:$0xf] %v3598
        %s3600 = sand.u32 %s606, 1
        %s3601 = scalar_lea.sflag [#allocation4], %s3600
        %s3602 = sand.u32 %s606, 1
        %s3603 = smul.addr %s3602, 4
        %s3604 = scalar_lea.vmem [#allocation40], %s3603
        %s3605 = sand.u32 %s632, 1
        %s3606 = scalar_lea.sflag [#allocation42], %s3605
        %s3607 = sand.u32 %s632, 1
        %s3608 = scalar_lea.vmem [#allocation41], %s3607
        // Predicated region
        $region213: #{vfsddpm_forward.1} parent=115 // pred_check
          %p3609 = pneg %p616
        $region214: #{vfsddpm_forward.1} parent=115 // pred_check_branch
          %3611 = sbr.rel (%p3609) target = $region216
        $region215: #{vfsddpm_forward.1} parent=115 // pred_region
          %s3613 = ssub.s32 64, 64
          %3614 = vsyncadd %s3601, %s3613
          %s3615 = smul.addr %s64, 64
          %s3616 = scalar_lea.hbm %s24, %s3615
          %s3618 = sshll.u32 %s3604, 4
          %s3619 = int_to_ptr.vmem [resolvable:$true] %s3618
          %3621 = dma.vmem_to_hbm [thread:$0]  %s3619, 64, %s3616, %s3601
        $region216: #{vfsddpm_forward.1} parent=115 // pred_fallthru
          _
        // Predicated region
        $region217: #{vfsddpm_forward.1} parent=115 // pred_check
          %p3622 = pneg %p642
        $region218: #{vfsddpm_forward.1} parent=115 // pred_check_branch
          %3624 = sbr.rel (%p3622) target = $region220
        $region219: #{vfsddpm_forward.1} parent=115 // pred_region
          %s3626 = ssub.s32 16, 16
          %3627 = vsyncadd %s3606, %s3626
          %s3628 = smul.addr %s64, 16
          %s3629 = scalar_lea.hbm %s25, %s3628
          %s3631 = sshll.u32 %s3608, 4
          %s3632 = int_to_ptr.vmem [resolvable:$true] %s3631
          %3634 = dma.vmem_to_hbm [thread:$0]  %s3632, 16, %s3629, %s3606
        $region220: #{vfsddpm_forward.1} parent=115 // pred_fallthru
          _
      $region116: #{vfsddpm_forward.1} parent=5 // pred_fallthru
        _
      %p3635 = scmp.le.s32.totalorder 2, %s59
      // Predicated region
      $region221: #{vfsddpm_forward.1} parent=5 // pred_check
        %p3636 = pneg %p3635
      $region222: #{vfsddpm_forward.1} parent=5 // pred_check_branch
        %3638 = sbr.rel (%p3636) target = $region224
      $region223: #{vfsddpm_forward.1} parent=5 // pred_region
        %s3639 = ssub.s32 %s59, 2
        // Predicated region
        $region225: #{vfsddpm_forward.1} parent=223 // pred_check
          %p3640 = pneg %p622
        $region226: #{vfsddpm_forward.1} parent=223 // pred_check_branch
          %3642 = sbr.rel (%p3640) target = $region228
        $region227: #{vfsddpm_forward.1} parent=223 // pred_region
          %s3643 = sand.u32 %s607, 1
          %s3644 = scalar_lea.sflag [#allocation4], %s3643
          %s3645 = sand.u32 %s607, 1
          %s3646 = smul.addr %s3645, 4
          %s3647 = scalar_lea.vmem [#allocation40], %s3646
          %3648 = dma.done %s3644, 64
        $region228: #{vfsddpm_forward.1} parent=223 // pred_fallthru
          _
        // Predicated region
        $region229: #{vfsddpm_forward.1} parent=223 // pred_check
          %p3649 = pneg %p648
        $region230: #{vfsddpm_forward.1} parent=223 // pred_check_branch
          %3651 = sbr.rel (%p3649) target = $region232
        $region231: #{vfsddpm_forward.1} parent=223 // pred_region
          %s3652 = sand.u32 %s633, 1
          %s3653 = scalar_lea.sflag [#allocation42], %s3652
          %s3654 = sand.u32 %s633, 1
          %s3655 = scalar_lea.vmem [#allocation41], %s3654
          %3656 = dma.done %s3653, 16
        $region232: #{vfsddpm_forward.1} parent=223 // pred_fallthru
          _
      $region224: #{vfsddpm_forward.1} parent=5 // pred_fallthru
        _
    $region6: #{vfsddpm_forward.1} parent=1 // loop_footer
      %s63 = sadd.s32 1, %s59
    $region7: #{vfsddpm_forward.1} parent=1 // loop_footer_branch
      %58 = sbr.rel target = $region3
    $region8: #{vfsddpm_forward.1} parent=1 // loop_exit
      _
    %3657 = vsyncpa [#allocation3], 1
    %s3658 = scalar_lea.sflag [#allocation3], 1
    %3659 = vsyncpa %s3658, 1
    %3660 = vsyncpa [#allocation6], 1
    %s3661 = scalar_lea.sflag [#allocation6], 1
    %3662 = vsyncpa %s3661, 1
    %3663 = vsyncpa [#allocation9], 1
    %s3664 = scalar_lea.sflag [#allocation9], 1
    %3665 = vsyncpa %s3664, 1
    %3666 = vsyncpa [#allocation12], 1
    %s3667 = scalar_lea.sflag [#allocation12], 1
    %3668 = vsyncpa %s3667, 1
    %3669 = vsyncpa [#allocation15], 1
    %3670 = vsyncpa [#allocation18], 1
    %3671 = vsyncpa [#allocation21], 1
    %3672 = vsyncpa [#allocation24], 1
    %3673 = vsyncpa [#allocation27], 1
    %3674 = vsyncpa [#allocation30], 1
    %3675 = vsyncpa [#allocation33], 1
    %3676 = vsyncpa [#allocation36], 1
    %3677 = vsyncpa [#allocation39], 1
    %3678 = vsyncpa [#allocation4], 1
    %s3679 = scalar_lea.sflag [#allocation4], 1
    %3680 = vsyncpa %s3679, 1
    %3681 = vsyncpa [#allocation42], 1
    %s3682 = scalar_lea.sflag [#allocation42], 1
    %3683 = vsyncpa %s3682, 1

</llo_original>
